<compile_context>
chip_gen: v6e
topology: v6e:2x2x1
jax: 0.10.0
libtpu: 0.0.40
codegen_flags: <defaults>
</compile_context>

<pallas_src>
import numpy as np

import jax
import jax.numpy as jnp
from jax.experimental import pallas as pl
from jax.experimental.pallas import tpu as pltpu


# ----------------------------- static geometry ------------------------------
_IN_HW = 32          # conv1 input spatial size (32x32)
_C1_W = 892          # conv1 flat accumulation width  (27*32 + 27 + 1)
_P1_W = 859          # pool1 selection source width   (26*32 + 26 + 1)
_HW2 = 14            # pool1 output spatial size (14x14)
_C2_W = 136          # conv2 flat accumulation width  (9*14 + 9 + 1)
_P2_W = 121          # pool2 selection source width   (8*14 + 8 + 1)


# ------------------------------ fused kernel --------------------------------
def _lenet_kernel(x_ref, w1s_ref, s1_ref, w2s_ref, s2_ref,
                  w1t_ref, w2t_ref, w3t_ref, fcb_ref,
                  out_ref, stack1_ref, stack2_ref, p2f_ref):
    f32 = jnp.float32
    bf16 = jnp.bfloat16
    batch = out_ref.shape[0]
    r1 = 3 * batch       # rows per tap in the conv1 im2col stack
    r2 = 6 * batch       # rows per tap in the conv2 im2col stack

    # ---- conv1: in-kernel im2col stacked along K + ONE matmul --------------
    for t in range(25):
        kh, kw = divmod(t, 5)
        start = kh * _IN_HW + kw
        stack1_ref[t * r1:(t + 1) * r1, :] = x_ref[:, start:start + _C1_W]
    stack1_ref[25 * r1:25 * r1 + 1, :] = jnp.ones((1, _C1_W), f32)   # bias row

    acc1 = jnp.dot(w1s_ref[...], stack1_ref[...].astype(bf16),
                   preferred_element_type=f32)                # (6B, 892), bias folded
    a1 = jnp.maximum(acc1, 0.0)

    # ---- maxpool 2x2: shifted maxima + 0/1 selection matmul ----------------
    h1 = jnp.maximum(a1[:, 0:_C1_W - 1], a1[:, 1:_C1_W])
    v1 = jnp.maximum(h1[:, 0:_P1_W], h1[:, _IN_HW:_IN_HW + _P1_W])
    p1 = jnp.dot(v1.astype(bf16), s1_ref[...],
                 preferred_element_type=f32)                  # (6B, 196)

    # ---- conv2: stacked im2col + ONE matmul ---------------------------------
    for t in range(25):
        kh, kw = divmod(t, 5)
        s = kh * _HW2 + kw
        stack2_ref[t * r2:(t + 1) * r2, :] = p1[:, s:s + _C2_W]
    stack2_ref[25 * r2:25 * r2 + 1, :] = jnp.ones((1, _C2_W), f32)   # bias row

    acc2 = jnp.dot(w2s_ref[...], stack2_ref[...].astype(bf16),
                   preferred_element_type=f32)                # (16B, 136)
    a2 = jnp.maximum(acc2, 0.0)

    # ---- maxpool 2x2 --------------------------------------------------------
    h2 = jnp.maximum(a2[:, 0:_C2_W - 1], a2[:, 1:_C2_W])
    v2 = jnp.maximum(h2[:, 0:_P2_W], h2[:, _HW2:_HW2 + _P2_W])
    p2 = jnp.dot(v2.astype(bf16), s2_ref[...],
                 preferred_element_type=f32)                  # (16B, 25)

    # ---- flatten (16B, 25) -> (B, 400) + ones column (folds fc1 bias) ------
    for c in range(16):
        p2f_ref[:, c * 25:(c + 1) * 25] = p2[c * batch:(c + 1) * batch, :]
    p2f_ref[:, 400:401] = jnp.ones((batch, 1), f32)

    # ---- fc1 -> fc2 -> fc3, fully batched -----------------------------------
    y1 = jnp.maximum(jnp.dot(p2f_ref[...].astype(bf16), w1t_ref[...],
                             preferred_element_type=f32), 0.0)          # (B, 120)
    y2 = jnp.maximum(jnp.dot(y1.astype(bf16), w2t_ref[...],
                             preferred_element_type=f32)
                     + fcb_ref[:, 0:84], 0.0)                           # (B, 84)
    y3 = (jnp.dot(y2.astype(bf16), w3t_ref[...],
                  preferred_element_type=f32) + fcb_ref[:, 84:94])      # (B, 10)
    out_ref[...] = y3


# --------------------------- host-side packing ------------------------------
def _pool_select(src_width, row_stride, out_hw):
    """0/1 matrix: column (ph*out_hw + pw) picks flat source index
    (2*ph)*row_stride + 2*pw (the top-left of each 2x2 window, already the
    max of the 2x2 block after the shifted-maxima step)."""
    sel = np.zeros((src_width, out_hw * out_hw), np.float32)
    for ph in range(out_hw):
        for pw in range(out_hw):
            sel[2 * ph * row_stride + 2 * pw, ph * out_hw + pw] = 1.0
    return sel


def _pack_conv(w, b, batch):
    """Stacked-K block-diagonal conv weight with folded bias column.
    Row = cout*batch + b ; column = tap*(cin*batch) + cin_idx*batch + b'."""
    w = np.asarray(w, np.float32)
    b = np.asarray(b, np.float32)
    cout, cin = w.shape[0], w.shape[1]
    eye = np.eye(batch, dtype=np.float32)
    taps = w.transpose(2, 3, 0, 1).reshape(25, cout, cin)          # [t, co, ci]
    blocks = np.einsum("tij,ab->tiajb", taps, eye)                 # [t, co, b, ci, b']
    blocks = blocks.reshape(25, cout * batch, cin * batch)
    stacked = blocks.transpose(1, 0, 2).reshape(cout * batch, 25 * cin * batch)
    bias_col = np.repeat(b, batch).reshape(cout * batch, 1)
    return np.concatenate([stacked, bias_col], axis=1)             # (cout*B, 25*cin*B+1)


def pack_params(params, batch):
    """One-time packing: stacked-K conv weights (+bias column), bf16 selection
    matrices, pre-transposed FC weights (fc1 bias folded as extra row)."""
    bf16 = jnp.bfloat16
    w1s = jnp.asarray(_pack_conv(params["conv1_w"], params["conv1_b"], batch), bf16)
    w2s = jnp.asarray(_pack_conv(params["conv2_w"], params["conv2_b"], batch), bf16)
    s1 = jnp.asarray(_pool_select(_P1_W, _IN_HW, _HW2), bf16)       # (859, 196)
    s2 = jnp.asarray(_pool_select(_P2_W, _HW2, 5), bf16)            # (121, 25)

    w1t = jnp.asarray(np.concatenate(
        [np.asarray(params["fc1_w"], np.float32).T,                 # (400, 120)
         np.asarray(params["fc1_b"], np.float32).reshape(1, 120)],  # bias row
        axis=0), bf16)                                              # (401, 120)
    w2t = jnp.asarray(np.asarray(params["fc2_w"], np.float32).T, bf16)   # (120, 84)
    w3t = jnp.asarray(np.asarray(params["fc3_w"], np.float32).T, bf16)   # (84, 10)
    fcb = jnp.asarray(np.concatenate(
        [np.asarray(params["fc2_b"], np.float32),
         np.asarray(params["fc3_b"], np.float32)]).reshape(1, 94), jnp.float32)

    return (w1s, s1, w2s, s2, w1t, w2t, w3t, fcb)


# ------------------------------ forward pass --------------------------------
def _full_spec(shape):
    rank = len(shape)

    def idx(i):
        return (0,) * rank

    return pl.BlockSpec(shape, idx)


def forward(packed, x):
    batch = x.shape[0]
    # Activation row order is channel-major, batch-minor: row = ci*B + b.
    x_rows = x.transpose(1, 0, 2, 3).reshape(3 * batch, _IN_HW * _IN_HW)
    operands = (x_rows,) + tuple(packed)

    flops = 2 * ((6 * batch) * (75 * batch + 1) * _C1_W
                 + (6 * batch) * _P1_W * 196
                 + (16 * batch) * (150 * batch + 1) * _C2_W
                 + (16 * batch) * _P2_W * 25
                 + batch * 401 * 120 + batch * 120 * 84 + batch * 84 * 10)
    bytes_accessed = sum(int(np.prod(o.shape)) * o.dtype.itemsize
                         for o in operands) + batch * 10 * 4

    return pl.pallas_call(
        _lenet_kernel,
        out_shape=jax.ShapeDtypeStruct((batch, 10), jnp.float32),
        grid=(1,),
        in_specs=[_full_spec(op.shape) for op in operands],
        out_specs=_full_spec((batch, 10)),
        scratch_shapes=[
            pltpu.VMEM((25 * 3 * batch + 1, _C1_W), jnp.float32),   # conv1 im2col stack
            pltpu.VMEM((25 * 6 * batch + 1, _C2_W), jnp.float32),   # conv2 im2col stack
            pltpu.VMEM((batch, 401), jnp.float32),                  # flattened features
        ],
        compiler_params=pltpu.CompilerParams(
            dimension_semantics=("arbitrary",)),
        cost_estimate=pl.CostEstimate(
            flops=int(flops), transcendentals=0,
            bytes_accessed=int(bytes_accessed)),
    )(*operands)


# ------------------------------ parameters ----------------------------------
def init_params(key):
    """Deterministic PyTorch-style uniform(-1/sqrt(fan_in), +1/sqrt(fan_in))."""
    ks = jax.random.split(key, 10)

    def u(k, shape, fan_in):
        bound = 1.0 / float(fan_in) ** 0.5
        return jax.random.uniform(k, shape, jnp.float32, -bound, bound)

    return {
        "conv1_w": u(ks[0], (6, 3, 5, 5), 3 * 5 * 5),
        "conv1_b": u(ks[1], (6,), 3 * 5 * 5),
        "conv2_w": u(ks[2], (16, 6, 5, 5), 6 * 5 * 5),
        "conv2_b": u(ks[3], (16,), 6 * 5 * 5),
        "fc1_w":   u(ks[4], (120, 400), 400),   # (out, in) like nn.Linear
        "fc1_b":   u(ks[5], (120,), 400),
        "fc2_w":   u(ks[6], (84, 120), 120),
        "fc2_b":   u(ks[7], (84,), 120),
        "fc3_w":   u(ks[8], (10, 84), 84),
        "fc3_b":   u(ks[9], (10,), 84),
    }


# ------------------------- pure-JAX reference (check) ------------------------
def reference_forward(params, x):
    def conv(h, w, b):
        y = jax.lax.conv_general_dilated(
            h, w, window_strides=(1, 1), padding="VALID",
            dimension_numbers=("NCHW", "OIHW", "NCHW"))
        return jax.nn.relu(y + b[None, :, None, None])

    def pool(h):
        n, c, hh, ww = h.shape
        return jnp.max(h.reshape(n, c, hh // 2, 2, ww // 2, 2), axis=(3, 5))

    h = pool(conv(x, params["conv1_w"], params["conv1_b"]))
    h = pool(conv(h, params["conv2_w"], params["conv2_b"]))
    h = h.reshape(h.shape[0], -1)
    h = jax.nn.relu(h @ params["fc1_w"].T + params["fc1_b"])
    h = jax.nn.relu(h @ params["fc2_w"].T + params["fc2_b"])
    return h @ params["fc3_w"].T + params["fc3_b"]


# ----------------------------------- main ------------------------------------
if __name__ == "__main__":
    key = jax.random.PRNGKey(0)
    pkey, xkey = jax.random.split(key)
    params = init_params(pkey)
    # Input spatial size must be 32x32 so the flattened feature is 16*5*5=400.
    x = jax.random.normal(xkey, (2, 3, 32, 32), dtype=jnp.float32)

    packed = pack_params(params, batch=2)        # one-time host-side packing
    fwd = jax.jit(forward)
    out = jax.block_until_ready(fwd(packed, x))

    assert out.shape == (2, 10), out.shape
    assert out.dtype == jnp.float32, out.dtype

    ref = jax.block_until_ready(jax.jit(reference_forward)(params, x))
    max_err = float(jnp.max(jnp.abs(out - ref)))
    assert np.isfinite(max_err) and max_err < 5e-2, f"max abs err {max_err}"

    print("KERNEL_OK")
</pallas_src>

<mosaic_0001>
module attributes {stable_mosaic.version = 11 : i64} {
  func.func @_lenet_kernel(%arg0: i32, %arg1: memref<6x1024xf32, #tpu.memory_space<vmem>>, %arg2: memref<12x151xbf16, #tpu.memory_space<vmem>>, %arg3: memref<859x196xbf16, #tpu.memory_space<vmem>>, %arg4: memref<32x301xbf16, #tpu.memory_space<vmem>>, %arg5: memref<121x25xbf16, #tpu.memory_space<vmem>>, %arg6: memref<401x120xbf16, #tpu.memory_space<vmem>>, %arg7: memref<120x84xbf16, #tpu.memory_space<vmem>>, %arg8: memref<84x10xbf16, #tpu.memory_space<vmem>>, %arg9: memref<1x94xf32, #tpu.memory_space<vmem>>, %arg10: memref<2x10xf32, #tpu.memory_space<vmem>>, %arg11: memref<151x892xf32, #tpu.memory_space<vmem>>, %arg12: memref<301x136xf32, #tpu.memory_space<vmem>>, %arg13: memref<2x401xf32, #tpu.memory_space<vmem>>) attributes {dimension_semantics = [#tpu.dimension_semantics<arbitrary>], iteration_bounds = array<i64: 1>, scalar_prefetch = 0 : i64, scratch_operands = 3 : i64, tpu.core_type = #tpu.core_type<tc>, window_params = [{pipeline_mode = #tpu.pipeline_mode<synchronous>, transform_indices = @transform_0, window_bounds = array<i64: 6, 1024>}, {pipeline_mode = #tpu.pipeline_mode<synchronous>, transform_indices = @transform_1, window_bounds = array<i64: 12, 151>}, {pipeline_mode = #tpu.pipeline_mode<synchronous>, transform_indices = @transform_2, window_bounds = array<i64: 859, 196>}, {pipeline_mode = #tpu.pipeline_mode<synchronous>, transform_indices = @transform_3, window_bounds = array<i64: 32, 301>}, {pipeline_mode = #tpu.pipeline_mode<synchronous>, transform_indices = @transform_4, window_bounds = array<i64: 121, 25>}, {pipeline_mode = #tpu.pipeline_mode<synchronous>, transform_indices = @transform_5, window_bounds = array<i64: 401, 120>}, {pipeline_mode = #tpu.pipeline_mode<synchronous>, transform_indices = @transform_6, window_bounds = array<i64: 120, 84>}, {pipeline_mode = #tpu.pipeline_mode<synchronous>, transform_indices = @transform_7, window_bounds = array<i64: 84, 10>}, {pipeline_mode = #tpu.pipeline_mode<synchronous>, transform_indices = @transform_8, window_bounds = array<i64: 1, 94>}, {pipeline_mode = #tpu.pipeline_mode<synchronous>, transform_indices = @transform_9, window_bounds = array<i64: 2, 10>}]} {
    %c0 = arith.constant 0 : index
    %c0_0 = arith.constant 0 : index
    %0 = vector.load %arg1[%c0, %c0_0] : memref<6x1024xf32, #tpu.memory_space<vmem>>, vector<6x892xf32>
    %c0_1 = arith.constant 0 : index
    %c0_2 = arith.constant 0 : index
    %1 = vector.load %arg11[%c0_1, %c0_2] : memref<151x892xf32, #tpu.memory_space<vmem>>, vector<6x892xf32>
    tpu.vector_store %arg11[%c0_1, %c0_2], %0 {strides = array<i32>} : memref<151x892xf32, #tpu.memory_space<vmem>>, vector<6x892xf32>,
    %c0_3 = arith.constant 0 : index
    %c1 = arith.constant 1 : index
    %2 = vector.load %arg1[%c0_3, %c1] : memref<6x1024xf32, #tpu.memory_space<vmem>>, vector<6x892xf32>
    %c6 = arith.constant 6 : index
    %c0_4 = arith.constant 0 : index
    %3 = vector.load %arg11[%c6, %c0_4] : memref<151x892xf32, #tpu.memory_space<vmem>>, vector<6x892xf32>
    tpu.vector_store %arg11[%c6, %c0_4], %2 {strides = array<i32>} : memref<151x892xf32, #tpu.memory_space<vmem>>, vector<6x892xf32>,
    %c0_5 = arith.constant 0 : index
    %c2 = arith.constant 2 : index
    %4 = vector.load %arg1[%c0_5, %c2] : memref<6x1024xf32, #tpu.memory_space<vmem>>, vector<6x892xf32>
    %c12 = arith.constant 12 : index
    %c0_6 = arith.constant 0 : index
    %5 = vector.load %arg11[%c12, %c0_6] : memref<151x892xf32, #tpu.memory_space<vmem>>, vector<6x892xf32>
    tpu.vector_store %arg11[%c12, %c0_6], %4 {strides = array<i32>} : memref<151x892xf32, #tpu.memory_space<vmem>>, vector<6x892xf32>,
    %c0_7 = arith.constant 0 : index
    %c3 = arith.constant 3 : index
    %6 = vector.load %arg1[%c0_7, %c3] : memref<6x1024xf32, #tpu.memory_space<vmem>>, vector<6x892xf32>
    %c18 = arith.constant 18 : index
    %c0_8 = arith.constant 0 : index
    %7 = vector.load %arg11[%c18, %c0_8] : memref<151x892xf32, #tpu.memory_space<vmem>>, vector<6x892xf32>
    tpu.vector_store %arg11[%c18, %c0_8], %6 {strides = array<i32>} : memref<151x892xf32, #tpu.memory_space<vmem>>, vector<6x892xf32>,
    %c0_9 = arith.constant 0 : index
    %c4 = arith.constant 4 : index
    %8 = vector.load %arg1[%c0_9, %c4] : memref<6x1024xf32, #tpu.memory_space<vmem>>, vector<6x892xf32>
    %c24 = arith.constant 24 : index
    %c0_10 = arith.constant 0 : index
    %9 = vector.load %arg11[%c24, %c0_10] : memref<151x892xf32, #tpu.memory_space<vmem>>, vector<6x892xf32>
    tpu.vector_store %arg11[%c24, %c0_10], %8 {strides = array<i32>} : memref<151x892xf32, #tpu.memory_space<vmem>>, vector<6x892xf32>,
    %c0_11 = arith.constant 0 : index
    %c32 = arith.constant 32 : index
    %10 = vector.load %arg1[%c0_11, %c32] : memref<6x1024xf32, #tpu.memory_space<vmem>>, vector<6x892xf32>
    %c30 = arith.constant 30 : index
    %c0_12 = arith.constant 0 : index
    %11 = vector.load %arg11[%c30, %c0_12] : memref<151x892xf32, #tpu.memory_space<vmem>>, vector<6x892xf32>
    tpu.vector_store %arg11[%c30, %c0_12], %10 {strides = array<i32>} : memref<151x892xf32, #tpu.memory_space<vmem>>, vector<6x892xf32>,
    %c0_13 = arith.constant 0 : index
    %c33 = arith.constant 33 : index
    %12 = vector.load %arg1[%c0_13, %c33] : memref<6x1024xf32, #tpu.memory_space<vmem>>, vector<6x892xf32>
    %c36 = arith.constant 36 : index
    %c0_14 = arith.constant 0 : index
    %13 = vector.load %arg11[%c36, %c0_14] : memref<151x892xf32, #tpu.memory_space<vmem>>, vector<6x892xf32>
    tpu.vector_store %arg11[%c36, %c0_14], %12 {strides = array<i32>} : memref<151x892xf32, #tpu.memory_space<vmem>>, vector<6x892xf32>,
    %c0_15 = arith.constant 0 : index
    %c34 = arith.constant 34 : index
    %14 = vector.load %arg1[%c0_15, %c34] : memref<6x1024xf32, #tpu.memory_space<vmem>>, vector<6x892xf32>
    %c42 = arith.constant 42 : index
    %c0_16 = arith.constant 0 : index
    %15 = vector.load %arg11[%c42, %c0_16] : memref<151x892xf32, #tpu.memory_space<vmem>>, vector<6x892xf32>
    tpu.vector_store %arg11[%c42, %c0_16], %14 {strides = array<i32>} : memref<151x892xf32, #tpu.memory_space<vmem>>, vector<6x892xf32>,
    %c0_17 = arith.constant 0 : index
    %c35 = arith.constant 35 : index
    %16 = vector.load %arg1[%c0_17, %c35] : memref<6x1024xf32, #tpu.memory_space<vmem>>, vector<6x892xf32>
    %c48 = arith.constant 48 : index
    %c0_18 = arith.constant 0 : index
    %17 = vector.load %arg11[%c48, %c0_18] : memref<151x892xf32, #tpu.memory_space<vmem>>, vector<6x892xf32>
    tpu.vector_store %arg11[%c48, %c0_18], %16 {strides = array<i32>} : memref<151x892xf32, #tpu.memory_space<vmem>>, vector<6x892xf32>,
    %c0_19 = arith.constant 0 : index
    %c36_20 = arith.constant 36 : index
    %18 = vector.load %arg1[%c0_19, %c36_20] : memref<6x1024xf32, #tpu.memory_space<vmem>>, vector<6x892xf32>
    %c54 = arith.constant 54 : index
    %c0_21 = arith.constant 0 : index
    %19 = vector.load %arg11[%c54, %c0_21] : memref<151x892xf32, #tpu.memory_space<vmem>>, vector<6x892xf32>
    tpu.vector_store %arg11[%c54, %c0_21], %18 {strides = array<i32>} : memref<151x892xf32, #tpu.memory_space<vmem>>, vector<6x892xf32>,
    %c0_22 = arith.constant 0 : index
    %c64 = arith.constant 64 : index
    %20 = vector.load %arg1[%c0_22, %c64] : memref<6x1024xf32, #tpu.memory_space<vmem>>, vector<6x892xf32>
    %c60 = arith.constant 60 : index
    %c0_23 = arith.constant 0 : index
    %21 = vector.load %arg11[%c60, %c0_23] : memref<151x892xf32, #tpu.memory_space<vmem>>, vector<6x892xf32>
    tpu.vector_store %arg11[%c60, %c0_23], %20 {strides = array<i32>} : memref<151x892xf32, #tpu.memory_space<vmem>>, vector<6x892xf32>,
    %c0_24 = arith.constant 0 : index
    %c65 = arith.constant 65 : index
    %22 = vector.load %arg1[%c0_24, %c65] : memref<6x1024xf32, #tpu.memory_space<vmem>>, vector<6x892xf32>
    %c66 = arith.constant 66 : index
    %c0_25 = arith.constant 0 : index
    %23 = vector.load %arg11[%c66, %c0_25] : memref<151x892xf32, #tpu.memory_space<vmem>>, vector<6x892xf32>
    tpu.vector_store %arg11[%c66, %c0_25], %22 {strides = array<i32>} : memref<151x892xf32, #tpu.memory_space<vmem>>, vector<6x892xf32>,
    %c0_26 = arith.constant 0 : index
    %c66_27 = arith.constant 66 : index
    %24 = vector.load %arg1[%c0_26, %c66_27] : memref<6x1024xf32, #tpu.memory_space<vmem>>, vector<6x892xf32>
    %c72 = arith.constant 72 : index
    %c0_28 = arith.constant 0 : index
    %25 = vector.load %arg11[%c72, %c0_28] : memref<151x892xf32, #tpu.memory_space<vmem>>, vector<6x892xf32>
    tpu.vector_store %arg11[%c72, %c0_28], %24 {strides = array<i32>} : memref<151x892xf32, #tpu.memory_space<vmem>>, vector<6x892xf32>,
    %c0_29 = arith.constant 0 : index
    %c67 = arith.constant 67 : index
    %26 = vector.load %arg1[%c0_29, %c67] : memref<6x1024xf32, #tpu.memory_space<vmem>>, vector<6x892xf32>
    %c78 = arith.constant 78 : index
    %c0_30 = arith.constant 0 : index
    %27 = vector.load %arg11[%c78, %c0_30] : memref<151x892xf32, #tpu.memory_space<vmem>>, vector<6x892xf32>
    tpu.vector_store %arg11[%c78, %c0_30], %26 {strides = array<i32>} : memref<151x892xf32, #tpu.memory_space<vmem>>, vector<6x892xf32>,
    %c0_31 = arith.constant 0 : index
    %c68 = arith.constant 68 : index
    %28 = vector.load %arg1[%c0_31, %c68] : memref<6x1024xf32, #tpu.memory_space<vmem>>, vector<6x892xf32>
    %c84 = arith.constant 84 : index
    %c0_32 = arith.constant 0 : index
    %29 = vector.load %arg11[%c84, %c0_32] : memref<151x892xf32, #tpu.memory_space<vmem>>, vector<6x892xf32>
    tpu.vector_store %arg11[%c84, %c0_32], %28 {strides = array<i32>} : memref<151x892xf32, #tpu.memory_space<vmem>>, vector<6x892xf32>,
    %c0_33 = arith.constant 0 : index
    %c96 = arith.constant 96 : index
    %30 = vector.load %arg1[%c0_33, %c96] : memref<6x1024xf32, #tpu.memory_space<vmem>>, vector<6x892xf32>
    %c90 = arith.constant 90 : index
    %c0_34 = arith.constant 0 : index
    %31 = vector.load %arg11[%c90, %c0_34] : memref<151x892xf32, #tpu.memory_space<vmem>>, vector<6x892xf32>
    tpu.vector_store %arg11[%c90, %c0_34], %30 {strides = array<i32>} : memref<151x892xf32, #tpu.memory_space<vmem>>, vector<6x892xf32>,
    %c0_35 = arith.constant 0 : index
    %c97 = arith.constant 97 : index
    %32 = vector.load %arg1[%c0_35, %c97] : memref<6x1024xf32, #tpu.memory_space<vmem>>, vector<6x892xf32>
    %c96_36 = arith.constant 96 : index
    %c0_37 = arith.constant 0 : index
    %33 = vector.load %arg11[%c96_36, %c0_37] : memref<151x892xf32, #tpu.memory_space<vmem>>, vector<6x892xf32>
    tpu.vector_store %arg11[%c96_36, %c0_37], %32 {strides = array<i32>} : memref<151x892xf32, #tpu.memory_space<vmem>>, vector<6x892xf32>,
    %c0_38 = arith.constant 0 : index
    %c98 = arith.constant 98 : index
    %34 = vector.load %arg1[%c0_38, %c98] : memref<6x1024xf32, #tpu.memory_space<vmem>>, vector<6x892xf32>
    %c102 = arith.constant 102 : index
    %c0_39 = arith.constant 0 : index
    %35 = vector.load %arg11[%c102, %c0_39] : memref<151x892xf32, #tpu.memory_space<vmem>>, vector<6x892xf32>
    tpu.vector_store %arg11[%c102, %c0_39], %34 {strides = array<i32>} : memref<151x892xf32, #tpu.memory_space<vmem>>, vector<6x892xf32>,
    %c0_40 = arith.constant 0 : index
    %c99 = arith.constant 99 : index
    %36 = vector.load %arg1[%c0_40, %c99] : memref<6x1024xf32, #tpu.memory_space<vmem>>, vector<6x892xf32>
    %c108 = arith.constant 108 : index
    %c0_41 = arith.constant 0 : index
    %37 = vector.load %arg11[%c108, %c0_41] : memref<151x892xf32, #tpu.memory_space<vmem>>, vector<6x892xf32>
    tpu.vector_store %arg11[%c108, %c0_41], %36 {strides = array<i32>} : memref<151x892xf32, #tpu.memory_space<vmem>>, vector<6x892xf32>,
    %c0_42 = arith.constant 0 : index
    %c100 = arith.constant 100 : index
    %38 = vector.load %arg1[%c0_42, %c100] : memref<6x1024xf32, #tpu.memory_space<vmem>>, vector<6x892xf32>
    %c114 = arith.constant 114 : index
    %c0_43 = arith.constant 0 : index
    %39 = vector.load %arg11[%c114, %c0_43] : memref<151x892xf32, #tpu.memory_space<vmem>>, vector<6x892xf32>
    tpu.vector_store %arg11[%c114, %c0_43], %38 {strides = array<i32>} : memref<151x892xf32, #tpu.memory_space<vmem>>, vector<6x892xf32>,
    %c0_44 = arith.constant 0 : index
    %c128 = arith.constant 128 : index
    %40 = vector.load %arg1[%c0_44, %c128] : memref<6x1024xf32, #tpu.memory_space<vmem>>, vector<6x892xf32>
    %c120 = arith.constant 120 : index
    %c0_45 = arith.constant 0 : index
    %41 = vector.load %arg11[%c120, %c0_45] : memref<151x892xf32, #tpu.memory_space<vmem>>, vector<6x892xf32>
    tpu.vector_store %arg11[%c120, %c0_45], %40 {strides = array<i32>} : memref<151x892xf32, #tpu.memory_space<vmem>>, vector<6x892xf32>,
    %c0_46 = arith.constant 0 : index
    %c129 = arith.constant 129 : index
    %42 = vector.load %arg1[%c0_46, %c129] : memref<6x1024xf32, #tpu.memory_space<vmem>>, vector<6x892xf32>
    %c126 = arith.constant 126 : index
    %c0_47 = arith.constant 0 : index
    %43 = vector.load %arg11[%c126, %c0_47] : memref<151x892xf32, #tpu.memory_space<vmem>>, vector<6x892xf32>
    tpu.vector_store %arg11[%c126, %c0_47], %42 {strides = array<i32>} : memref<151x892xf32, #tpu.memory_space<vmem>>, vector<6x892xf32>,
    %c0_48 = arith.constant 0 : index
    %c130 = arith.constant 130 : index
    %44 = vector.load %arg1[%c0_48, %c130] : memref<6x1024xf32, #tpu.memory_space<vmem>>, vector<6x892xf32>
    %c132 = arith.constant 132 : index
    %c0_49 = arith.constant 0 : index
    %45 = vector.load %arg11[%c132, %c0_49] : memref<151x892xf32, #tpu.memory_space<vmem>>, vector<6x892xf32>
    tpu.vector_store %arg11[%c132, %c0_49], %44 {strides = array<i32>} : memref<151x892xf32, #tpu.memory_space<vmem>>, vector<6x892xf32>,
    %c0_50 = arith.constant 0 : index
    %c131 = arith.constant 131 : index
    %46 = vector.load %arg1[%c0_50, %c131] : memref<6x1024xf32, #tpu.memory_space<vmem>>, vector<6x892xf32>
    %c138 = arith.constant 138 : index
    %c0_51 = arith.constant 0 : index
    %47 = vector.load %arg11[%c138, %c0_51] : memref<151x892xf32, #tpu.memory_space<vmem>>, vector<6x892xf32>
    tpu.vector_store %arg11[%c138, %c0_51], %46 {strides = array<i32>} : memref<151x892xf32, #tpu.memory_space<vmem>>, vector<6x892xf32>,
    %c0_52 = arith.constant 0 : index
    %c132_53 = arith.constant 132 : index
    %48 = vector.load %arg1[%c0_52, %c132_53] : memref<6x1024xf32, #tpu.memory_space<vmem>>, vector<6x892xf32>
    %c144 = arith.constant 144 : index
    %c0_54 = arith.constant 0 : index
    %49 = vector.load %arg11[%c144, %c0_54] : memref<151x892xf32, #tpu.memory_space<vmem>>, vector<6x892xf32>
    tpu.vector_store %arg11[%c144, %c0_54], %48 {strides = array<i32>} : memref<151x892xf32, #tpu.memory_space<vmem>>, vector<6x892xf32>,
    %cst = arith.constant 1.000000e+00 : f32
    %50 = vector.broadcast %cst : f32 to vector<1x892xf32>
    %c150 = arith.constant 150 : index
    %c0_55 = arith.constant 0 : index
    %51 = vector.load %arg11[%c150, %c0_55] : memref<151x892xf32, #tpu.memory_space<vmem>>, vector<1x892xf32>
    tpu.vector_store %arg11[%c150, %c0_55], %50 {strides = array<i32>} : memref<151x892xf32, #tpu.memory_space<vmem>>, vector<1x892xf32>,
    %c0_56 = arith.constant 0 : index
    %c0_57 = arith.constant 0 : index
    %52 = vector.load %arg2[%c0_56, %c0_57] : memref<12x151xbf16, #tpu.memory_space<vmem>>, vector<12x151xbf16>
    %c0_58 = arith.constant 0 : index
    %c0_59 = arith.constant 0 : index
    %53 = vector.load %arg11[%c0_58, %c0_59] : memref<151x892xf32, #tpu.memory_space<vmem>>, vector<151x892xf32>
    %54 = arith.truncf %53 : vector<151x892xf32> to vector<151x892xbf16>
    %cst_60 = arith.constant dense<0.000000e+00> : vector<12x892xf32>
    %55 = tpu.matmul %52, %54, %cst_60 {dimension_numbers = #tpu.dot_dimension_numbers<[1], [0], [0], [1], [0, 0, 1, 1], [], []>} : vector<12x151xbf16>, vector<151x892xbf16>, vector<12x892xf32> -> vector<12x892xf32>
    %cst_61 = arith.constant 0.000000e+00 : f32
    %56 = vector.broadcast %cst_61 : f32 to vector<12x892xf32>
    %57 = arith.maximumf %55, %56 : vector<12x892xf32>
    %58 = vector.extract_strided_slice %57 {offsets = [0, 0], sizes = [12, 891], strides = [1, 1]} : vector<12x892xf32> to vector<12x891xf32>
    %59 = vector.extract_strided_slice %57 {offsets = [0, 1], sizes = [12, 891], strides = [1, 1]} : vector<12x892xf32> to vector<12x891xf32>
    %60 = arith.maximumf %58, %59 : vector<12x891xf32>
    %61 = vector.extract_strided_slice %60 {offsets = [0, 0], sizes = [12, 859], strides = [1, 1]} : vector<12x891xf32> to vector<12x859xf32>
    %62 = vector.extract_strided_slice %60 {offsets = [0, 32], sizes = [12, 859], strides = [1, 1]} : vector<12x891xf32> to vector<12x859xf32>
    %63 = arith.maximumf %61, %62 : vector<12x859xf32>
    %64 = arith.truncf %63 : vector<12x859xf32> to vector<12x859xbf16>
    %c0_62 = arith.constant 0 : index
    %c0_63 = arith.constant 0 : index
    %65 = vector.load %arg3[%c0_62, %c0_63] : memref<859x196xbf16, #tpu.memory_space<vmem>>, vector<859x196xbf16>
    %cst_64 = arith.constant dense<0.000000e+00> : vector<12x196xf32>
    %66 = tpu.matmul %64, %65, %cst_64 {dimension_numbers = #tpu.dot_dimension_numbers<[1], [0], [0], [1], [0, 0, 1, 1], [], []>} : vector<12x859xbf16>, vector<859x196xbf16>, vector<12x196xf32> -> vector<12x196xf32>
    %67 = vector.extract_strided_slice %66 {offsets = [0, 0], sizes = [12, 136], strides = [1, 1]} : vector<12x196xf32> to vector<12x136xf32>
    %c0_65 = arith.constant 0 : index
    %c0_66 = arith.constant 0 : index
    %68 = vector.load %arg12[%c0_65, %c0_66] : memref<301x136xf32, #tpu.memory_space<vmem>>, vector<12x136xf32>
    tpu.vector_store %arg12[%c0_65, %c0_66], %67 {strides = array<i32>} : memref<301x136xf32, #tpu.memory_space<vmem>>, vector<12x136xf32>,
    %69 = vector.extract_strided_slice %66 {offsets = [0, 1], sizes = [12, 136], strides = [1, 1]} : vector<12x196xf32> to vector<12x136xf32>
    %c12_67 = arith.constant 12 : index
    %c0_68 = arith.constant 0 : index
    %70 = vector.load %arg12[%c12_67, %c0_68] : memref<301x136xf32, #tpu.memory_space<vmem>>, vector<12x136xf32>
    tpu.vector_store %arg12[%c12_67, %c0_68], %69 {strides = array<i32>} : memref<301x136xf32, #tpu.memory_space<vmem>>, vector<12x136xf32>,
    %71 = vector.extract_strided_slice %66 {offsets = [0, 2], sizes = [12, 136], strides = [1, 1]} : vector<12x196xf32> to vector<12x136xf32>
    %c24_69 = arith.constant 24 : index
    %c0_70 = arith.constant 0 : index
    %72 = vector.load %arg12[%c24_69, %c0_70] : memref<301x136xf32, #tpu.memory_space<vmem>>, vector<12x136xf32>
    tpu.vector_store %arg12[%c24_69, %c0_70], %71 {strides = array<i32>} : memref<301x136xf32, #tpu.memory_space<vmem>>, vector<12x136xf32>,
    %73 = vector.extract_strided_slice %66 {offsets = [0, 3], sizes = [12, 136], strides = [1, 1]} : vector<12x196xf32> to vector<12x136xf32>
    %c36_71 = arith.constant 36 : index
    %c0_72 = arith.constant 0 : index
    %74 = vector.load %arg12[%c36_71, %c0_72] : memref<301x136xf32, #tpu.memory_space<vmem>>, vector<12x136xf32>
    tpu.vector_store %arg12[%c36_71, %c0_72], %73 {strides = array<i32>} : memref<301x136xf32, #tpu.memory_space<vmem>>, vector<12x136xf32>,
    %75 = vector.extract_strided_slice %66 {offsets = [0, 4], sizes = [12, 136], strides = [1, 1]} : vector<12x196xf32> to vector<12x136xf32>
    %c48_73 = arith.constant 48 : index
    %c0_74 = arith.constant 0 : index
    %76 = vector.load %arg12[%c48_73, %c0_74] : memref<301x136xf32, #tpu.memory_space<vmem>>, vector<12x136xf32>
    tpu.vector_store %arg12[%c48_73, %c0_74], %75 {strides = array<i32>} : memref<301x136xf32, #tpu.memory_space<vmem>>, vector<12x136xf32>,
    %77 = vector.extract_strided_slice %66 {offsets = [0, 14], sizes = [12, 136], strides = [1, 1]} : vector<12x196xf32> to vector<12x136xf32>
    %c60_75 = arith.constant 60 : index
    %c0_76 = arith.constant 0 : index
    %78 = vector.load %arg12[%c60_75, %c0_76] : memref<301x136xf32, #tpu.memory_space<vmem>>, vector<12x136xf32>
    tpu.vector_store %arg12[%c60_75, %c0_76], %77 {strides = array<i32>} : memref<301x136xf32, #tpu.memory_space<vmem>>, vector<12x136xf32>,
    %79 = vector.extract_strided_slice %66 {offsets = [0, 15], sizes = [12, 136], strides = [1, 1]} : vector<12x196xf32> to vector<12x136xf32>
    %c72_77 = arith.constant 72 : index
    %c0_78 = arith.constant 0 : index
    %80 = vector.load %arg12[%c72_77, %c0_78] : memref<301x136xf32, #tpu.memory_space<vmem>>, vector<12x136xf32>
    tpu.vector_store %arg12[%c72_77, %c0_78], %79 {strides = array<i32>} : memref<301x136xf32, #tpu.memory_space<vmem>>, vector<12x136xf32>,
    %81 = vector.extract_strided_slice %66 {offsets = [0, 16], sizes = [12, 136], strides = [1, 1]} : vector<12x196xf32> to vector<12x136xf32>
    %c84_79 = arith.constant 84 : index
    %c0_80 = arith.constant 0 : index
    %82 = vector.load %arg12[%c84_79, %c0_80] : memref<301x136xf32, #tpu.memory_space<vmem>>, vector<12x136xf32>
    tpu.vector_store %arg12[%c84_79, %c0_80], %81 {strides = array<i32>} : memref<301x136xf32, #tpu.memory_space<vmem>>, vector<12x136xf32>,
    %83 = vector.extract_strided_slice %66 {offsets = [0, 17], sizes = [12, 136], strides = [1, 1]} : vector<12x196xf32> to vector<12x136xf32>
    %c96_81 = arith.constant 96 : index
    %c0_82 = arith.constant 0 : index
    %84 = vector.load %arg12[%c96_81, %c0_82] : memref<301x136xf32, #tpu.memory_space<vmem>>, vector<12x136xf32>
    tpu.vector_store %arg12[%c96_81, %c0_82], %83 {strides = array<i32>} : memref<301x136xf32, #tpu.memory_space<vmem>>, vector<12x136xf32>,
    %85 = vector.extract_strided_slice %66 {offsets = [0, 18], sizes = [12, 136], strides = [1, 1]} : vector<12x196xf32> to vector<12x136xf32>
    %c108_83 = arith.constant 108 : index
    %c0_84 = arith.constant 0 : index
    %86 = vector.load %arg12[%c108_83, %c0_84] : memref<301x136xf32, #tpu.memory_space<vmem>>, vector<12x136xf32>
    tpu.vector_store %arg12[%c108_83, %c0_84], %85 {strides = array<i32>} : memref<301x136xf32, #tpu.memory_space<vmem>>, vector<12x136xf32>,
    %87 = vector.extract_strided_slice %66 {offsets = [0, 28], sizes = [12, 136], strides = [1, 1]} : vector<12x196xf32> to vector<12x136xf32>
    %c120_85 = arith.constant 120 : index
    %c0_86 = arith.constant 0 : index
    %88 = vector.load %arg12[%c120_85, %c0_86] : memref<301x136xf32, #tpu.memory_space<vmem>>, vector<12x136xf32>
    tpu.vector_store %arg12[%c120_85, %c0_86], %87 {strides = array<i32>} : memref<301x136xf32, #tpu.memory_space<vmem>>, vector<12x136xf32>,
    %89 = vector.extract_strided_slice %66 {offsets = [0, 29], sizes = [12, 136], strides = [1, 1]} : vector<12x196xf32> to vector<12x136xf32>
    %c132_87 = arith.constant 132 : index
    %c0_88 = arith.constant 0 : index
    %90 = vector.load %arg12[%c132_87, %c0_88] : memref<301x136xf32, #tpu.memory_space<vmem>>, vector<12x136xf32>
    tpu.vector_store %arg12[%c132_87, %c0_88], %89 {strides = array<i32>} : memref<301x136xf32, #tpu.memory_space<vmem>>, vector<12x136xf32>,
    %91 = vector.extract_strided_slice %66 {offsets = [0, 30], sizes = [12, 136], strides = [1, 1]} : vector<12x196xf32> to vector<12x136xf32>
    %c144_89 = arith.constant 144 : index
    %c0_90 = arith.constant 0 : index
    %92 = vector.load %arg12[%c144_89, %c0_90] : memref<301x136xf32, #tpu.memory_space<vmem>>, vector<12x136xf32>
    tpu.vector_store %arg12[%c144_89, %c0_90], %91 {strides = array<i32>} : memref<301x136xf32, #tpu.memory_space<vmem>>, vector<12x136xf32>,
    %93 = vector.extract_strided_slice %66 {offsets = [0, 31], sizes = [12, 136], strides = [1, 1]} : vector<12x196xf32> to vector<12x136xf32>
    %c156 = arith.constant 156 : index
    %c0_91 = arith.constant 0 : index
    %94 = vector.load %arg12[%c156, %c0_91] : memref<301x136xf32, #tpu.memory_space<vmem>>, vector<12x136xf32>
    tpu.vector_store %arg12[%c156, %c0_91], %93 {strides = array<i32>} : memref<301x136xf32, #tpu.memory_space<vmem>>, vector<12x136xf32>,
    %95 = vector.extract_strided_slice %66 {offsets = [0, 32], sizes = [12, 136], strides = [1, 1]} : vector<12x196xf32> to vector<12x136xf32>
    %c168 = arith.constant 168 : index
    %c0_92 = arith.constant 0 : index
    %96 = vector.load %arg12[%c168, %c0_92] : memref<301x136xf32, #tpu.memory_space<vmem>>, vector<12x136xf32>
    tpu.vector_store %arg12[%c168, %c0_92], %95 {strides = array<i32>} : memref<301x136xf32, #tpu.memory_space<vmem>>, vector<12x136xf32>,
    %97 = vector.extract_strided_slice %66 {offsets = [0, 42], sizes = [12, 136], strides = [1, 1]} : vector<12x196xf32> to vector<12x136xf32>
    %c180 = arith.constant 180 : index
    %c0_93 = arith.constant 0 : index
    %98 = vector.load %arg12[%c180, %c0_93] : memref<301x136xf32, #tpu.memory_space<vmem>>, vector<12x136xf32>
    tpu.vector_store %arg12[%c180, %c0_93], %97 {strides = array<i32>} : memref<301x136xf32, #tpu.memory_space<vmem>>, vector<12x136xf32>,
    %99 = vector.extract_strided_slice %66 {offsets = [0, 43], sizes = [12, 136], strides = [1, 1]} : vector<12x196xf32> to vector<12x136xf32>
    %c192 = arith.constant 192 : index
    %c0_94 = arith.constant 0 : index
    %100 = vector.load %arg12[%c192, %c0_94] : memref<301x136xf32, #tpu.memory_space<vmem>>, vector<12x136xf32>
    tpu.vector_store %arg12[%c192, %c0_94], %99 {strides = array<i32>} : memref<301x136xf32, #tpu.memory_space<vmem>>, vector<12x136xf32>,
    %101 = vector.extract_strided_slice %66 {offsets = [0, 44], sizes = [12, 136], strides = [1, 1]} : vector<12x196xf32> to vector<12x136xf32>
    %c204 = arith.constant 204 : index
    %c0_95 = arith.constant 0 : index
    %102 = vector.load %arg12[%c204, %c0_95] : memref<301x136xf32, #tpu.memory_space<vmem>>, vector<12x136xf32>
    tpu.vector_store %arg12[%c204, %c0_95], %101 {strides = array<i32>} : memref<301x136xf32, #tpu.memory_space<vmem>>, vector<12x136xf32>,
    %103 = vector.extract_strided_slice %66 {offsets = [0, 45], sizes = [12, 136], strides = [1, 1]} : vector<12x196xf32> to vector<12x136xf32>
    %c216 = arith.constant 216 : index
    %c0_96 = arith.constant 0 : index
    %104 = vector.load %arg12[%c216, %c0_96] : memref<301x136xf32, #tpu.memory_space<vmem>>, vector<12x136xf32>
    tpu.vector_store %arg12[%c216, %c0_96], %103 {strides = array<i32>} : memref<301x136xf32, #tpu.memory_space<vmem>>, vector<12x136xf32>,
    %105 = vector.extract_strided_slice %66 {offsets = [0, 46], sizes = [12, 136], strides = [1, 1]} : vector<12x196xf32> to vector<12x136xf32>
    %c228 = arith.constant 228 : index
    %c0_97 = arith.constant 0 : index
    %106 = vector.load %arg12[%c228, %c0_97] : memref<301x136xf32, #tpu.memory_space<vmem>>, vector<12x136xf32>
    tpu.vector_store %arg12[%c228, %c0_97], %105 {strides = array<i32>} : memref<301x136xf32, #tpu.memory_space<vmem>>, vector<12x136xf32>,
    %107 = vector.extract_strided_slice %66 {offsets = [0, 56], sizes = [12, 136], strides = [1, 1]} : vector<12x196xf32> to vector<12x136xf32>
    %c240 = arith.constant 240 : index
    %c0_98 = arith.constant 0 : index
    %108 = vector.load %arg12[%c240, %c0_98] : memref<301x136xf32, #tpu.memory_space<vmem>>, vector<12x136xf32>
    tpu.vector_store %arg12[%c240, %c0_98], %107 {strides = array<i32>} : memref<301x136xf32, #tpu.memory_space<vmem>>, vector<12x136xf32>,
    %109 = vector.extract_strided_slice %66 {offsets = [0, 57], sizes = [12, 136], strides = [1, 1]} : vector<12x196xf32> to vector<12x136xf32>
    %c252 = arith.constant 252 : index
    %c0_99 = arith.constant 0 : index
    %110 = vector.load %arg12[%c252, %c0_99] : memref<301x136xf32, #tpu.memory_space<vmem>>, vector<12x136xf32>
    tpu.vector_store %arg12[%c252, %c0_99], %109 {strides = array<i32>} : memref<301x136xf32, #tpu.memory_space<vmem>>, vector<12x136xf32>,
    %111 = vector.extract_strided_slice %66 {offsets = [0, 58], sizes = [12, 136], strides = [1, 1]} : vector<12x196xf32> to vector<12x136xf32>
    %c264 = arith.constant 264 : index
    %c0_100 = arith.constant 0 : index
    %112 = vector.load %arg12[%c264, %c0_100] : memref<301x136xf32, #tpu.memory_space<vmem>>, vector<12x136xf32>
    tpu.vector_store %arg12[%c264, %c0_100], %111 {strides = array<i32>} : memref<301x136xf32, #tpu.memory_space<vmem>>, vector<12x136xf32>,
    %113 = vector.extract_strided_slice %66 {offsets = [0, 59], sizes = [12, 136], strides = [1, 1]} : vector<12x196xf32> to vector<12x136xf32>
    %c276 = arith.constant 276 : index
    %c0_101 = arith.constant 0 : index
    %114 = vector.load %arg12[%c276, %c0_101] : memref<301x136xf32, #tpu.memory_space<vmem>>, vector<12x136xf32>
    tpu.vector_store %arg12[%c276, %c0_101], %113 {strides = array<i32>} : memref<301x136xf32, #tpu.memory_space<vmem>>, vector<12x136xf32>,
    %115 = vector.extract_strided_slice %66 {offsets = [0, 60], sizes = [12, 136], strides = [1, 1]} : vector<12x196xf32> to vector<12x136xf32>
    %c288 = arith.constant 288 : index
    %c0_102 = arith.constant 0 : index
    %116 = vector.load %arg12[%c288, %c0_102] : memref<301x136xf32, #tpu.memory_space<vmem>>, vector<12x136xf32>
    tpu.vector_store %arg12[%c288, %c0_102], %115 {strides = array<i32>} : memref<301x136xf32, #tpu.memory_space<vmem>>, vector<12x136xf32>,
    %cst_103 = arith.constant 1.000000e+00 : f32
    %117 = vector.broadcast %cst_103 : f32 to vector<1x136xf32>
    %c300 = arith.constant 300 : index
    %c0_104 = arith.constant 0 : index
    %118 = vector.load %arg12[%c300, %c0_104] : memref<301x136xf32, #tpu.memory_space<vmem>>, vector<1x136xf32>
    tpu.vector_store %arg12[%c300, %c0_104], %117 {strides = array<i32>} : memref<301x136xf32, #tpu.memory_space<vmem>>, vector<1x136xf32>,
    %c0_105 = arith.constant 0 : index
    %c0_106 = arith.constant 0 : index
    %119 = vector.load %arg4[%c0_105, %c0_106] : memref<32x301xbf16, #tpu.memory_space<vmem>>, vector<32x301xbf16>
    %c0_107 = arith.constant 0 : index
    %c0_108 = arith.constant 0 : index
    %120 = vector.load %arg12[%c0_107, %c0_108] : memref<301x136xf32, #tpu.memory_space<vmem>>, vector<301x136xf32>
    %121 = arith.truncf %120 : vector<301x136xf32> to vector<301x136xbf16>
    %cst_109 = arith.constant dense<0.000000e+00> : vector<32x136xf32>
    %122 = tpu.matmul %119, %121, %cst_109 {dimension_numbers = #tpu.dot_dimension_numbers<[1], [0], [0], [1], [0, 0, 1, 1], [], []>} : vector<32x301xbf16>, vector<301x136xbf16>, vector<32x136xf32> -> vector<32x136xf32>
    %cst_110 = arith.constant 0.000000e+00 : f32
    %123 = vector.broadcast %cst_110 : f32 to vector<32x136xf32>
    %124 = arith.maximumf %122, %123 : vector<32x136xf32>
    %125 = vector.extract_strided_slice %124 {offsets = [0, 0], sizes = [32, 135], strides = [1, 1]} : vector<32x136xf32> to vector<32x135xf32>
    %126 = vector.extract_strided_slice %124 {offsets = [0, 1], sizes = [32, 135], strides = [1, 1]} : vector<32x136xf32> to vector<32x135xf32>
    %127 = arith.maximumf %125, %126 : vector<32x135xf32>
    %128 = vector.extract_strided_slice %127 {offsets = [0, 0], sizes = [32, 121], strides = [1, 1]} : vector<32x135xf32> to vector<32x121xf32>
    %129 = vector.extract_strided_slice %127 {offsets = [0, 14], sizes = [32, 121], strides = [1, 1]} : vector<32x135xf32> to vector<32x121xf32>
    %130 = arith.maximumf %128, %129 : vector<32x121xf32>
    %131 = arith.truncf %130 : vector<32x121xf32> to vector<32x121xbf16>
    %c0_111 = arith.constant 0 : index
    %c0_112 = arith.constant 0 : index
    %132 = vector.load %arg5[%c0_111, %c0_112] : memref<121x25xbf16, #tpu.memory_space<vmem>>, vector<121x25xbf16>
    %cst_113 = arith.constant dense<0.000000e+00> : vector<32x25xf32>
    %133 = tpu.matmul %131, %132, %cst_113 {dimension_numbers = #tpu.dot_dimension_numbers<[1], [0], [0], [1], [0, 0, 1, 1], [], []>} : vector<32x121xbf16>, vector<121x25xbf16>, vector<32x25xf32> -> vector<32x25xf32>
    %134 = vector.extract_strided_slice %133 {offsets = [0, 0], sizes = [2, 25], strides = [1, 1]} : vector<32x25xf32> to vector<2x25xf32>
    %c0_114 = arith.constant 0 : index
    %c0_115 = arith.constant 0 : index
    %135 = vector.load %arg13[%c0_114, %c0_115] : memref<2x401xf32, #tpu.memory_space<vmem>>, vector<2x25xf32>
    tpu.vector_store %arg13[%c0_114, %c0_115], %134 {strides = array<i32>} : memref<2x401xf32, #tpu.memory_space<vmem>>, vector<2x25xf32>,
    %136 = vector.extract_strided_slice %133 {offsets = [2, 0], sizes = [2, 25], strides = [1, 1]} : vector<32x25xf32> to vector<2x25xf32>
    %c0_116 = arith.constant 0 : index
    %c25 = arith.constant 25 : index
    %137 = vector.load %arg13[%c0_116, %c25] : memref<2x401xf32, #tpu.memory_space<vmem>>, vector<2x25xf32>
    tpu.vector_store %arg13[%c0_116, %c25], %136 {strides = array<i32>} : memref<2x401xf32, #tpu.memory_space<vmem>>, vector<2x25xf32>,
    %138 = vector.extract_strided_slice %133 {offsets = [4, 0], sizes = [2, 25], strides = [1, 1]} : vector<32x25xf32> to vector<2x25xf32>
    %c0_117 = arith.constant 0 : index
    %c50 = arith.constant 50 : index
    %139 = vector.load %arg13[%c0_117, %c50] : memref<2x401xf32, #tpu.memory_space<vmem>>, vector<2x25xf32>
    tpu.vector_store %arg13[%c0_117, %c50], %138 {strides = array<i32>} : memref<2x401xf32, #tpu.memory_space<vmem>>, vector<2x25xf32>,
    %140 = vector.extract_strided_slice %133 {offsets = [6, 0], sizes = [2, 25], strides = [1, 1]} : vector<32x25xf32> to vector<2x25xf32>
    %c0_118 = arith.constant 0 : index
    %c75 = arith.constant 75 : index
    %141 = vector.load %arg13[%c0_118, %c75] : memref<2x401xf32, #tpu.memory_space<vmem>>, vector<2x25xf32>
    tpu.vector_store %arg13[%c0_118, %c75], %140 {strides = array<i32>} : memref<2x401xf32, #tpu.memory_space<vmem>>, vector<2x25xf32>,
    %142 = vector.extract_strided_slice %133 {offsets = [8, 0], sizes = [2, 25], strides = [1, 1]} : vector<32x25xf32> to vector<2x25xf32>
    %c0_119 = arith.constant 0 : index
    %c100_120 = arith.constant 100 : index
    %143 = vector.load %arg13[%c0_119, %c100_120] : memref<2x401xf32, #tpu.memory_space<vmem>>, vector<2x25xf32>
    tpu.vector_store %arg13[%c0_119, %c100_120], %142 {strides = array<i32>} : memref<2x401xf32, #tpu.memory_space<vmem>>, vector<2x25xf32>,
    %144 = vector.extract_strided_slice %133 {offsets = [10, 0], sizes = [2, 25], strides = [1, 1]} : vector<32x25xf32> to vector<2x25xf32>
    %c0_121 = arith.constant 0 : index
    %c125 = arith.constant 125 : index
    %145 = vector.load %arg13[%c0_121, %c125] : memref<2x401xf32, #tpu.memory_space<vmem>>, vector<2x25xf32>
    tpu.vector_store %arg13[%c0_121, %c125], %144 {strides = array<i32>} : memref<2x401xf32, #tpu.memory_space<vmem>>, vector<2x25xf32>,
    %146 = vector.extract_strided_slice %133 {offsets = [12, 0], sizes = [2, 25], strides = [1, 1]} : vector<32x25xf32> to vector<2x25xf32>
    %c0_122 = arith.constant 0 : index
    %c150_123 = arith.constant 150 : index
    %147 = vector.load %arg13[%c0_122, %c150_123] : memref<2x401xf32, #tpu.memory_space<vmem>>, vector<2x25xf32>
    tpu.vector_store %arg13[%c0_122, %c150_123], %146 {strides = array<i32>} : memref<2x401xf32, #tpu.memory_space<vmem>>, vector<2x25xf32>,
    %148 = vector.extract_strided_slice %133 {offsets = [14, 0], sizes = [2, 25], strides = [1, 1]} : vector<32x25xf32> to vector<2x25xf32>
    %c0_124 = arith.constant 0 : index
    %c175 = arith.constant 175 : index
    %149 = vector.load %arg13[%c0_124, %c175] : memref<2x401xf32, #tpu.memory_space<vmem>>, vector<2x25xf32>
    tpu.vector_store %arg13[%c0_124, %c175], %148 {strides = array<i32>} : memref<2x401xf32, #tpu.memory_space<vmem>>, vector<2x25xf32>,
    %150 = vector.extract_strided_slice %133 {offsets = [16, 0], sizes = [2, 25], strides = [1, 1]} : vector<32x25xf32> to vector<2x25xf32>
    %c0_125 = arith.constant 0 : index
    %c200 = arith.constant 200 : index
    %151 = vector.load %arg13[%c0_125, %c200] : memref<2x401xf32, #tpu.memory_space<vmem>>, vector<2x25xf32>
    tpu.vector_store %arg13[%c0_125, %c200], %150 {strides = array<i32>} : memref<2x401xf32, #tpu.memory_space<vmem>>, vector<2x25xf32>,
    %152 = vector.extract_strided_slice %133 {offsets = [18, 0], sizes = [2, 25], strides = [1, 1]} : vector<32x25xf32> to vector<2x25xf32>
    %c0_126 = arith.constant 0 : index
    %c225 = arith.constant 225 : index
    %153 = vector.load %arg13[%c0_126, %c225] : memref<2x401xf32, #tpu.memory_space<vmem>>, vector<2x25xf32>
    tpu.vector_store %arg13[%c0_126, %c225], %152 {strides = array<i32>} : memref<2x401xf32, #tpu.memory_space<vmem>>, vector<2x25xf32>,
    %154 = vector.extract_strided_slice %133 {offsets = [20, 0], sizes = [2, 25], strides = [1, 1]} : vector<32x25xf32> to vector<2x25xf32>
    %c0_127 = arith.constant 0 : index
    %c250 = arith.constant 250 : index
    %155 = vector.load %arg13[%c0_127, %c250] : memref<2x401xf32, #tpu.memory_space<vmem>>, vector<2x25xf32>
    tpu.vector_store %arg13[%c0_127, %c250], %154 {strides = array<i32>} : memref<2x401xf32, #tpu.memory_space<vmem>>, vector<2x25xf32>,
    %156 = vector.extract_strided_slice %133 {offsets = [22, 0], sizes = [2, 25], strides = [1, 1]} : vector<32x25xf32> to vector<2x25xf32>
    %c0_128 = arith.constant 0 : index
    %c275 = arith.constant 275 : index
    %157 = vector.load %arg13[%c0_128, %c275] : memref<2x401xf32, #tpu.memory_space<vmem>>, vector<2x25xf32>
    tpu.vector_store %arg13[%c0_128, %c275], %156 {strides = array<i32>} : memref<2x401xf32, #tpu.memory_space<vmem>>, vector<2x25xf32>,
    %158 = vector.extract_strided_slice %133 {offsets = [24, 0], sizes = [2, 25], strides = [1, 1]} : vector<32x25xf32> to vector<2x25xf32>
    %c0_129 = arith.constant 0 : index
    %c300_130 = arith.constant 300 : index
    %159 = vector.load %arg13[%c0_129, %c300_130] : memref<2x401xf32, #tpu.memory_space<vmem>>, vector<2x25xf32>
    tpu.vector_store %arg13[%c0_129, %c300_130], %158 {strides = array<i32>} : memref<2x401xf32, #tpu.memory_space<vmem>>, vector<2x25xf32>,
    %160 = vector.extract_strided_slice %133 {offsets = [26, 0], sizes = [2, 25], strides = [1, 1]} : vector<32x25xf32> to vector<2x25xf32>
    %c0_131 = arith.constant 0 : index
    %c325 = arith.constant 325 : index
    %161 = vector.load %arg13[%c0_131, %c325] : memref<2x401xf32, #tpu.memory_space<vmem>>, vector<2x25xf32>
    tpu.vector_store %arg13[%c0_131, %c325], %160 {strides = array<i32>} : memref<2x401xf32, #tpu.memory_space<vmem>>, vector<2x25xf32>,
    %162 = vector.extract_strided_slice %133 {offsets = [28, 0], sizes = [2, 25], strides = [1, 1]} : vector<32x25xf32> to vector<2x25xf32>
    %c0_132 = arith.constant 0 : index
    %c350 = arith.constant 350 : index
    %163 = vector.load %arg13[%c0_132, %c350] : memref<2x401xf32, #tpu.memory_space<vmem>>, vector<2x25xf32>
    tpu.vector_store %arg13[%c0_132, %c350], %162 {strides = array<i32>} : memref<2x401xf32, #tpu.memory_space<vmem>>, vector<2x25xf32>,
    %164 = vector.extract_strided_slice %133 {offsets = [30, 0], sizes = [2, 25], strides = [1, 1]} : vector<32x25xf32> to vector<2x25xf32>
    %c0_133 = arith.constant 0 : index
    %c375 = arith.constant 375 : index
    %165 = vector.load %arg13[%c0_133, %c375] : memref<2x401xf32, #tpu.memory_space<vmem>>, vector<2x25xf32>
    tpu.vector_store %arg13[%c0_133, %c375], %164 {strides = array<i32>} : memref<2x401xf32, #tpu.memory_space<vmem>>, vector<2x25xf32>,
    %cst_134 = arith.constant 1.000000e+00 : f32
    %166 = vector.broadcast %cst_134 : f32 to vector<2x1xf32>
    %c0_135 = arith.constant 0 : index
    %c400 = arith.constant 400 : index
    %167 = vector.load %arg13[%c0_135, %c400] : memref<2x401xf32, #tpu.memory_space<vmem>>, vector<2x1xf32>
    tpu.vector_store %arg13[%c0_135, %c400], %166 {strides = array<i32>} : memref<2x401xf32, #tpu.memory_space<vmem>>, vector<2x1xf32>,
    %c0_136 = arith.constant 0 : index
    %c0_137 = arith.constant 0 : index
    %168 = vector.load %arg13[%c0_136, %c0_137] : memref<2x401xf32, #tpu.memory_space<vmem>>, vector<2x401xf32>
    %169 = arith.truncf %168 : vector<2x401xf32> to vector<2x401xbf16>
    %c0_138 = arith.constant 0 : index
    %c0_139 = arith.constant 0 : index
    %170 = vector.load %arg6[%c0_138, %c0_139] : memref<401x120xbf16, #tpu.memory_space<vmem>>, vector<401x120xbf16>
    %cst_140 = arith.constant dense<0.000000e+00> : vector<2x120xf32>
    %171 = tpu.matmul %169, %170, %cst_140 {dimension_numbers = #tpu.dot_dimension_numbers<[1], [0], [0], [1], [0, 0, 1, 1], [], []>} : vector<2x401xbf16>, vector<401x120xbf16>, vector<2x120xf32> -> vector<2x120xf32>
    %cst_141 = arith.constant 0.000000e+00 : f32
    %172 = vector.broadcast %cst_141 : f32 to vector<2x120xf32>
    %173 = arith.maximumf %171, %172 : vector<2x120xf32>
    %174 = arith.truncf %173 : vector<2x120xf32> to vector<2x120xbf16>
    %c0_142 = arith.constant 0 : index
    %c0_143 = arith.constant 0 : index
    %175 = vector.load %arg7[%c0_142, %c0_143] : memref<120x84xbf16, #tpu.memory_space<vmem>>, vector<120x84xbf16>
    %cst_144 = arith.constant dense<0.000000e+00> : vector<2x84xf32>
    %176 = tpu.matmul %174, %175, %cst_144 {dimension_numbers = #tpu.dot_dimension_numbers<[1], [0], [0], [1], [0, 0, 1, 1], [], []>} : vector<2x120xbf16>, vector<120x84xbf16>, vector<2x84xf32> -> vector<2x84xf32>
    %c0_145 = arith.constant 0 : index
    %c0_146 = arith.constant 0 : index
    %177 = vector.load %arg9[%c0_145, %c0_146] : memref<1x94xf32, #tpu.memory_space<vmem>>, vector<1x84xf32>
    %178 = vector.broadcast %177 : vector<1x84xf32> to vector<2x84xf32>
    %179 = arith.addf %176, %178 : vector<2x84xf32>
    %cst_147 = arith.constant 0.000000e+00 : f32
    %180 = vector.broadcast %cst_147 : f32 to vector<2x84xf32>
    %181 = arith.maximumf %179, %180 : vector<2x84xf32>
    %182 = arith.truncf %181 : vector<2x84xf32> to vector<2x84xbf16>
    %c0_148 = arith.constant 0 : index
    %c0_149 = arith.constant 0 : index
    %183 = vector.load %arg8[%c0_148, %c0_149] : memref<84x10xbf16, #tpu.memory_space<vmem>>, vector<84x10xbf16>
    %cst_150 = arith.constant dense<0.000000e+00> : vector<2x10xf32>
    %184 = tpu.matmul %182, %183, %cst_150 {dimension_numbers = #tpu.dot_dimension_numbers<[1], [0], [0], [1], [0, 0, 1, 1], [], []>} : vector<2x84xbf16>, vector<84x10xbf16>, vector<2x10xf32> -> vector<2x10xf32>
    %c0_151 = arith.constant 0 : index
    %c84_152 = arith.constant 84 : index
    %185 = vector.load %arg9[%c0_151, %c84_152] : memref<1x94xf32, #tpu.memory_space<vmem>>, vector<1x10xf32>
    %186 = vector.broadcast %185 : vector<1x10xf32> to vector<2x10xf32>
    %187 = arith.addf %184, %186 : vector<2x10xf32>
    %c0_153 = arith.constant 0 : index
    %c0_154 = arith.constant 0 : index
    %188 = vector.load %arg10[%c0_153, %c0_154] : memref<2x10xf32, #tpu.memory_space<vmem>>, vector<2x10xf32>
    tpu.vector_store %arg10[%c0_153, %c0_154], %187 {strides = array<i32>} : memref<2x10xf32, #tpu.memory_space<vmem>>, vector<2x10xf32>,
    return
  }
  func.func @transform_0(%arg0: i32) -> (i32, i32) {
    %c0_i32 = arith.constant 0 : i32
    %c0_i32_0 = arith.constant 0 : i32
    %c0_i32_1 = arith.constant 0 : i32
    return %c0_i32, %c0_i32_0 : i32, i32
  }
  func.func @transform_1(%arg0: i32) -> (i32, i32) {
    %c0_i32 = arith.constant 0 : i32
    %c0_i32_0 = arith.constant 0 : i32
    %c0_i32_1 = arith.constant 0 : i32
    return %c0_i32, %c0_i32_0 : i32, i32
  }
  func.func @transform_2(%arg0: i32) -> (i32, i32) {
    %c0_i32 = arith.constant 0 : i32
    %c0_i32_0 = arith.constant 0 : i32
    %c0_i32_1 = arith.constant 0 : i32
    return %c0_i32, %c0_i32_0 : i32, i32
  }
  func.func @transform_3(%arg0: i32) -> (i32, i32) {
    %c0_i32 = arith.constant 0 : i32
    %c0_i32_0 = arith.constant 0 : i32
    %c0_i32_1 = arith.constant 0 : i32
    return %c0_i32, %c0_i32_0 : i32, i32
  }
  func.func @transform_4(%arg0: i32) -> (i32, i32) {
    %c0_i32 = arith.constant 0 : i32
    %c0_i32_0 = arith.constant 0 : i32
    %c0_i32_1 = arith.constant 0 : i32
    return %c0_i32, %c0_i32_0 : i32, i32
  }
  func.func @transform_5(%arg0: i32) -> (i32, i32) {
    %c0_i32 = arith.constant 0 : i32
    %c0_i32_0 = arith.constant 0 : i32
    %c0_i32_1 = arith.constant 0 : i32
    return %c0_i32, %c0_i32_0 : i32, i32
  }
  func.func @transform_6(%arg0: i32) -> (i32, i32) {
    %c0_i32 = arith.constant 0 : i32
    %c0_i32_0 = arith.constant 0 : i32
    %c0_i32_1 = arith.constant 0 : i32
    return %c0_i32, %c0_i32_0 : i32, i32
  }
  func.func @transform_7(%arg0: i32) -> (i32, i32) {
    %c0_i32 = arith.constant 0 : i32
    %c0_i32_0 = arith.constant 0 : i32
    %c0_i32_1 = arith.constant 0 : i32
    return %c0_i32, %c0_i32_0 : i32, i32
  }
  func.func @transform_8(%arg0: i32) -> (i32, i32) {
    %c0_i32 = arith.constant 0 : i32
    %c0_i32_0 = arith.constant 0 : i32
    %c0_i32_1 = arith.constant 0 : i32
    return %c0_i32, %c0_i32_0 : i32, i32
  }
  func.func @transform_9(%arg0: i32) -> (i32, i32) {
    %c0_i32 = arith.constant 0 : i32
    %c0_i32_0 = arith.constant 0 : i32
    %c0_i32_1 = arith.constant 0 : i32
    return %c0_i32, %c0_i32_0 : i32, i32
  }
}

</mosaic_0001>

<llo_original>
// kernel: forward.1
$region0: #{forward.1}
  #allocation0 [shape = 'u32[]', space=smem, size = 0x4, offset = 0x4, fixed_abs, tag = 'smem constant byte address 0x4 - core index']
  #allocation1 [shape = 'u32[144,128]{1,0:T(1,128)}', space=vmem, size = 0x12000, scoped, tag = 'internal scratch']
  #allocation2 [shape = 'f32[151,892]{1,0:T(8,128)}', space=vmem, size = 0x85000, scoped, tag = 'scratch operand']
  #allocation3 [shape = 'f32[301,136]{1,0:T(8,128)}', space=vmem, size = 0x4c000, scoped, tag = 'scratch operand']
  #allocation4 [shape = 'f32[2,401]{1,0:T(2,128)}', space=vmem, size = 0x1000, scoped, tag = 'scratch operand']
  %s0 = inlined_call_operand.vmem [shape: f32[6,1024], index: 0, kind: input, shape index: {}]
  %s1 = inlined_call_operand.vmem [shape: bf16[12,151], index: 1, kind: input, shape index: {}]
  %s2 = inlined_call_operand.vmem [shape: bf16[859,196], index: 2, kind: input, shape index: {}]
  %s3 = inlined_call_operand.vmem [shape: bf16[32,301], index: 3, kind: input, shape index: {}]
  %s4 = inlined_call_operand.vmem [shape: bf16[121,25], index: 4, kind: input, shape index: {}]
  %s5 = inlined_call_operand.vmem [shape: bf16[401,120], index: 5, kind: input, shape index: {}]
  %s6 = inlined_call_operand.vmem [shape: bf16[120,84], index: 6, kind: input, shape index: {}]
  %s7 = inlined_call_operand.vmem [shape: bf16[84,10], index: 7, kind: input, shape index: {}]
  %s8 = inlined_call_operand.vmem [shape: f32[1,94], index: 8, kind: input, shape index: {}]
  %s9 = inlined_call_operand.hbm [shape: f32[2,10], index: 9, kind: output, shape index: {}]
  %s10 = sld [smem:[#allocation0]]
  $region46: #{forward.1} parent=0
    _
  %s12 = ssub.s32 1, %s10
  %s13 = scalar_select 0, %s12, %s10
  $region1: #{forward.1} parent=0
    #allocation5 [shape = 'u8[1024]{0}', space=vmem, size = 0x400, scoped, tag = 'output window, operand 0, single buffered']
    #allocation6 [shape = 's32[1]{0}', space=sflag, size = 0x4, scoped, tag = 'scoped memory for forward.1']
    %14 = vsyncpa [#allocation6], 0
    // Predicated region
    $region2: #{forward.1} parent=1 // pred_check
      _
    $region3: #{forward.1} parent=1 // pred_check_branch
      %16 = sbr.rel (0) target = $region5
    $region4: #{forward.1} parent=1 // pred_region
      _
    $region5: #{forward.1} parent=1 // pred_fallthru
      _
    // Predicated region
    $region6: #{forward.1} parent=1 // pred_check
      _
    $region7: #{forward.1} parent=1 // pred_check_branch
      %18 = sbr.rel (0) target = $region9
    $region8: #{forward.1} parent=1 // pred_region
      _
    $region9: #{forward.1} parent=1 // pred_fallthru
      _
    // Predicated region
    $region10: #{forward.1} parent=1 // pred_check
      _
    $region11: #{forward.1} parent=1 // pred_check_branch
      %20 = sbr.rel (0) target = $region13
    $region12: #{forward.1} parent=1 // pred_region
      _
    $region13: #{forward.1} parent=1 // pred_fallthru
      _
    // Predicated region
    $region14: #{forward.1} parent=1 // pred_check
      _
    $region15: #{forward.1} parent=1 // pred_check_branch
      %22 = sbr.rel (0) target = $region17
    $region16: #{forward.1} parent=1 // pred_region
      _
    $region17: #{forward.1} parent=1 // pred_fallthru
      _
    // Predicated region
    $region18: #{forward.1} parent=1 // pred_check
      _
    $region19: #{forward.1} parent=1 // pred_check_branch
      %24 = sbr.rel (0) target = $region21
    $region20: #{forward.1} parent=1 // pred_region
      _
    $region21: #{forward.1} parent=1 // pred_fallthru
      _
    // Predicated region
    $region22: #{forward.1} parent=1 // pred_check
      _
    $region23: #{forward.1} parent=1 // pred_check_branch
      %26 = sbr.rel (0) target = $region25
    $region24: #{forward.1} parent=1 // pred_region
      _
    $region25: #{forward.1} parent=1 // pred_fallthru
      _
    // Predicated region
    $region26: #{forward.1} parent=1 // pred_check
      _
    $region27: #{forward.1} parent=1 // pred_check_branch
      %28 = sbr.rel (0) target = $region29
    $region28: #{forward.1} parent=1 // pred_region
      _
    $region29: #{forward.1} parent=1 // pred_fallthru
      _
    // Predicated region
    $region30: #{forward.1} parent=1 // pred_check
      _
    $region31: #{forward.1} parent=1 // pred_check_branch
      %30 = sbr.rel (0) target = $region33
    $region32: #{forward.1} parent=1 // pred_region
      _
    $region33: #{forward.1} parent=1 // pred_fallthru
      _
    // Predicated region
    $region34: #{forward.1} parent=1 // pred_check
      _
    $region35: #{forward.1} parent=1 // pred_check_branch
      %32 = sbr.rel (0) target = $region37
    $region36: #{forward.1} parent=1 // pred_region
      _
    $region37: #{forward.1} parent=1 // pred_fallthru
      _
    %v34 = vld [vmem:[%s0] sm:$0x3f]
    %v35 = vld [vmem:[%s0 + $0x8] sm:$0x3f]
    %v36 = vld [vmem:[%s0 + $0x10] sm:$0x3f]
    %v37 = vld [vmem:[%s0 + $0x18] sm:$0x3f]
    %v38 = vld [vmem:[%s0 + $0x20] sm:$0x3f]
    %v39 = vld [vmem:[%s0 + $0x28] sm:$0x3f]
    %v40 = vld [vmem:[%s0 + $0x30] sm:$0x3f]
    %41 = vst [vmem:[#allocation2] sm:$0x3f] %v34
    %42 = vst [vmem:[#allocation2 + $0x8] sm:$0x3f] %v35
    %43 = vst [vmem:[#allocation2 + $0x10] sm:$0x3f] %v36
    %44 = vst [vmem:[#allocation2 + $0x18] sm:$0x3f] %v37
    %45 = vst [vmem:[#allocation2 + $0x20] sm:$0x3f] %v38
    %46 = vst [vmem:[#allocation2 + $0x28] sm:$0x3f] %v39
    %vm47 = vcmask 1012736
    %48 = vst.msk [vmem:[#allocation2 + $0x30] sm:$0x3f] %vm47, %v40
    %v49 = vld [vmem:[%s0] sm:$0x3f]
    %v50 = vld [vmem:[%s0 + $0x8] sm:$0x3f]
    %v51 = vld [vmem:[%s0 + $0x10] sm:$0x3f]
    %v52 = vld [vmem:[%s0 + $0x18] sm:$0x3f]
    %v53 = vld [vmem:[%s0 + $0x20] sm:$0x3f]
    %v54 = vld [vmem:[%s0 + $0x28] sm:$0x3f]
    %v55 = vld [vmem:[%s0 + $0x30] sm:$0x3f]
    %v63 = vrot.slane %v49, 2
    %v64 = vrot.slane %v50, 2
    %v65 = vrot.slane %v51, 2
    %v66 = vrot.slane %v52, 2
    %v67 = vrot.slane %v53, 2
    %v68 = vrot.slane %v54, 2
    %v69 = vrot.slane %v55, 2
    %70 = vrot.lane.b32.xlu0 %v63, 127
    %v71 = vpop.permute.xlu0 %70
    %72 = vrot.lane.b32.xlu0 %v64, 127
    %v73 = vpop.permute.xlu0 %72
    %74 = vrot.lane.b32.xlu0 %v65, 127
    %v75 = vpop.permute.xlu0 %74
    %76 = vrot.lane.b32.xlu0 %v66, 127
    %v77 = vpop.permute.xlu0 %76
    %78 = vrot.lane.b32.xlu0 %v67, 127
    %v79 = vpop.permute.xlu0 %78
    %80 = vrot.lane.b32.xlu0 %v68, 127
    %v81 = vpop.permute.xlu0 %80
    %82 = vrot.lane.b32.xlu0 %v69, 127
    %v83 = vpop.permute.xlu0 %82
    %vm84 = vcmask 1039360
    %v85 = vsel %vm84, %v71, %v73
    %v86 = vsel %vm84, %v73, %v75
    %v87 = vsel %vm84, %v75, %v77
    %v88 = vsel %vm84, %v77, %v79
    %v89 = vsel %vm84, %v79, %v81
    %v90 = vsel %vm84, %v81, %v83
    %98 = vst [vmem:[#allocation2] sm:$0xc0] %v85
    %99 = vst [vmem:[#allocation2 + $0x8] sm:$0xc0] %v86
    %100 = vst [vmem:[#allocation2 + $0x10] sm:$0xc0] %v87
    %101 = vst [vmem:[#allocation2 + $0x18] sm:$0xc0] %v88
    %102 = vst [vmem:[#allocation2 + $0x20] sm:$0xc0] %v89
    %103 = vst [vmem:[#allocation2 + $0x28] sm:$0xc0] %v90
    %vm104 = vcmask 1014790
    %105 = vst.msk [vmem:[#allocation2 + $0x30] sm:$0xc0] %vm104, %v83
    %106 = vst [vmem:[#allocation2 + $0x38] sm:$0xf] %v85
    %107 = vst [vmem:[#allocation2 + $0x40] sm:$0xf] %v86
    %108 = vst [vmem:[#allocation2 + $0x48] sm:$0xf] %v87
    %109 = vst [vmem:[#allocation2 + $0x50] sm:$0xf] %v88
    %110 = vst [vmem:[#allocation2 + $0x58] sm:$0xf] %v89
    %111 = vst [vmem:[#allocation2 + $0x60] sm:$0xf] %v90
    %vm112 = vcmask 1010688
    %113 = vst.msk [vmem:[#allocation2 + $0x68] sm:$0xf] %vm112, %v83
    %v114 = vld [vmem:[%s0] sm:$0x3f]
    %v115 = vld [vmem:[%s0 + $0x8] sm:$0x3f]
    %v116 = vld [vmem:[%s0 + $0x10] sm:$0x3f]
    %v117 = vld [vmem:[%s0 + $0x18] sm:$0x3f]
    %v118 = vld [vmem:[%s0 + $0x20] sm:$0x3f]
    %v119 = vld [vmem:[%s0 + $0x28] sm:$0x3f]
    %v120 = vld [vmem:[%s0 + $0x30] sm:$0x3f]
    %v128 = vrot.slane %v114, 4
    %v129 = vrot.slane %v115, 4
    %v130 = vrot.slane %v116, 4
    %v131 = vrot.slane %v117, 4
    %v132 = vrot.slane %v118, 4
    %v133 = vrot.slane %v119, 4
    %v134 = vrot.slane %v120, 4
    %135 = vrot.lane.b32.xlu0 %v128, 126
    %v136 = vpop.permute.xlu0 %135
    %137 = vrot.lane.b32.xlu0 %v129, 126
    %v138 = vpop.permute.xlu0 %137
    %139 = vrot.lane.b32.xlu0 %v130, 126
    %v140 = vpop.permute.xlu0 %139
    %141 = vrot.lane.b32.xlu0 %v131, 126
    %v142 = vpop.permute.xlu0 %141
    %143 = vrot.lane.b32.xlu0 %v132, 126
    %v144 = vpop.permute.xlu0 %143
    %145 = vrot.lane.b32.xlu0 %v133, 126
    %v146 = vpop.permute.xlu0 %145
    %147 = vrot.lane.b32.xlu0 %v134, 126
    %v148 = vpop.permute.xlu0 %147
    %vm149 = vcmask 1031168
    %v150 = vsel %vm149, %v136, %v138
    %v151 = vsel %vm149, %v138, %v140
    %v152 = vsel %vm149, %v140, %v142
    %v153 = vsel %vm149, %v142, %v144
    %v154 = vsel %vm149, %v144, %v146
    %v155 = vsel %vm149, %v146, %v148
    %163 = vst [vmem:[#allocation2 + $0x38] sm:$0xf0] %v150
    %164 = vst [vmem:[#allocation2 + $0x40] sm:$0xf0] %v151
    %165 = vst [vmem:[#allocation2 + $0x48] sm:$0xf0] %v152
    %166 = vst [vmem:[#allocation2 + $0x50] sm:$0xf0] %v153
    %167 = vst [vmem:[#allocation2 + $0x58] sm:$0xf0] %v154
    %168 = vst [vmem:[#allocation2 + $0x60] sm:$0xf0] %v155
    %vm169 = vcmask 1014788
    %170 = vst.msk [vmem:[#allocation2 + $0x68] sm:$0xf0] %vm169, %v148
    %171 = vst [vmem:[#allocation2 + $0x70] sm:$0x3] %v150
    %172 = vst [vmem:[#allocation2 + $0x78] sm:$0x3] %v151
    %173 = vst [vmem:[#allocation2 + $0x80] sm:$0x3] %v152
    %174 = vst [vmem:[#allocation2 + $0x88] sm:$0x3] %v153
    %175 = vst [vmem:[#allocation2 + $0x90] sm:$0x3] %v154
    %176 = vst [vmem:[#allocation2 + $0x98] sm:$0x3] %v155
    %vm177 = vcmask 1008640
    %178 = vst.msk [vmem:[#allocation2 + $0xa0] sm:$0x3] %vm177, %v148
    %v179 = vld [vmem:[%s0] sm:$0x3f]
    %v180 = vld [vmem:[%s0 + $0x8] sm:$0x3f]
    %v181 = vld [vmem:[%s0 + $0x10] sm:$0x3f]
    %v182 = vld [vmem:[%s0 + $0x18] sm:$0x3f]
    %v183 = vld [vmem:[%s0 + $0x20] sm:$0x3f]
    %v184 = vld [vmem:[%s0 + $0x28] sm:$0x3f]
    %v185 = vld [vmem:[%s0 + $0x30] sm:$0x3f]
    %v193 = vrot.slane %v179, 6
    %v194 = vrot.slane %v180, 6
    %v195 = vrot.slane %v181, 6
    %v196 = vrot.slane %v182, 6
    %v197 = vrot.slane %v183, 6
    %v198 = vrot.slane %v184, 6
    %v199 = vrot.slane %v185, 6
    %200 = vrot.lane.b32.xlu0 %v193, 125
    %v201 = vpop.permute.xlu0 %200
    %202 = vrot.lane.b32.xlu0 %v194, 125
    %v203 = vpop.permute.xlu0 %202
    %204 = vrot.lane.b32.xlu0 %v195, 125
    %v205 = vpop.permute.xlu0 %204
    %206 = vrot.lane.b32.xlu0 %v196, 125
    %v207 = vpop.permute.xlu0 %206
    %208 = vrot.lane.b32.xlu0 %v197, 125
    %v209 = vpop.permute.xlu0 %208
    %210 = vrot.lane.b32.xlu0 %v198, 125
    %v211 = vpop.permute.xlu0 %210
    %212 = vrot.lane.b32.xlu0 %v199, 125
    %v213 = vpop.permute.xlu0 %212
    %vm214 = vcmask 1022976
    %v215 = vsel %vm214, %v201, %v203
    %v216 = vsel %vm214, %v203, %v205
    %v217 = vsel %vm214, %v205, %v207
    %v218 = vsel %vm214, %v207, %v209
    %v219 = vsel %vm214, %v209, %v211
    %v220 = vsel %vm214, %v211, %v213
    %228 = vst [vmem:[#allocation2 + $0x70] sm:$0xfc] %v215
    %229 = vst [vmem:[#allocation2 + $0x78] sm:$0xfc] %v216
    %230 = vst [vmem:[#allocation2 + $0x80] sm:$0xfc] %v217
    %231 = vst [vmem:[#allocation2 + $0x88] sm:$0xfc] %v218
    %232 = vst [vmem:[#allocation2 + $0x90] sm:$0xfc] %v219
    %233 = vst [vmem:[#allocation2 + $0x98] sm:$0xfc] %v220
    %vm234 = vcmask 1014786
    %235 = vst.msk [vmem:[#allocation2 + $0xa0] sm:$0xfc] %vm234, %v213
    %v236 = vld [vmem:[%s0] sm:$0x3f]
    %v237 = vld [vmem:[%s0 + $0x8] sm:$0x3f]
    %v238 = vld [vmem:[%s0 + $0x10] sm:$0x3f]
    %v239 = vld [vmem:[%s0 + $0x18] sm:$0x3f]
    %v240 = vld [vmem:[%s0 + $0x20] sm:$0x3f]
    %v241 = vld [vmem:[%s0 + $0x28] sm:$0x3f]
    %v242 = vld [vmem:[%s0 + $0x30] sm:$0x3f]
    %250 = vrot.lane.b32.xlu0 %v236, 124
    %v251 = vpop.permute.xlu0 %250
    %252 = vrot.lane.b32.xlu0 %v237, 124
    %v253 = vpop.permute.xlu0 %252
    %254 = vrot.lane.b32.xlu0 %v238, 124
    %v255 = vpop.permute.xlu0 %254
    %256 = vrot.lane.b32.xlu0 %v239, 124
    %v257 = vpop.permute.xlu0 %256
    %258 = vrot.lane.b32.xlu0 %v240, 124
    %v259 = vpop.permute.xlu0 %258
    %260 = vrot.lane.b32.xlu0 %v241, 124
    %v261 = vpop.permute.xlu0 %260
    %262 = vrot.lane.b32.xlu0 %v242, 124
    %v263 = vpop.permute.xlu0 %262
    %vm264 = vcmask 1014784
    %v265 = vsel %vm264, %v251, %v253
    %v266 = vsel %vm264, %v253, %v255
    %v267 = vsel %vm264, %v255, %v257
    %v268 = vsel %vm264, %v257, %v259
    %v269 = vsel %vm264, %v259, %v261
    %v270 = vsel %vm264, %v261, %v263
    %278 = vst [vmem:[#allocation2 + $0xa8] sm:$0x3f] %v265
    %279 = vst [vmem:[#allocation2 + $0xb0] sm:$0x3f] %v266
    %280 = vst [vmem:[#allocation2 + $0xb8] sm:$0x3f] %v267
    %281 = vst [vmem:[#allocation2 + $0xc0] sm:$0x3f] %v268
    %282 = vst [vmem:[#allocation2 + $0xc8] sm:$0x3f] %v269
    %283 = vst [vmem:[#allocation2 + $0xd0] sm:$0x3f] %v270
    %284 = vst.msk [vmem:[#allocation2 + $0xd8] sm:$0x3f] %vm47, %v263
    %v285 = vld [vmem:[%s0] sm:$0x3f]
    %v286 = vld [vmem:[%s0 + $0x8] sm:$0x3f]
    %v287 = vld [vmem:[%s0 + $0x10] sm:$0x3f]
    %v288 = vld [vmem:[%s0 + $0x18] sm:$0x3f]
    %v289 = vld [vmem:[%s0 + $0x20] sm:$0x3f]
    %v290 = vld [vmem:[%s0 + $0x28] sm:$0x3f]
    %v291 = vld [vmem:[%s0 + $0x30] sm:$0x3f]
    %v292 = vld [vmem:[%s0 + $0x38] sm:$0x3f]
    %v301 = vrot.slane %v285, 2
    %v302 = vrot.slane %v286, 2
    %v303 = vrot.slane %v287, 2
    %v304 = vrot.slane %v288, 2
    %v305 = vrot.slane %v289, 2
    %v306 = vrot.slane %v290, 2
    %v307 = vrot.slane %v291, 2
    %v308 = vrot.slane %v292, 2
    %309 = vrot.lane.b32.xlu0 %v301, 96
    %v310 = vpop.permute.xlu0 %309
    %311 = vrot.lane.b32.xlu0 %v302, 96
    %v312 = vpop.permute.xlu0 %311
    %313 = vrot.lane.b32.xlu0 %v303, 96
    %v314 = vpop.permute.xlu0 %313
    %315 = vrot.lane.b32.xlu0 %v304, 96
    %v316 = vpop.permute.xlu0 %315
    %317 = vrot.lane.b32.xlu0 %v305, 96
    %v318 = vpop.permute.xlu0 %317
    %319 = vrot.lane.b32.xlu0 %v306, 96
    %v320 = vpop.permute.xlu0 %319
    %321 = vrot.lane.b32.xlu0 %v307, 96
    %v322 = vpop.permute.xlu0 %321
    %323 = vrot.lane.b32.xlu0 %v308, 96
    %v324 = vpop.permute.xlu0 %323
    %vm325 = vcmask 785408
    %v326 = vsel %vm325, %v310, %v312
    %v327 = vsel %vm325, %v312, %v314
    %v328 = vsel %vm325, %v314, %v316
    %v329 = vsel %vm325, %v316, %v318
    %v330 = vsel %vm325, %v318, %v320
    %v331 = vsel %vm325, %v320, %v322
    %v332 = vsel %vm325, %v322, %v324
    %340 = vst [vmem:[#allocation2 + $0xa8] sm:$0xc0] %v326
    %341 = vst [vmem:[#allocation2 + $0xb0] sm:$0xc0] %v327
    %342 = vst [vmem:[#allocation2 + $0xb8] sm:$0xc0] %v328
    %343 = vst [vmem:[#allocation2 + $0xc0] sm:$0xc0] %v329
    %344 = vst [vmem:[#allocation2 + $0xc8] sm:$0xc0] %v330
    %345 = vst [vmem:[#allocation2 + $0xd0] sm:$0xc0] %v331
    %346 = vst.msk [vmem:[#allocation2 + $0xd8] sm:$0xc0] %vm104, %v332
    %347 = vst [vmem:[#allocation2 + $0xe0] sm:$0xf] %v326
    %348 = vst [vmem:[#allocation2 + $0xe8] sm:$0xf] %v327
    %349 = vst [vmem:[#allocation2 + $0xf0] sm:$0xf] %v328
    %350 = vst [vmem:[#allocation2 + $0xf8] sm:$0xf] %v329
    %351 = vst [vmem:[#allocation2 + $0x100] sm:$0xf] %v330
    %352 = vst [vmem:[#allocation2 + $0x108] sm:$0xf] %v331
    %353 = vst.msk [vmem:[#allocation2 + $0x110] sm:$0xf] %vm112, %v332
    %v354 = vld [vmem:[%s0] sm:$0x3f]
    %v355 = vld [vmem:[%s0 + $0x8] sm:$0x3f]
    %v356 = vld [vmem:[%s0 + $0x10] sm:$0x3f]
    %v357 = vld [vmem:[%s0 + $0x18] sm:$0x3f]
    %v358 = vld [vmem:[%s0 + $0x20] sm:$0x3f]
    %v359 = vld [vmem:[%s0 + $0x28] sm:$0x3f]
    %v360 = vld [vmem:[%s0 + $0x30] sm:$0x3f]
    %v361 = vld [vmem:[%s0 + $0x38] sm:$0x3f]
    %v370 = vrot.slane %v354, 4
    %v371 = vrot.slane %v355, 4
    %v372 = vrot.slane %v356, 4
    %v373 = vrot.slane %v357, 4
    %v374 = vrot.slane %v358, 4
    %v375 = vrot.slane %v359, 4
    %v376 = vrot.slane %v360, 4
    %v377 = vrot.slane %v361, 4
    %378 = vrot.lane.b32.xlu0 %v370, 95
    %v379 = vpop.permute.xlu0 %378
    %380 = vrot.lane.b32.xlu0 %v371, 95
    %v381 = vpop.permute.xlu0 %380
    %382 = vrot.lane.b32.xlu0 %v372, 95
    %v383 = vpop.permute.xlu0 %382
    %384 = vrot.lane.b32.xlu0 %v373, 95
    %v385 = vpop.permute.xlu0 %384
    %386 = vrot.lane.b32.xlu0 %v374, 95
    %v387 = vpop.permute.xlu0 %386
    %388 = vrot.lane.b32.xlu0 %v375, 95
    %v389 = vpop.permute.xlu0 %388
    %390 = vrot.lane.b32.xlu0 %v376, 95
    %v391 = vpop.permute.xlu0 %390
    %392 = vrot.lane.b32.xlu0 %v377, 95
    %v393 = vpop.permute.xlu0 %392
    %vm394 = vcmask 777216
    %v395 = vsel %vm394, %v379, %v381
    %v396 = vsel %vm394, %v381, %v383
    %v397 = vsel %vm394, %v383, %v385
    %v398 = vsel %vm394, %v385, %v387
    %v399 = vsel %vm394, %v387, %v389
    %v400 = vsel %vm394, %v389, %v391
    %v401 = vsel %vm394, %v391, %v393
    %409 = vst [vmem:[#allocation2 + $0xe0] sm:$0xf0] %v395
    %410 = vst [vmem:[#allocation2 + $0xe8] sm:$0xf0] %v396
    %411 = vst [vmem:[#allocation2 + $0xf0] sm:$0xf0] %v397
    %412 = vst [vmem:[#allocation2 + $0xf8] sm:$0xf0] %v398
    %413 = vst [vmem:[#allocation2 + $0x100] sm:$0xf0] %v399
    %414 = vst [vmem:[#allocation2 + $0x108] sm:$0xf0] %v400
    %415 = vst.msk [vmem:[#allocation2 + $0x110] sm:$0xf0] %vm169, %v401
    %416 = vst [vmem:[#allocation2 + $0x118] sm:$0x3] %v395
    %417 = vst [vmem:[#allocation2 + $0x120] sm:$0x3] %v396
    %418 = vst [vmem:[#allocation2 + $0x128] sm:$0x3] %v397
    %419 = vst [vmem:[#allocation2 + $0x130] sm:$0x3] %v398
    %420 = vst [vmem:[#allocation2 + $0x138] sm:$0x3] %v399
    %421 = vst [vmem:[#allocation2 + $0x140] sm:$0x3] %v400
    %422 = vst.msk [vmem:[#allocation2 + $0x148] sm:$0x3] %vm177, %v401
    %v423 = vld [vmem:[%s0] sm:$0x3f]
    %v424 = vld [vmem:[%s0 + $0x8] sm:$0x3f]
    %v425 = vld [vmem:[%s0 + $0x10] sm:$0x3f]
    %v426 = vld [vmem:[%s0 + $0x18] sm:$0x3f]
    %v427 = vld [vmem:[%s0 + $0x20] sm:$0x3f]
    %v428 = vld [vmem:[%s0 + $0x28] sm:$0x3f]
    %v429 = vld [vmem:[%s0 + $0x30] sm:$0x3f]
    %v430 = vld [vmem:[%s0 + $0x38] sm:$0x3f]
    %v439 = vrot.slane %v423, 6
    %v440 = vrot.slane %v424, 6
    %v441 = vrot.slane %v425, 6
    %v442 = vrot.slane %v426, 6
    %v443 = vrot.slane %v427, 6
    %v444 = vrot.slane %v428, 6
    %v445 = vrot.slane %v429, 6
    %v446 = vrot.slane %v430, 6
    %447 = vrot.lane.b32.xlu0 %v439, 94
    %v448 = vpop.permute.xlu0 %447
    %449 = vrot.lane.b32.xlu0 %v440, 94
    %v450 = vpop.permute.xlu0 %449
    %451 = vrot.lane.b32.xlu0 %v441, 94
    %v452 = vpop.permute.xlu0 %451
    %453 = vrot.lane.b32.xlu0 %v442, 94
    %v454 = vpop.permute.xlu0 %453
    %455 = vrot.lane.b32.xlu0 %v443, 94
    %v456 = vpop.permute.xlu0 %455
    %457 = vrot.lane.b32.xlu0 %v444, 94
    %v458 = vpop.permute.xlu0 %457
    %459 = vrot.lane.b32.xlu0 %v445, 94
    %v460 = vpop.permute.xlu0 %459
    %461 = vrot.lane.b32.xlu0 %v446, 94
    %v462 = vpop.permute.xlu0 %461
    %vm463 = vcmask 769024
    %v464 = vsel %vm463, %v448, %v450
    %v465 = vsel %vm463, %v450, %v452
    %v466 = vsel %vm463, %v452, %v454
    %v467 = vsel %vm463, %v454, %v456
    %v468 = vsel %vm463, %v456, %v458
    %v469 = vsel %vm463, %v458, %v460
    %v470 = vsel %vm463, %v460, %v462
    %478 = vst [vmem:[#allocation2 + $0x118] sm:$0xfc] %v464
    %479 = vst [vmem:[#allocation2 + $0x120] sm:$0xfc] %v465
    %480 = vst [vmem:[#allocation2 + $0x128] sm:$0xfc] %v466
    %481 = vst [vmem:[#allocation2 + $0x130] sm:$0xfc] %v467
    %482 = vst [vmem:[#allocation2 + $0x138] sm:$0xfc] %v468
    %483 = vst [vmem:[#allocation2 + $0x140] sm:$0xfc] %v469
    %484 = vst.msk [vmem:[#allocation2 + $0x148] sm:$0xfc] %vm234, %v470
    %v485 = vld [vmem:[%s0] sm:$0x3f]
    %v486 = vld [vmem:[%s0 + $0x8] sm:$0x3f]
    %v487 = vld [vmem:[%s0 + $0x10] sm:$0x3f]
    %v488 = vld [vmem:[%s0 + $0x18] sm:$0x3f]
    %v489 = vld [vmem:[%s0 + $0x20] sm:$0x3f]
    %v490 = vld [vmem:[%s0 + $0x28] sm:$0x3f]
    %v491 = vld [vmem:[%s0 + $0x30] sm:$0x3f]
    %v492 = vld [vmem:[%s0 + $0x38] sm:$0x3f]
    %501 = vrot.lane.b32.xlu0 %v485, 93
    %v502 = vpop.permute.xlu0 %501
    %503 = vrot.lane.b32.xlu0 %v486, 93
    %v504 = vpop.permute.xlu0 %503
    %505 = vrot.lane.b32.xlu0 %v487, 93
    %v506 = vpop.permute.xlu0 %505
    %507 = vrot.lane.b32.xlu0 %v488, 93
    %v508 = vpop.permute.xlu0 %507
    %509 = vrot.lane.b32.xlu0 %v489, 93
    %v510 = vpop.permute.xlu0 %509
    %511 = vrot.lane.b32.xlu0 %v490, 93
    %v512 = vpop.permute.xlu0 %511
    %513 = vrot.lane.b32.xlu0 %v491, 93
    %v514 = vpop.permute.xlu0 %513
    %515 = vrot.lane.b32.xlu0 %v492, 93
    %v516 = vpop.permute.xlu0 %515
    %vm517 = vcmask 760832
    %v518 = vsel %vm517, %v502, %v504
    %v519 = vsel %vm517, %v504, %v506
    %v520 = vsel %vm517, %v506, %v508
    %v521 = vsel %vm517, %v508, %v510
    %v522 = vsel %vm517, %v510, %v512
    %v523 = vsel %vm517, %v512, %v514
    %v524 = vsel %vm517, %v514, %v516
    %532 = vst [vmem:[#allocation2 + $0x150] sm:$0x3f] %v518
    %533 = vst [vmem:[#allocation2 + $0x158] sm:$0x3f] %v519
    %534 = vst [vmem:[#allocation2 + $0x160] sm:$0x3f] %v520
    %535 = vst [vmem:[#allocation2 + $0x168] sm:$0x3f] %v521
    %536 = vst [vmem:[#allocation2 + $0x170] sm:$0x3f] %v522
    %537 = vst [vmem:[#allocation2 + $0x178] sm:$0x3f] %v523
    %538 = vst.msk [vmem:[#allocation2 + $0x180] sm:$0x3f] %vm47, %v524
    %v539 = vld [vmem:[%s0] sm:$0x3f]
    %v540 = vld [vmem:[%s0 + $0x8] sm:$0x3f]
    %v541 = vld [vmem:[%s0 + $0x10] sm:$0x3f]
    %v542 = vld [vmem:[%s0 + $0x18] sm:$0x3f]
    %v543 = vld [vmem:[%s0 + $0x20] sm:$0x3f]
    %v544 = vld [vmem:[%s0 + $0x28] sm:$0x3f]
    %v545 = vld [vmem:[%s0 + $0x30] sm:$0x3f]
    %v546 = vld [vmem:[%s0 + $0x38] sm:$0x3f]
    %v555 = vrot.slane %v539, 2
    %v556 = vrot.slane %v540, 2
    %v557 = vrot.slane %v541, 2
    %v558 = vrot.slane %v542, 2
    %v559 = vrot.slane %v543, 2
    %v560 = vrot.slane %v544, 2
    %v561 = vrot.slane %v545, 2
    %v562 = vrot.slane %v546, 2
    %563 = vrot.lane.b32.xlu0 %v555, 92
    %v564 = vpop.permute.xlu0 %563
    %565 = vrot.lane.b32.xlu0 %v556, 92
    %v566 = vpop.permute.xlu0 %565
    %567 = vrot.lane.b32.xlu0 %v557, 92
    %v568 = vpop.permute.xlu0 %567
    %569 = vrot.lane.b32.xlu0 %v558, 92
    %v570 = vpop.permute.xlu0 %569
    %571 = vrot.lane.b32.xlu0 %v559, 92
    %v572 = vpop.permute.xlu0 %571
    %573 = vrot.lane.b32.xlu0 %v560, 92
    %v574 = vpop.permute.xlu0 %573
    %575 = vrot.lane.b32.xlu0 %v561, 92
    %v576 = vpop.permute.xlu0 %575
    %577 = vrot.lane.b32.xlu0 %v562, 92
    %v578 = vpop.permute.xlu0 %577
    %vm579 = vcmask 752640
    %v580 = vsel %vm579, %v564, %v566
    %v581 = vsel %vm579, %v566, %v568
    %v582 = vsel %vm579, %v568, %v570
    %v583 = vsel %vm579, %v570, %v572
    %v584 = vsel %vm579, %v572, %v574
    %v585 = vsel %vm579, %v574, %v576
    %v586 = vsel %vm579, %v576, %v578
    %594 = vst [vmem:[#allocation2 + $0x150] sm:$0xc0] %v580
    %595 = vst [vmem:[#allocation2 + $0x158] sm:$0xc0] %v581
    %596 = vst [vmem:[#allocation2 + $0x160] sm:$0xc0] %v582
    %597 = vst [vmem:[#allocation2 + $0x168] sm:$0xc0] %v583
    %598 = vst [vmem:[#allocation2 + $0x170] sm:$0xc0] %v584
    %599 = vst [vmem:[#allocation2 + $0x178] sm:$0xc0] %v585
    %600 = vst.msk [vmem:[#allocation2 + $0x180] sm:$0xc0] %vm104, %v586
    %601 = vst [vmem:[#allocation2 + $0x188] sm:$0xf] %v580
    %602 = vst [vmem:[#allocation2 + $0x190] sm:$0xf] %v581
    %603 = vst [vmem:[#allocation2 + $0x198] sm:$0xf] %v582
    %604 = vst [vmem:[#allocation2 + $0x1a0] sm:$0xf] %v583
    %605 = vst [vmem:[#allocation2 + $0x1a8] sm:$0xf] %v584
    %606 = vst [vmem:[#allocation2 + $0x1b0] sm:$0xf] %v585
    %607 = vst.msk [vmem:[#allocation2 + $0x1b8] sm:$0xf] %vm112, %v586
    %v608 = vld [vmem:[%s0] sm:$0x3f]
    %v609 = vld [vmem:[%s0 + $0x8] sm:$0x3f]
    %v610 = vld [vmem:[%s0 + $0x10] sm:$0x3f]
    %v611 = vld [vmem:[%s0 + $0x18] sm:$0x3f]
    %v612 = vld [vmem:[%s0 + $0x20] sm:$0x3f]
    %v613 = vld [vmem:[%s0 + $0x28] sm:$0x3f]
    %v614 = vld [vmem:[%s0 + $0x30] sm:$0x3f]
    %v615 = vld [vmem:[%s0 + $0x38] sm:$0x3f]
    %v624 = vrot.slane %v608, 4
    %v625 = vrot.slane %v609, 4
    %v626 = vrot.slane %v610, 4
    %v627 = vrot.slane %v611, 4
    %v628 = vrot.slane %v612, 4
    %v629 = vrot.slane %v613, 4
    %v630 = vrot.slane %v614, 4
    %v631 = vrot.slane %v615, 4
    %632 = vrot.lane.b32.xlu0 %v624, 64
    %v633 = vpop.permute.xlu0 %632
    %634 = vrot.lane.b32.xlu0 %v625, 64
    %v635 = vpop.permute.xlu0 %634
    %636 = vrot.lane.b32.xlu0 %v626, 64
    %v637 = vpop.permute.xlu0 %636
    %638 = vrot.lane.b32.xlu0 %v627, 64
    %v639 = vpop.permute.xlu0 %638
    %640 = vrot.lane.b32.xlu0 %v628, 64
    %v641 = vpop.permute.xlu0 %640
    %642 = vrot.lane.b32.xlu0 %v629, 64
    %v643 = vpop.permute.xlu0 %642
    %644 = vrot.lane.b32.xlu0 %v630, 64
    %v645 = vpop.permute.xlu0 %644
    %646 = vrot.lane.b32.xlu0 %v631, 64
    %v647 = vpop.permute.xlu0 %646
    %vm648 = vcmask 523264
    %v649 = vsel %vm648, %v633, %v635
    %v650 = vsel %vm648, %v635, %v637
    %v651 = vsel %vm648, %v637, %v639
    %v652 = vsel %vm648, %v639, %v641
    %v653 = vsel %vm648, %v641, %v643
    %v654 = vsel %vm648, %v643, %v645
    %v655 = vsel %vm648, %v645, %v647
    %663 = vst [vmem:[#allocation2 + $0x188] sm:$0xf0] %v649
    %664 = vst [vmem:[#allocation2 + $0x190] sm:$0xf0] %v650
    %665 = vst [vmem:[#allocation2 + $0x198] sm:$0xf0] %v651
    %666 = vst [vmem:[#allocation2 + $0x1a0] sm:$0xf0] %v652
    %667 = vst [vmem:[#allocation2 + $0x1a8] sm:$0xf0] %v653
    %668 = vst [vmem:[#allocation2 + $0x1b0] sm:$0xf0] %v654
    %669 = vst.msk [vmem:[#allocation2 + $0x1b8] sm:$0xf0] %vm169, %v655
    %670 = vst [vmem:[#allocation2 + $0x1c0] sm:$0x3] %v649
    %671 = vst [vmem:[#allocation2 + $0x1c8] sm:$0x3] %v650
    %672 = vst [vmem:[#allocation2 + $0x1d0] sm:$0x3] %v651
    %673 = vst [vmem:[#allocation2 + $0x1d8] sm:$0x3] %v652
    %674 = vst [vmem:[#allocation2 + $0x1e0] sm:$0x3] %v653
    %675 = vst [vmem:[#allocation2 + $0x1e8] sm:$0x3] %v654
    %676 = vst.msk [vmem:[#allocation2 + $0x1f0] sm:$0x3] %vm177, %v655
    %v677 = vld [vmem:[%s0] sm:$0x3f]
    %v678 = vld [vmem:[%s0 + $0x8] sm:$0x3f]
    %v679 = vld [vmem:[%s0 + $0x10] sm:$0x3f]
    %v680 = vld [vmem:[%s0 + $0x18] sm:$0x3f]
    %v681 = vld [vmem:[%s0 + $0x20] sm:$0x3f]
    %v682 = vld [vmem:[%s0 + $0x28] sm:$0x3f]
    %v683 = vld [vmem:[%s0 + $0x30] sm:$0x3f]
    %v684 = vld [vmem:[%s0 + $0x38] sm:$0x3f]
    %v693 = vrot.slane %v677, 6
    %v694 = vrot.slane %v678, 6
    %v695 = vrot.slane %v679, 6
    %v696 = vrot.slane %v680, 6
    %v697 = vrot.slane %v681, 6
    %v698 = vrot.slane %v682, 6
    %v699 = vrot.slane %v683, 6
    %v700 = vrot.slane %v684, 6
    %701 = vrot.lane.b32.xlu0 %v693, 63
    %v702 = vpop.permute.xlu0 %701
    %703 = vrot.lane.b32.xlu0 %v694, 63
    %v704 = vpop.permute.xlu0 %703
    %705 = vrot.lane.b32.xlu0 %v695, 63
    %v706 = vpop.permute.xlu0 %705
    %707 = vrot.lane.b32.xlu0 %v696, 63
    %v708 = vpop.permute.xlu0 %707
    %709 = vrot.lane.b32.xlu0 %v697, 63
    %v710 = vpop.permute.xlu0 %709
    %711 = vrot.lane.b32.xlu0 %v698, 63
    %v712 = vpop.permute.xlu0 %711
    %713 = vrot.lane.b32.xlu0 %v699, 63
    %v714 = vpop.permute.xlu0 %713
    %715 = vrot.lane.b32.xlu0 %v700, 63
    %v716 = vpop.permute.xlu0 %715
    %vm717 = vcmask 515072
    %v718 = vsel %vm717, %v702, %v704
    %v719 = vsel %vm717, %v704, %v706
    %v720 = vsel %vm717, %v706, %v708
    %v721 = vsel %vm717, %v708, %v710
    %v722 = vsel %vm717, %v710, %v712
    %v723 = vsel %vm717, %v712, %v714
    %v724 = vsel %vm717, %v714, %v716
    %732 = vst [vmem:[#allocation2 + $0x1c0] sm:$0xfc] %v718
    %733 = vst [vmem:[#allocation2 + $0x1c8] sm:$0xfc] %v719
    %734 = vst [vmem:[#allocation2 + $0x1d0] sm:$0xfc] %v720
    %735 = vst [vmem:[#allocation2 + $0x1d8] sm:$0xfc] %v721
    %736 = vst [vmem:[#allocation2 + $0x1e0] sm:$0xfc] %v722
    %737 = vst [vmem:[#allocation2 + $0x1e8] sm:$0xfc] %v723
    %738 = vst.msk [vmem:[#allocation2 + $0x1f0] sm:$0xfc] %vm234, %v724
    %v739 = vld [vmem:[%s0] sm:$0x3f]
    %v740 = vld [vmem:[%s0 + $0x8] sm:$0x3f]
    %v741 = vld [vmem:[%s0 + $0x10] sm:$0x3f]
    %v742 = vld [vmem:[%s0 + $0x18] sm:$0x3f]
    %v743 = vld [vmem:[%s0 + $0x20] sm:$0x3f]
    %v744 = vld [vmem:[%s0 + $0x28] sm:$0x3f]
    %v745 = vld [vmem:[%s0 + $0x30] sm:$0x3f]
    %v746 = vld [vmem:[%s0 + $0x38] sm:$0x3f]
    %755 = vrot.lane.b32.xlu0 %v739, 62
    %v756 = vpop.permute.xlu0 %755
    %757 = vrot.lane.b32.xlu0 %v740, 62
    %v758 = vpop.permute.xlu0 %757
    %759 = vrot.lane.b32.xlu0 %v741, 62
    %v760 = vpop.permute.xlu0 %759
    %761 = vrot.lane.b32.xlu0 %v742, 62
    %v762 = vpop.permute.xlu0 %761
    %763 = vrot.lane.b32.xlu0 %v743, 62
    %v764 = vpop.permute.xlu0 %763
    %765 = vrot.lane.b32.xlu0 %v744, 62
    %v766 = vpop.permute.xlu0 %765
    %767 = vrot.lane.b32.xlu0 %v745, 62
    %v768 = vpop.permute.xlu0 %767
    %769 = vrot.lane.b32.xlu0 %v746, 62
    %v770 = vpop.permute.xlu0 %769
    %vm771 = vcmask 506880
    %v772 = vsel %vm771, %v756, %v758
    %v773 = vsel %vm771, %v758, %v760
    %v774 = vsel %vm771, %v760, %v762
    %v775 = vsel %vm771, %v762, %v764
    %v776 = vsel %vm771, %v764, %v766
    %v777 = vsel %vm771, %v766, %v768
    %v778 = vsel %vm771, %v768, %v770
    %786 = vst [vmem:[#allocation2 + $0x1f8] sm:$0x3f] %v772
    %787 = vst [vmem:[#allocation2 + $0x200] sm:$0x3f] %v773
    %788 = vst [vmem:[#allocation2 + $0x208] sm:$0x3f] %v774
    %789 = vst [vmem:[#allocation2 + $0x210] sm:$0x3f] %v775
    %790 = vst [vmem:[#allocation2 + $0x218] sm:$0x3f] %v776
    %791 = vst [vmem:[#allocation2 + $0x220] sm:$0x3f] %v777
    %792 = vst.msk [vmem:[#allocation2 + $0x228] sm:$0x3f] %vm47, %v778
    %v793 = vld [vmem:[%s0] sm:$0x3f]
    %v794 = vld [vmem:[%s0 + $0x8] sm:$0x3f]
    %v795 = vld [vmem:[%s0 + $0x10] sm:$0x3f]
    %v796 = vld [vmem:[%s0 + $0x18] sm:$0x3f]
    %v797 = vld [vmem:[%s0 + $0x20] sm:$0x3f]
    %v798 = vld [vmem:[%s0 + $0x28] sm:$0x3f]
    %v799 = vld [vmem:[%s0 + $0x30] sm:$0x3f]
    %v800 = vld [vmem:[%s0 + $0x38] sm:$0x3f]
    %v809 = vrot.slane %v793, 2
    %v810 = vrot.slane %v794, 2
    %v811 = vrot.slane %v795, 2
    %v812 = vrot.slane %v796, 2
    %v813 = vrot.slane %v797, 2
    %v814 = vrot.slane %v798, 2
    %v815 = vrot.slane %v799, 2
    %v816 = vrot.slane %v800, 2
    %817 = vrot.lane.b32.xlu0 %v809, 61
    %v818 = vpop.permute.xlu0 %817
    %819 = vrot.lane.b32.xlu0 %v810, 61
    %v820 = vpop.permute.xlu0 %819
    %821 = vrot.lane.b32.xlu0 %v811, 61
    %v822 = vpop.permute.xlu0 %821
    %823 = vrot.lane.b32.xlu0 %v812, 61
    %v824 = vpop.permute.xlu0 %823
    %825 = vrot.lane.b32.xlu0 %v813, 61
    %v826 = vpop.permute.xlu0 %825
    %827 = vrot.lane.b32.xlu0 %v814, 61
    %v828 = vpop.permute.xlu0 %827
    %829 = vrot.lane.b32.xlu0 %v815, 61
    %v830 = vpop.permute.xlu0 %829
    %831 = vrot.lane.b32.xlu0 %v816, 61
    %v832 = vpop.permute.xlu0 %831
    %vm833 = vcmask 498688
    %v834 = vsel %vm833, %v818, %v820
    %v835 = vsel %vm833, %v820, %v822
    %v836 = vsel %vm833, %v822, %v824
    %v837 = vsel %vm833, %v824, %v826
    %v838 = vsel %vm833, %v826, %v828
    %v839 = vsel %vm833, %v828, %v830
    %v840 = vsel %vm833, %v830, %v832
    %848 = vst [vmem:[#allocation2 + $0x1f8] sm:$0xc0] %v834
    %849 = vst [vmem:[#allocation2 + $0x200] sm:$0xc0] %v835
    %850 = vst [vmem:[#allocation2 + $0x208] sm:$0xc0] %v836
    %851 = vst [vmem:[#allocation2 + $0x210] sm:$0xc0] %v837
    %852 = vst [vmem:[#allocation2 + $0x218] sm:$0xc0] %v838
    %853 = vst [vmem:[#allocation2 + $0x220] sm:$0xc0] %v839
    %854 = vst.msk [vmem:[#allocation2 + $0x228] sm:$0xc0] %vm104, %v840
    %855 = vst [vmem:[#allocation2 + $0x230] sm:$0xf] %v834
    %856 = vst [vmem:[#allocation2 + $0x238] sm:$0xf] %v835
    %857 = vst [vmem:[#allocation2 + $0x240] sm:$0xf] %v836
    %858 = vst [vmem:[#allocation2 + $0x248] sm:$0xf] %v837
    %859 = vst [vmem:[#allocation2 + $0x250] sm:$0xf] %v838
    %860 = vst [vmem:[#allocation2 + $0x258] sm:$0xf] %v839
    %861 = vst.msk [vmem:[#allocation2 + $0x260] sm:$0xf] %vm112, %v840
    %v862 = vld [vmem:[%s0] sm:$0x3f]
    %v863 = vld [vmem:[%s0 + $0x8] sm:$0x3f]
    %v864 = vld [vmem:[%s0 + $0x10] sm:$0x3f]
    %v865 = vld [vmem:[%s0 + $0x18] sm:$0x3f]
    %v866 = vld [vmem:[%s0 + $0x20] sm:$0x3f]
    %v867 = vld [vmem:[%s0 + $0x28] sm:$0x3f]
    %v868 = vld [vmem:[%s0 + $0x30] sm:$0x3f]
    %v869 = vld [vmem:[%s0 + $0x38] sm:$0x3f]
    %v878 = vrot.slane %v862, 4
    %v879 = vrot.slane %v863, 4
    %v880 = vrot.slane %v864, 4
    %v881 = vrot.slane %v865, 4
    %v882 = vrot.slane %v866, 4
    %v883 = vrot.slane %v867, 4
    %v884 = vrot.slane %v868, 4
    %v885 = vrot.slane %v869, 4
    %886 = vrot.lane.b32.xlu0 %v878, 60
    %v887 = vpop.permute.xlu0 %886
    %888 = vrot.lane.b32.xlu0 %v879, 60
    %v889 = vpop.permute.xlu0 %888
    %890 = vrot.lane.b32.xlu0 %v880, 60
    %v891 = vpop.permute.xlu0 %890
    %892 = vrot.lane.b32.xlu0 %v881, 60
    %v893 = vpop.permute.xlu0 %892
    %894 = vrot.lane.b32.xlu0 %v882, 60
    %v895 = vpop.permute.xlu0 %894
    %896 = vrot.lane.b32.xlu0 %v883, 60
    %v897 = vpop.permute.xlu0 %896
    %898 = vrot.lane.b32.xlu0 %v884, 60
    %v899 = vpop.permute.xlu0 %898
    %900 = vrot.lane.b32.xlu0 %v885, 60
    %v901 = vpop.permute.xlu0 %900
    %vm902 = vcmask 490496
    %v903 = vsel %vm902, %v887, %v889
    %v904 = vsel %vm902, %v889, %v891
    %v905 = vsel %vm902, %v891, %v893
    %v906 = vsel %vm902, %v893, %v895
    %v907 = vsel %vm902, %v895, %v897
    %v908 = vsel %vm902, %v897, %v899
    %v909 = vsel %vm902, %v899, %v901
    %917 = vst [vmem:[#allocation2 + $0x230] sm:$0xf0] %v903
    %918 = vst [vmem:[#allocation2 + $0x238] sm:$0xf0] %v904
    %919 = vst [vmem:[#allocation2 + $0x240] sm:$0xf0] %v905
    %920 = vst [vmem:[#allocation2 + $0x248] sm:$0xf0] %v906
    %921 = vst [vmem:[#allocation2 + $0x250] sm:$0xf0] %v907
    %922 = vst [vmem:[#allocation2 + $0x258] sm:$0xf0] %v908
    %923 = vst.msk [vmem:[#allocation2 + $0x260] sm:$0xf0] %vm169, %v909
    %924 = vst [vmem:[#allocation2 + $0x268] sm:$0x3] %v903
    %925 = vst [vmem:[#allocation2 + $0x270] sm:$0x3] %v904
    %926 = vst [vmem:[#allocation2 + $0x278] sm:$0x3] %v905
    %927 = vst [vmem:[#allocation2 + $0x280] sm:$0x3] %v906
    %928 = vst [vmem:[#allocation2 + $0x288] sm:$0x3] %v907
    %929 = vst [vmem:[#allocation2 + $0x290] sm:$0x3] %v908
    %930 = vst.msk [vmem:[#allocation2 + $0x298] sm:$0x3] %vm177, %v909
    %v931 = vld [vmem:[%s0] sm:$0x3f]
    %v932 = vld [vmem:[%s0 + $0x8] sm:$0x3f]
    %v933 = vld [vmem:[%s0 + $0x10] sm:$0x3f]
    %v934 = vld [vmem:[%s0 + $0x18] sm:$0x3f]
    %v935 = vld [vmem:[%s0 + $0x20] sm:$0x3f]
    %v936 = vld [vmem:[%s0 + $0x28] sm:$0x3f]
    %v937 = vld [vmem:[%s0 + $0x30] sm:$0x3f]
    %v938 = vld [vmem:[%s0 + $0x38] sm:$0x3f]
    %v947 = vrot.slane %v931, 6
    %v948 = vrot.slane %v932, 6
    %v949 = vrot.slane %v933, 6
    %v950 = vrot.slane %v934, 6
    %v951 = vrot.slane %v935, 6
    %v952 = vrot.slane %v936, 6
    %v953 = vrot.slane %v937, 6
    %v954 = vrot.slane %v938, 6
    %955 = vrot.lane.b32.xlu0 %v947, 32
    %v956 = vpop.permute.xlu0 %955
    %957 = vrot.lane.b32.xlu0 %v948, 32
    %v958 = vpop.permute.xlu0 %957
    %959 = vrot.lane.b32.xlu0 %v949, 32
    %v960 = vpop.permute.xlu0 %959
    %961 = vrot.lane.b32.xlu0 %v950, 32
    %v962 = vpop.permute.xlu0 %961
    %963 = vrot.lane.b32.xlu0 %v951, 32
    %v964 = vpop.permute.xlu0 %963
    %965 = vrot.lane.b32.xlu0 %v952, 32
    %v966 = vpop.permute.xlu0 %965
    %967 = vrot.lane.b32.xlu0 %v953, 32
    %v968 = vpop.permute.xlu0 %967
    %969 = vrot.lane.b32.xlu0 %v954, 32
    %v970 = vpop.permute.xlu0 %969
    %vm971 = vcmask 261120
    %v972 = vsel %vm971, %v956, %v958
    %v973 = vsel %vm971, %v958, %v960
    %v974 = vsel %vm971, %v960, %v962
    %v975 = vsel %vm971, %v962, %v964
    %v976 = vsel %vm971, %v964, %v966
    %v977 = vsel %vm971, %v966, %v968
    %v978 = vsel %vm971, %v968, %v970
    %986 = vst [vmem:[#allocation2 + $0x268] sm:$0xfc] %v972
    %987 = vst [vmem:[#allocation2 + $0x270] sm:$0xfc] %v973
    %988 = vst [vmem:[#allocation2 + $0x278] sm:$0xfc] %v974
    %989 = vst [vmem:[#allocation2 + $0x280] sm:$0xfc] %v975
    %990 = vst [vmem:[#allocation2 + $0x288] sm:$0xfc] %v976
    %991 = vst [vmem:[#allocation2 + $0x290] sm:$0xfc] %v977
    %992 = vst.msk [vmem:[#allocation2 + $0x298] sm:$0xfc] %vm234, %v978
    %v993 = vld [vmem:[%s0] sm:$0x3f]
    %v994 = vld [vmem:[%s0 + $0x8] sm:$0x3f]
    %v995 = vld [vmem:[%s0 + $0x10] sm:$0x3f]
    %v996 = vld [vmem:[%s0 + $0x18] sm:$0x3f]
    %v997 = vld [vmem:[%s0 + $0x20] sm:$0x3f]
    %v998 = vld [vmem:[%s0 + $0x28] sm:$0x3f]
    %v999 = vld [vmem:[%s0 + $0x30] sm:$0x3f]
    %v1000 = vld [vmem:[%s0 + $0x38] sm:$0x3f]
    %1009 = vrot.lane.b32.xlu0 %v993, 31
    %v1010 = vpop.permute.xlu0 %1009
    %1011 = vrot.lane.b32.xlu0 %v994, 31
    %v1012 = vpop.permute.xlu0 %1011
    %1013 = vrot.lane.b32.xlu0 %v995, 31
    %v1014 = vpop.permute.xlu0 %1013
    %1015 = vrot.lane.b32.xlu0 %v996, 31
    %v1016 = vpop.permute.xlu0 %1015
    %1017 = vrot.lane.b32.xlu0 %v997, 31
    %v1018 = vpop.permute.xlu0 %1017
    %1019 = vrot.lane.b32.xlu0 %v998, 31
    %v1020 = vpop.permute.xlu0 %1019
    %1021 = vrot.lane.b32.xlu0 %v999, 31
    %v1022 = vpop.permute.xlu0 %1021
    %1023 = vrot.lane.b32.xlu0 %v1000, 31
    %v1024 = vpop.permute.xlu0 %1023
    %vm1025 = vcmask 252928
    %v1026 = vsel %vm1025, %v1010, %v1012
    %v1027 = vsel %vm1025, %v1012, %v1014
    %v1028 = vsel %vm1025, %v1014, %v1016
    %v1029 = vsel %vm1025, %v1016, %v1018
    %v1030 = vsel %vm1025, %v1018, %v1020
    %v1031 = vsel %vm1025, %v1020, %v1022
    %v1032 = vsel %vm1025, %v1022, %v1024
    %1040 = vst [vmem:[#allocation2 + $0x2a0] sm:$0x3f] %v1026
    %1041 = vst [vmem:[#allocation2 + $0x2a8] sm:$0x3f] %v1027
    %1042 = vst [vmem:[#allocation2 + $0x2b0] sm:$0x3f] %v1028
    %1043 = vst [vmem:[#allocation2 + $0x2b8] sm:$0x3f] %v1029
    %1044 = vst [vmem:[#allocation2 + $0x2c0] sm:$0x3f] %v1030
    %1045 = vst [vmem:[#allocation2 + $0x2c8] sm:$0x3f] %v1031
    %1046 = vst.msk [vmem:[#allocation2 + $0x2d0] sm:$0x3f] %vm47, %v1032
    %v1047 = vld [vmem:[%s0] sm:$0x3f]
    %v1048 = vld [vmem:[%s0 + $0x8] sm:$0x3f]
    %v1049 = vld [vmem:[%s0 + $0x10] sm:$0x3f]
    %v1050 = vld [vmem:[%s0 + $0x18] sm:$0x3f]
    %v1051 = vld [vmem:[%s0 + $0x20] sm:$0x3f]
    %v1052 = vld [vmem:[%s0 + $0x28] sm:$0x3f]
    %v1053 = vld [vmem:[%s0 + $0x30] sm:$0x3f]
    %v1054 = vld [vmem:[%s0 + $0x38] sm:$0x3f]
    %v1063 = vrot.slane %v1047, 2
    %v1064 = vrot.slane %v1048, 2
    %v1065 = vrot.slane %v1049, 2
    %v1066 = vrot.slane %v1050, 2
    %v1067 = vrot.slane %v1051, 2
    %v1068 = vrot.slane %v1052, 2
    %v1069 = vrot.slane %v1053, 2
    %v1070 = vrot.slane %v1054, 2
    %1071 = vrot.lane.b32.xlu0 %v1063, 30
    %v1072 = vpop.permute.xlu0 %1071
    %1073 = vrot.lane.b32.xlu0 %v1064, 30
    %v1074 = vpop.permute.xlu0 %1073
    %1075 = vrot.lane.b32.xlu0 %v1065, 30
    %v1076 = vpop.permute.xlu0 %1075
    %1077 = vrot.lane.b32.xlu0 %v1066, 30
    %v1078 = vpop.permute.xlu0 %1077
    %1079 = vrot.lane.b32.xlu0 %v1067, 30
    %v1080 = vpop.permute.xlu0 %1079
    %1081 = vrot.lane.b32.xlu0 %v1068, 30
    %v1082 = vpop.permute.xlu0 %1081
    %1083 = vrot.lane.b32.xlu0 %v1069, 30
    %v1084 = vpop.permute.xlu0 %1083
    %1085 = vrot.lane.b32.xlu0 %v1070, 30
    %v1086 = vpop.permute.xlu0 %1085
    %vm1087 = vcmask 244736
    %v1088 = vsel %vm1087, %v1072, %v1074
    %v1089 = vsel %vm1087, %v1074, %v1076
    %v1090 = vsel %vm1087, %v1076, %v1078
    %v1091 = vsel %vm1087, %v1078, %v1080
    %v1092 = vsel %vm1087, %v1080, %v1082
    %v1093 = vsel %vm1087, %v1082, %v1084
    %v1094 = vsel %vm1087, %v1084, %v1086
    %1102 = vst [vmem:[#allocation2 + $0x2a0] sm:$0xc0] %v1088
    %1103 = vst [vmem:[#allocation2 + $0x2a8] sm:$0xc0] %v1089
    %1104 = vst [vmem:[#allocation2 + $0x2b0] sm:$0xc0] %v1090
    %1105 = vst [vmem:[#allocation2 + $0x2b8] sm:$0xc0] %v1091
    %1106 = vst [vmem:[#allocation2 + $0x2c0] sm:$0xc0] %v1092
    %1107 = vst [vmem:[#allocation2 + $0x2c8] sm:$0xc0] %v1093
    %1108 = vst.msk [vmem:[#allocation2 + $0x2d0] sm:$0xc0] %vm104, %v1094
    %1109 = vst [vmem:[#allocation2 + $0x2d8] sm:$0xf] %v1088
    %1110 = vst [vmem:[#allocation2 + $0x2e0] sm:$0xf] %v1089
    %1111 = vst [vmem:[#allocation2 + $0x2e8] sm:$0xf] %v1090
    %1112 = vst [vmem:[#allocation2 + $0x2f0] sm:$0xf] %v1091
    %1113 = vst [vmem:[#allocation2 + $0x2f8] sm:$0xf] %v1092
    %1114 = vst [vmem:[#allocation2 + $0x300] sm:$0xf] %v1093
    %1115 = vst.msk [vmem:[#allocation2 + $0x308] sm:$0xf] %vm112, %v1094
    %v1116 = vld [vmem:[%s0] sm:$0x3f]
    %v1117 = vld [vmem:[%s0 + $0x8] sm:$0x3f]
    %v1118 = vld [vmem:[%s0 + $0x10] sm:$0x3f]
    %v1119 = vld [vmem:[%s0 + $0x18] sm:$0x3f]
    %v1120 = vld [vmem:[%s0 + $0x20] sm:$0x3f]
    %v1121 = vld [vmem:[%s0 + $0x28] sm:$0x3f]
    %v1122 = vld [vmem:[%s0 + $0x30] sm:$0x3f]
    %v1123 = vld [vmem:[%s0 + $0x38] sm:$0x3f]
    %v1132 = vrot.slane %v1116, 4
    %v1133 = vrot.slane %v1117, 4
    %v1134 = vrot.slane %v1118, 4
    %v1135 = vrot.slane %v1119, 4
    %v1136 = vrot.slane %v1120, 4
    %v1137 = vrot.slane %v1121, 4
    %v1138 = vrot.slane %v1122, 4
    %v1139 = vrot.slane %v1123, 4
    %1140 = vrot.lane.b32.xlu0 %v1132, 29
    %v1141 = vpop.permute.xlu0 %1140
    %1142 = vrot.lane.b32.xlu0 %v1133, 29
    %v1143 = vpop.permute.xlu0 %1142
    %1144 = vrot.lane.b32.xlu0 %v1134, 29
    %v1145 = vpop.permute.xlu0 %1144
    %1146 = vrot.lane.b32.xlu0 %v1135, 29
    %v1147 = vpop.permute.xlu0 %1146
    %1148 = vrot.lane.b32.xlu0 %v1136, 29
    %v1149 = vpop.permute.xlu0 %1148
    %1150 = vrot.lane.b32.xlu0 %v1137, 29
    %v1151 = vpop.permute.xlu0 %1150
    %1152 = vrot.lane.b32.xlu0 %v1138, 29
    %v1153 = vpop.permute.xlu0 %1152
    %1154 = vrot.lane.b32.xlu0 %v1139, 29
    %v1155 = vpop.permute.xlu0 %1154
    %vm1156 = vcmask 236544
    %v1157 = vsel %vm1156, %v1141, %v1143
    %v1158 = vsel %vm1156, %v1143, %v1145
    %v1159 = vsel %vm1156, %v1145, %v1147
    %v1160 = vsel %vm1156, %v1147, %v1149
    %v1161 = vsel %vm1156, %v1149, %v1151
    %v1162 = vsel %vm1156, %v1151, %v1153
    %v1163 = vsel %vm1156, %v1153, %v1155
    %1171 = vst [vmem:[#allocation2 + $0x2d8] sm:$0xf0] %v1157
    %1172 = vst [vmem:[#allocation2 + $0x2e0] sm:$0xf0] %v1158
    %1173 = vst [vmem:[#allocation2 + $0x2e8] sm:$0xf0] %v1159
    %1174 = vst [vmem:[#allocation2 + $0x2f0] sm:$0xf0] %v1160
    %1175 = vst [vmem:[#allocation2 + $0x2f8] sm:$0xf0] %v1161
    %1176 = vst [vmem:[#allocation2 + $0x300] sm:$0xf0] %v1162
    %1177 = vst.msk [vmem:[#allocation2 + $0x308] sm:$0xf0] %vm169, %v1163
    %1178 = vst [vmem:[#allocation2 + $0x310] sm:$0x3] %v1157
    %1179 = vst [vmem:[#allocation2 + $0x318] sm:$0x3] %v1158
    %1180 = vst [vmem:[#allocation2 + $0x320] sm:$0x3] %v1159
    %1181 = vst [vmem:[#allocation2 + $0x328] sm:$0x3] %v1160
    %1182 = vst [vmem:[#allocation2 + $0x330] sm:$0x3] %v1161
    %1183 = vst [vmem:[#allocation2 + $0x338] sm:$0x3] %v1162
    %1184 = vst.msk [vmem:[#allocation2 + $0x340] sm:$0x3] %vm177, %v1163
    %v1185 = vld [vmem:[%s0] sm:$0x3f]
    %v1186 = vld [vmem:[%s0 + $0x8] sm:$0x3f]
    %v1187 = vld [vmem:[%s0 + $0x10] sm:$0x3f]
    %v1188 = vld [vmem:[%s0 + $0x18] sm:$0x3f]
    %v1189 = vld [vmem:[%s0 + $0x20] sm:$0x3f]
    %v1190 = vld [vmem:[%s0 + $0x28] sm:$0x3f]
    %v1191 = vld [vmem:[%s0 + $0x30] sm:$0x3f]
    %v1192 = vld [vmem:[%s0 + $0x38] sm:$0x3f]
    %v1201 = vrot.slane %v1185, 6
    %v1202 = vrot.slane %v1186, 6
    %v1203 = vrot.slane %v1187, 6
    %v1204 = vrot.slane %v1188, 6
    %v1205 = vrot.slane %v1189, 6
    %v1206 = vrot.slane %v1190, 6
    %v1207 = vrot.slane %v1191, 6
    %v1208 = vrot.slane %v1192, 6
    %1209 = vrot.lane.b32.xlu0 %v1201, 28
    %v1210 = vpop.permute.xlu0 %1209
    %1211 = vrot.lane.b32.xlu0 %v1202, 28
    %v1212 = vpop.permute.xlu0 %1211
    %1213 = vrot.lane.b32.xlu0 %v1203, 28
    %v1214 = vpop.permute.xlu0 %1213
    %1215 = vrot.lane.b32.xlu0 %v1204, 28
    %v1216 = vpop.permute.xlu0 %1215
    %1217 = vrot.lane.b32.xlu0 %v1205, 28
    %v1218 = vpop.permute.xlu0 %1217
    %1219 = vrot.lane.b32.xlu0 %v1206, 28
    %v1220 = vpop.permute.xlu0 %1219
    %1221 = vrot.lane.b32.xlu0 %v1207, 28
    %v1222 = vpop.permute.xlu0 %1221
    %1223 = vrot.lane.b32.xlu0 %v1208, 28
    %v1224 = vpop.permute.xlu0 %1223
    %vm1225 = vcmask 228352
    %v1226 = vsel %vm1225, %v1210, %v1212
    %v1227 = vsel %vm1225, %v1212, %v1214
    %v1228 = vsel %vm1225, %v1214, %v1216
    %v1229 = vsel %vm1225, %v1216, %v1218
    %v1230 = vsel %vm1225, %v1218, %v1220
    %v1231 = vsel %vm1225, %v1220, %v1222
    %v1232 = vsel %vm1225, %v1222, %v1224
    %1240 = vst [vmem:[#allocation2 + $0x310] sm:$0xfc] %v1226
    %1241 = vst [vmem:[#allocation2 + $0x318] sm:$0xfc] %v1227
    %1242 = vst [vmem:[#allocation2 + $0x320] sm:$0xfc] %v1228
    %1243 = vst [vmem:[#allocation2 + $0x328] sm:$0xfc] %v1229
    %1244 = vst [vmem:[#allocation2 + $0x330] sm:$0xfc] %v1230
    %1245 = vst [vmem:[#allocation2 + $0x338] sm:$0xfc] %v1231
    %1246 = vst.msk [vmem:[#allocation2 + $0x340] sm:$0xfc] %vm234, %v1232
    %v1247 = vld [vmem:[%s0 + $0x8] sm:$0x3f]
    %v1248 = vld [vmem:[%s0 + $0x10] sm:$0x3f]
    %v1249 = vld [vmem:[%s0 + $0x18] sm:$0x3f]
    %v1250 = vld [vmem:[%s0 + $0x20] sm:$0x3f]
    %v1251 = vld [vmem:[%s0 + $0x28] sm:$0x3f]
    %v1252 = vld [vmem:[%s0 + $0x30] sm:$0x3f]
    %v1253 = vld [vmem:[%s0 + $0x38] sm:$0x3f]
    %1254 = vst [vmem:[#allocation2 + $0x348] sm:$0x3f] %v1247
    %1255 = vst [vmem:[#allocation2 + $0x350] sm:$0x3f] %v1248
    %1256 = vst [vmem:[#allocation2 + $0x358] sm:$0x3f] %v1249
    %1257 = vst [vmem:[#allocation2 + $0x360] sm:$0x3f] %v1250
    %1258 = vst [vmem:[#allocation2 + $0x368] sm:$0x3f] %v1251
    %1259 = vst [vmem:[#allocation2 + $0x370] sm:$0x3f] %v1252
    %1260 = vst.msk [vmem:[#allocation2 + $0x378] sm:$0x3f] %vm47, %v1253
    %v1261 = vld [vmem:[%s0 + $0x8] sm:$0x3f]
    %v1262 = vld [vmem:[%s0 + $0x10] sm:$0x3f]
    %v1263 = vld [vmem:[%s0 + $0x18] sm:$0x3f]
    %v1264 = vld [vmem:[%s0 + $0x20] sm:$0x3f]
    %v1265 = vld [vmem:[%s0 + $0x28] sm:$0x3f]
    %v1266 = vld [vmem:[%s0 + $0x30] sm:$0x3f]
    %v1267 = vld [vmem:[%s0 + $0x38] sm:$0x3f]
    %v1275 = vrot.slane %v1261, 2
    %v1276 = vrot.slane %v1262, 2
    %v1277 = vrot.slane %v1263, 2
    %v1278 = vrot.slane %v1264, 2
    %v1279 = vrot.slane %v1265, 2
    %v1280 = vrot.slane %v1266, 2
    %v1281 = vrot.slane %v1267, 2
    %1282 = vrot.lane.b32.xlu0 %v1275, 127
    %v1283 = vpop.permute.xlu0 %1282
    %1284 = vrot.lane.b32.xlu0 %v1276, 127
    %v1285 = vpop.permute.xlu0 %1284
    %1286 = vrot.lane.b32.xlu0 %v1277, 127
    %v1287 = vpop.permute.xlu0 %1286
    %1288 = vrot.lane.b32.xlu0 %v1278, 127
    %v1289 = vpop.permute.xlu0 %1288
    %1290 = vrot.lane.b32.xlu0 %v1279, 127
    %v1291 = vpop.permute.xlu0 %1290
    %1292 = vrot.lane.b32.xlu0 %v1280, 127
    %v1293 = vpop.permute.xlu0 %1292
    %1294 = vrot.lane.b32.xlu0 %v1281, 127
    %v1295 = vpop.permute.xlu0 %1294
    %v1296 = vsel %vm84, %v1283, %v1285
    %v1297 = vsel %vm84, %v1285, %v1287
    %v1298 = vsel %vm84, %v1287, %v1289
    %v1299 = vsel %vm84, %v1289, %v1291
    %v1300 = vsel %vm84, %v1291, %v1293
    %v1301 = vsel %vm84, %v1293, %v1295
    %1309 = vst [vmem:[#allocation2 + $0x348] sm:$0xc0] %v1296
    %1310 = vst [vmem:[#allocation2 + $0x350] sm:$0xc0] %v1297
    %1311 = vst [vmem:[#allocation2 + $0x358] sm:$0xc0] %v1298
    %1312 = vst [vmem:[#allocation2 + $0x360] sm:$0xc0] %v1299
    %1313 = vst [vmem:[#allocation2 + $0x368] sm:$0xc0] %v1300
    %1314 = vst [vmem:[#allocation2 + $0x370] sm:$0xc0] %v1301
    %1315 = vst.msk [vmem:[#allocation2 + $0x378] sm:$0xc0] %vm104, %v1295
    %1316 = vst [vmem:[#allocation2 + $0x380] sm:$0xf] %v1296
    %1317 = vst [vmem:[#allocation2 + $0x388] sm:$0xf] %v1297
    %1318 = vst [vmem:[#allocation2 + $0x390] sm:$0xf] %v1298
    %1319 = vst [vmem:[#allocation2 + $0x398] sm:$0xf] %v1299
    %1320 = vst [vmem:[#allocation2 + $0x3a0] sm:$0xf] %v1300
    %1321 = vst [vmem:[#allocation2 + $0x3a8] sm:$0xf] %v1301
    %1322 = vst.msk [vmem:[#allocation2 + $0x3b0] sm:$0xf] %vm112, %v1295
    %v1323 = vld [vmem:[%s0 + $0x8] sm:$0x3f]
    %v1324 = vld [vmem:[%s0 + $0x10] sm:$0x3f]
    %v1325 = vld [vmem:[%s0 + $0x18] sm:$0x3f]
    %v1326 = vld [vmem:[%s0 + $0x20] sm:$0x3f]
    %v1327 = vld [vmem:[%s0 + $0x28] sm:$0x3f]
    %v1328 = vld [vmem:[%s0 + $0x30] sm:$0x3f]
    %v1329 = vld [vmem:[%s0 + $0x38] sm:$0x3f]
    %v1337 = vrot.slane %v1323, 4
    %v1338 = vrot.slane %v1324, 4
    %v1339 = vrot.slane %v1325, 4
    %v1340 = vrot.slane %v1326, 4
    %v1341 = vrot.slane %v1327, 4
    %v1342 = vrot.slane %v1328, 4
    %v1343 = vrot.slane %v1329, 4
    %1344 = vrot.lane.b32.xlu0 %v1337, 126
    %v1345 = vpop.permute.xlu0 %1344
    %1346 = vrot.lane.b32.xlu0 %v1338, 126
    %v1347 = vpop.permute.xlu0 %1346
    %1348 = vrot.lane.b32.xlu0 %v1339, 126
    %v1349 = vpop.permute.xlu0 %1348
    %1350 = vrot.lane.b32.xlu0 %v1340, 126
    %v1351 = vpop.permute.xlu0 %1350
    %1352 = vrot.lane.b32.xlu0 %v1341, 126
    %v1353 = vpop.permute.xlu0 %1352
    %1354 = vrot.lane.b32.xlu0 %v1342, 126
    %v1355 = vpop.permute.xlu0 %1354
    %1356 = vrot.lane.b32.xlu0 %v1343, 126
    %v1357 = vpop.permute.xlu0 %1356
    %v1358 = vsel %vm149, %v1345, %v1347
    %v1359 = vsel %vm149, %v1347, %v1349
    %v1360 = vsel %vm149, %v1349, %v1351
    %v1361 = vsel %vm149, %v1351, %v1353
    %v1362 = vsel %vm149, %v1353, %v1355
    %v1363 = vsel %vm149, %v1355, %v1357
    %1371 = vst [vmem:[#allocation2 + $0x380] sm:$0xf0] %v1358
    %1372 = vst [vmem:[#allocation2 + $0x388] sm:$0xf0] %v1359
    %1373 = vst [vmem:[#allocation2 + $0x390] sm:$0xf0] %v1360
    %1374 = vst [vmem:[#allocation2 + $0x398] sm:$0xf0] %v1361
    %1375 = vst [vmem:[#allocation2 + $0x3a0] sm:$0xf0] %v1362
    %1376 = vst [vmem:[#allocation2 + $0x3a8] sm:$0xf0] %v1363
    %1377 = vst.msk [vmem:[#allocation2 + $0x3b0] sm:$0xf0] %vm169, %v1357
    %1378 = vst [vmem:[#allocation2 + $0x3b8] sm:$0x3] %v1358
    %1379 = vst [vmem:[#allocation2 + $0x3c0] sm:$0x3] %v1359
    %1380 = vst [vmem:[#allocation2 + $0x3c8] sm:$0x3] %v1360
    %1381 = vst [vmem:[#allocation2 + $0x3d0] sm:$0x3] %v1361
    %1382 = vst [vmem:[#allocation2 + $0x3d8] sm:$0x3] %v1362
    %1383 = vst [vmem:[#allocation2 + $0x3e0] sm:$0x3] %v1363
    %1384 = vst.msk [vmem:[#allocation2 + $0x3e8] sm:$0x3] %vm177, %v1357
    %v1385 = vld [vmem:[%s0 + $0x8] sm:$0x3f]
    %v1386 = vld [vmem:[%s0 + $0x10] sm:$0x3f]
    %v1387 = vld [vmem:[%s0 + $0x18] sm:$0x3f]
    %v1388 = vld [vmem:[%s0 + $0x20] sm:$0x3f]
    %v1389 = vld [vmem:[%s0 + $0x28] sm:$0x3f]
    %v1390 = vld [vmem:[%s0 + $0x30] sm:$0x3f]
    %v1391 = vld [vmem:[%s0 + $0x38] sm:$0x3f]
    %v1399 = vrot.slane %v1385, 6
    %v1400 = vrot.slane %v1386, 6
    %v1401 = vrot.slane %v1387, 6
    %v1402 = vrot.slane %v1388, 6
    %v1403 = vrot.slane %v1389, 6
    %v1404 = vrot.slane %v1390, 6
    %v1405 = vrot.slane %v1391, 6
    %1406 = vrot.lane.b32.xlu0 %v1399, 125
    %v1407 = vpop.permute.xlu0 %1406
    %1408 = vrot.lane.b32.xlu0 %v1400, 125
    %v1409 = vpop.permute.xlu0 %1408
    %1410 = vrot.lane.b32.xlu0 %v1401, 125
    %v1411 = vpop.permute.xlu0 %1410
    %1412 = vrot.lane.b32.xlu0 %v1402, 125
    %v1413 = vpop.permute.xlu0 %1412
    %1414 = vrot.lane.b32.xlu0 %v1403, 125
    %v1415 = vpop.permute.xlu0 %1414
    %1416 = vrot.lane.b32.xlu0 %v1404, 125
    %v1417 = vpop.permute.xlu0 %1416
    %1418 = vrot.lane.b32.xlu0 %v1405, 125
    %v1419 = vpop.permute.xlu0 %1418
    %v1420 = vsel %vm214, %v1407, %v1409
    %v1421 = vsel %vm214, %v1409, %v1411
    %v1422 = vsel %vm214, %v1411, %v1413
    %v1423 = vsel %vm214, %v1413, %v1415
    %v1424 = vsel %vm214, %v1415, %v1417
    %v1425 = vsel %vm214, %v1417, %v1419
    %1433 = vst [vmem:[#allocation2 + $0x3b8] sm:$0xfc] %v1420
    %1434 = vst [vmem:[#allocation2 + $0x3c0] sm:$0xfc] %v1421
    %1435 = vst [vmem:[#allocation2 + $0x3c8] sm:$0xfc] %v1422
    %1436 = vst [vmem:[#allocation2 + $0x3d0] sm:$0xfc] %v1423
    %1437 = vst [vmem:[#allocation2 + $0x3d8] sm:$0xfc] %v1424
    %1438 = vst [vmem:[#allocation2 + $0x3e0] sm:$0xfc] %v1425
    %1439 = vst.msk [vmem:[#allocation2 + $0x3e8] sm:$0xfc] %vm234, %v1419
    %v1440 = vld [vmem:[%s0 + $0x8] sm:$0x3f]
    %v1441 = vld [vmem:[%s0 + $0x10] sm:$0x3f]
    %v1442 = vld [vmem:[%s0 + $0x18] sm:$0x3f]
    %v1443 = vld [vmem:[%s0 + $0x20] sm:$0x3f]
    %v1444 = vld [vmem:[%s0 + $0x28] sm:$0x3f]
    %v1445 = vld [vmem:[%s0 + $0x30] sm:$0x3f]
    %v1446 = vld [vmem:[%s0 + $0x38] sm:$0x3f]
    %1454 = vrot.lane.b32.xlu0 %v1440, 124
    %v1455 = vpop.permute.xlu0 %1454
    %1456 = vrot.lane.b32.xlu0 %v1441, 124
    %v1457 = vpop.permute.xlu0 %1456
    %1458 = vrot.lane.b32.xlu0 %v1442, 124
    %v1459 = vpop.permute.xlu0 %1458
    %1460 = vrot.lane.b32.xlu0 %v1443, 124
    %v1461 = vpop.permute.xlu0 %1460
    %1462 = vrot.lane.b32.xlu0 %v1444, 124
    %v1463 = vpop.permute.xlu0 %1462
    %1464 = vrot.lane.b32.xlu0 %v1445, 124
    %v1465 = vpop.permute.xlu0 %1464
    %1466 = vrot.lane.b32.xlu0 %v1446, 124
    %v1467 = vpop.permute.xlu0 %1466
    %v1468 = vsel %vm264, %v1455, %v1457
    %v1469 = vsel %vm264, %v1457, %v1459
    %v1470 = vsel %vm264, %v1459, %v1461
    %v1471 = vsel %vm264, %v1461, %v1463
    %v1472 = vsel %vm264, %v1463, %v1465
    %v1473 = vsel %vm264, %v1465, %v1467
    %1481 = vst [vmem:[#allocation2 + $0x3f0] sm:$0x3f] %v1468
    %1482 = vst [vmem:[#allocation2 + $0x3f8] sm:$0x3f] %v1469
    %1483 = vst [vmem:[#allocation2 + $0x400] sm:$0x3f] %v1470
    %1484 = vst [vmem:[#allocation2 + $0x408] sm:$0x3f] %v1471
    %1485 = vst [vmem:[#allocation2 + $0x410] sm:$0x3f] %v1472
    %1486 = vst [vmem:[#allocation2 + $0x418] sm:$0x3f] %v1473
    %1487 = vst.msk [vmem:[#allocation2 + $0x420] sm:$0x3f] %vm47, %v1467
    %v1488 = vlaneseq
    %vm1489 = vcmp.ge.s32.totalorder %v1488, 0
    %vm1490 = vcmp.lt.s32.totalorder %v1488, 892
    %vm1491 = vmand %vm1489, %vm1490
    %s1492 = scalar_lea.vmem [#allocation2], 1014
    %1493 = vst.msk [vmem:[%s1492] ss:$8 sm:$0xf] %vm1491, 1.0
    %1494 = vst.msk [vmem:[%s1492] ss:$8 sm:$0x70] %vm1491, 1.0
    %v1495 = vld [vmem:[%s1] sm:$0xff]
    %v1496 = vld [vmem:[%s1 + $0x8] sm:$0x33]
    %v1497 = vld [vmem:[#allocation2] sm:$0xff]
    %v1498 = vld [vmem:[#allocation2 + $0x8] sm:$0xff]
    %v1499 = vld [vmem:[#allocation2 + $0x10] sm:$0xff]
    %v1500 = vld [vmem:[#allocation2 + $0x18] sm:$0xff]
    %v1501 = vld [vmem:[#allocation2 + $0x20] sm:$0xff]
    %v1502 = vld [vmem:[#allocation2 + $0x28] sm:$0xff]
    %v1503 = vld [vmem:[#allocation2 + $0x30] sm:$0xff]
    %v1504 = vld [vmem:[#allocation2 + $0x38] sm:$0xff]
    %v1505 = vld [vmem:[#allocation2 + $0x40] sm:$0xff]
    %v1506 = vld [vmem:[#allocation2 + $0x48] sm:$0xff]
    %v1507 = vld [vmem:[#allocation2 + $0x50] sm:$0xff]
    %v1508 = vld [vmem:[#allocation2 + $0x58] sm:$0xff]
    %v1509 = vld [vmem:[#allocation2 + $0x60] sm:$0xff]
    %v1510 = vld [vmem:[#allocation2 + $0x68] sm:$0xff]
    %v1511 = vld [vmem:[#allocation2 + $0x70] sm:$0xff]
    %v1512 = vld [vmem:[#allocation2 + $0x78] sm:$0xff]
    %v1513 = vld [vmem:[#allocation2 + $0x80] sm:$0xff]
    %v1514 = vld [vmem:[#allocation2 + $0x88] sm:$0xff]
    %v1515 = vld [vmem:[#allocation2 + $0x90] sm:$0xff]
    %v1516 = vld [vmem:[#allocation2 + $0x98] sm:$0xff]
    %v1517 = vld [vmem:[#allocation2 + $0xa0] sm:$0xff]
    %v1518 = vld [vmem:[#allocation2 + $0xa8] sm:$0xff]
    %v1519 = vld [vmem:[#allocation2 + $0xb0] sm:$0xff]
    %v1520 = vld [vmem:[#allocation2 + $0xb8] sm:$0xff]
    %v1521 = vld [vmem:[#allocation2 + $0xc0] sm:$0xff]
    %v1522 = vld [vmem:[#allocation2 + $0xc8] sm:$0xff]
    %v1523 = vld [vmem:[#allocation2 + $0xd0] sm:$0xff]
    %v1524 = vld [vmem:[#allocation2 + $0xd8] sm:$0xff]
    %v1525 = vld [vmem:[#allocation2 + $0xe0] sm:$0xff]
    %v1526 = vld [vmem:[#allocation2 + $0xe8] sm:$0xff]
    %v1527 = vld [vmem:[#allocation2 + $0xf0] sm:$0xff]
    %v1528 = vld [vmem:[#allocation2 + $0xf8] sm:$0xff]
    %v1529 = vld [vmem:[#allocation2 + $0x100] sm:$0xff]
    %v1530 = vld [vmem:[#allocation2 + $0x108] sm:$0xff]
    %v1531 = vld [vmem:[#allocation2 + $0x110] sm:$0xff]
    %v1532 = vld [vmem:[#allocation2 + $0x118] sm:$0xff]
    %v1533 = vld [vmem:[#allocation2 + $0x120] sm:$0xff]
    %v1534 = vld [vmem:[#allocation2 + $0x128] sm:$0xff]
    %v1535 = vld [vmem:[#allocation2 + $0x130] sm:$0xff]
    %v1536 = vld [vmem:[#allocation2 + $0x138] sm:$0xff]
    %v1537 = vld [vmem:[#allocation2 + $0x140] sm:$0xff]
    %v1538 = vld [vmem:[#allocation2 + $0x148] sm:$0xff]
    %v1539 = vld [vmem:[#allocation2 + $0x150] sm:$0xff]
    %v1540 = vld [vmem:[#allocation2 + $0x158] sm:$0xff]
    %v1541 = vld [vmem:[#allocation2 + $0x160] sm:$0xff]
    %v1542 = vld [vmem:[#allocation2 + $0x168] sm:$0xff]
    %v1543 = vld [vmem:[#allocation2 + $0x170] sm:$0xff]
    %v1544 = vld [vmem:[#allocation2 + $0x178] sm:$0xff]
    %v1545 = vld [vmem:[#allocation2 + $0x180] sm:$0xff]
    %v1546 = vld [vmem:[#allocation2 + $0x188] sm:$0xff]
    %v1547 = vld [vmem:[#allocation2 + $0x190] sm:$0xff]
    %v1548 = vld [vmem:[#allocation2 + $0x198] sm:$0xff]
    %v1549 = vld [vmem:[#allocation2 + $0x1a0] sm:$0xff]
    %v1550 = vld [vmem:[#allocation2 + $0x1a8] sm:$0xff]
    %v1551 = vld [vmem:[#allocation2 + $0x1b0] sm:$0xff]
    %v1552 = vld [vmem:[#allocation2 + $0x1b8] sm:$0xff]
    %v1553 = vld [vmem:[#allocation2 + $0x1c0] sm:$0xff]
    %v1554 = vld [vmem:[#allocation2 + $0x1c8] sm:$0xff]
    %v1555 = vld [vmem:[#allocation2 + $0x1d0] sm:$0xff]
    %v1556 = vld [vmem:[#allocation2 + $0x1d8] sm:$0xff]
    %v1557 = vld [vmem:[#allocation2 + $0x1e0] sm:$0xff]
    %v1558 = vld [vmem:[#allocation2 + $0x1e8] sm:$0xff]
    %v1559 = vld [vmem:[#allocation2 + $0x1f0] sm:$0xff]
    %v1560 = vld [vmem:[#allocation2 + $0x1f8] sm:$0xff]
    %v1561 = vld [vmem:[#allocation2 + $0x200] sm:$0xff]
    %v1562 = vld [vmem:[#allocation2 + $0x208] sm:$0xff]
    %v1563 = vld [vmem:[#allocation2 + $0x210] sm:$0xff]
    %v1564 = vld [vmem:[#allocation2 + $0x218] sm:$0xff]
    %v1565 = vld [vmem:[#allocation2 + $0x220] sm:$0xff]
    %v1566 = vld [vmem:[#allocation2 + $0x228] sm:$0xff]
    %v1567 = vld [vmem:[#allocation2 + $0x230] sm:$0xff]
    %v1568 = vld [vmem:[#allocation2 + $0x238] sm:$0xff]
    %v1569 = vld [vmem:[#allocation2 + $0x240] sm:$0xff]
    %v1570 = vld [vmem:[#allocation2 + $0x248] sm:$0xff]
    %v1571 = vld [vmem:[#allocation2 + $0x250] sm:$0xff]
    %v1572 = vld [vmem:[#allocation2 + $0x258] sm:$0xff]
    %v1573 = vld [vmem:[#allocation2 + $0x260] sm:$0xff]
    %v1574 = vld [vmem:[#allocation2 + $0x268] sm:$0xff]
    %v1575 = vld [vmem:[#allocation2 + $0x270] sm:$0xff]
    %v1576 = vld [vmem:[#allocation2 + $0x278] sm:$0xff]
    %v1577 = vld [vmem:[#allocation2 + $0x280] sm:$0xff]
    %v1578 = vld [vmem:[#allocation2 + $0x288] sm:$0xff]
    %v1579 = vld [vmem:[#allocation2 + $0x290] sm:$0xff]
    %v1580 = vld [vmem:[#allocation2 + $0x298] sm:$0xff]
    %v1581 = vld [vmem:[#allocation2 + $0x2a0] sm:$0xff]
    %v1582 = vld [vmem:[#allocation2 + $0x2a8] sm:$0xff]
    %v1583 = vld [vmem:[#allocation2 + $0x2b0] sm:$0xff]
    %v1584 = vld [vmem:[#allocation2 + $0x2b8] sm:$0xff]
    %v1585 = vld [vmem:[#allocation2 + $0x2c0] sm:$0xff]
    %v1586 = vld [vmem:[#allocation2 + $0x2c8] sm:$0xff]
    %v1587 = vld [vmem:[#allocation2 + $0x2d0] sm:$0xff]
    %v1588 = vld [vmem:[#allocation2 + $0x2d8] sm:$0xff]
    %v1589 = vld [vmem:[#allocation2 + $0x2e0] sm:$0xff]
    %v1590 = vld [vmem:[#allocation2 + $0x2e8] sm:$0xff]
    %v1591 = vld [vmem:[#allocation2 + $0x2f0] sm:$0xff]
    %v1592 = vld [vmem:[#allocation2 + $0x2f8] sm:$0xff]
    %v1593 = vld [vmem:[#allocation2 + $0x300] sm:$0xff]
    %v1594 = vld [vmem:[#allocation2 + $0x308] sm:$0xff]
    %v1595 = vld [vmem:[#allocation2 + $0x310] sm:$0xff]
    %v1596 = vld [vmem:[#allocation2 + $0x318] sm:$0xff]
    %v1597 = vld [vmem:[#allocation2 + $0x320] sm:$0xff]
    %v1598 = vld [vmem:[#allocation2 + $0x328] sm:$0xff]
    %v1599 = vld [vmem:[#allocation2 + $0x330] sm:$0xff]
    %v1600 = vld [vmem:[#allocation2 + $0x338] sm:$0xff]
    %v1601 = vld [vmem:[#allocation2 + $0x340] sm:$0xff]
    %v1602 = vld [vmem:[#allocation2 + $0x348] sm:$0xff]
    %v1603 = vld [vmem:[#allocation2 + $0x350] sm:$0xff]
    %v1604 = vld [vmem:[#allocation2 + $0x358] sm:$0xff]
    %v1605 = vld [vmem:[#allocation2 + $0x360] sm:$0xff]
    %v1606 = vld [vmem:[#allocation2 + $0x368] sm:$0xff]
    %v1607 = vld [vmem:[#allocation2 + $0x370] sm:$0xff]
    %v1608 = vld [vmem:[#allocation2 + $0x378] sm:$0xff]
    %v1609 = vld [vmem:[#allocation2 + $0x380] sm:$0xff]
    %v1610 = vld [vmem:[#allocation2 + $0x388] sm:$0xff]
    %v1611 = vld [vmem:[#allocation2 + $0x390] sm:$0xff]
    %v1612 = vld [vmem:[#allocation2 + $0x398] sm:$0xff]
    %v1613 = vld [vmem:[#allocation2 + $0x3a0] sm:$0xff]
    %v1614 = vld [vmem:[#allocation2 + $0x3a8] sm:$0xff]
    %v1615 = vld [vmem:[#allocation2 + $0x3b0] sm:$0xff]
    %v1616 = vld [vmem:[#allocation2 + $0x3b8] sm:$0xff]
    %v1617 = vld [vmem:[#allocation2 + $0x3c0] sm:$0xff]
    %v1618 = vld [vmem:[#allocation2 + $0x3c8] sm:$0xff]
    %v1619 = vld [vmem:[#allocation2 + $0x3d0] sm:$0xff]
    %v1620 = vld [vmem:[#allocation2 + $0x3d8] sm:$0xff]
    %v1621 = vld [vmem:[#allocation2 + $0x3e0] sm:$0xff]
    %v1622 = vld [vmem:[#allocation2 + $0x3e8] sm:$0xff]
    %v1623 = vld [vmem:[#allocation2 + $0x3f0] sm:$0x7f]
    %v1624 = vld [vmem:[#allocation2 + $0x3f8] sm:$0x7f]
    %v1625 = vld [vmem:[#allocation2 + $0x400] sm:$0x7f]
    %v1626 = vld [vmem:[#allocation2 + $0x408] sm:$0x7f]
    %v1627 = vld [vmem:[#allocation2 + $0x410] sm:$0x7f]
    %v1628 = vld [vmem:[#allocation2 + $0x418] sm:$0x7f]
    %v1629 = vld [vmem:[#allocation2 + $0x420] sm:$0x7f]
    %v1630 = vpack.c.bf16 %v1504, %v1497
    %v1631 = vpack.c.bf16 %v1505, %v1498
    %v1632 = vpack.c.bf16 %v1506, %v1499
    %v1633 = vpack.c.bf16 %v1507, %v1500
    %v1634 = vpack.c.bf16 %v1508, %v1501
    %v1635 = vpack.c.bf16 %v1509, %v1502
    %v1636 = vpack.c.bf16 %v1510, %v1503
    %v1637 = vpack.c.bf16 %v1518, %v1511
    %v1638 = vpack.c.bf16 %v1519, %v1512
    %v1639 = vpack.c.bf16 %v1520, %v1513
    %v1640 = vpack.c.bf16 %v1521, %v1514
    %v1641 = vpack.c.bf16 %v1522, %v1515
    %v1642 = vpack.c.bf16 %v1523, %v1516
    %v1643 = vpack.c.bf16 %v1524, %v1517
    %v1644 = vpack.c.bf16 %v1532, %v1525
    %v1645 = vpack.c.bf16 %v1533, %v1526
    %v1646 = vpack.c.bf16 %v1534, %v1527
    %v1647 = vpack.c.bf16 %v1535, %v1528
    %v1648 = vpack.c.bf16 %v1536, %v1529
    %v1649 = vpack.c.bf16 %v1537, %v1530
    %v1650 = vpack.c.bf16 %v1538, %v1531
    %v1651 = vpack.c.bf16 %v1546, %v1539
    %v1652 = vpack.c.bf16 %v1547, %v1540
    %v1653 = vpack.c.bf16 %v1548, %v1541
    %v1654 = vpack.c.bf16 %v1549, %v1542
    %v1655 = vpack.c.bf16 %v1550, %v1543
    %v1656 = vpack.c.bf16 %v1551, %v1544
    %v1657 = vpack.c.bf16 %v1552, %v1545
    %v1658 = vpack.c.bf16 %v1560, %v1553
    %v1659 = vpack.c.bf16 %v1561, %v1554
    %v1660 = vpack.c.bf16 %v1562, %v1555
    %v1661 = vpack.c.bf16 %v1563, %v1556
    %v1662 = vpack.c.bf16 %v1564, %v1557
    %v1663 = vpack.c.bf16 %v1565, %v1558
    %v1664 = vpack.c.bf16 %v1566, %v1559
    %v1665 = vpack.c.bf16 %v1574, %v1567
    %v1666 = vpack.c.bf16 %v1575, %v1568
    %v1667 = vpack.c.bf16 %v1576, %v1569
    %v1668 = vpack.c.bf16 %v1577, %v1570
    %v1669 = vpack.c.bf16 %v1578, %v1571
    %v1670 = vpack.c.bf16 %v1579, %v1572
    %v1671 = vpack.c.bf16 %v1580, %v1573
    %v1672 = vpack.c.bf16 %v1588, %v1581
    %v1673 = vpack.c.bf16 %v1589, %v1582
    %v1674 = vpack.c.bf16 %v1590, %v1583
    %v1675 = vpack.c.bf16 %v1591, %v1584
    %v1676 = vpack.c.bf16 %v1592, %v1585
    %v1677 = vpack.c.bf16 %v1593, %v1586
    %v1678 = vpack.c.bf16 %v1594, %v1587
    %v1679 = vpack.c.bf16 %v1602, %v1595
    %v1680 = vpack.c.bf16 %v1603, %v1596
    %v1681 = vpack.c.bf16 %v1604, %v1597
    %v1682 = vpack.c.bf16 %v1605, %v1598
    %v1683 = vpack.c.bf16 %v1606, %v1599
    %v1684 = vpack.c.bf16 %v1607, %v1600
    %v1685 = vpack.c.bf16 %v1608, %v1601
    %v1686 = vpack.c.bf16 %v1616, %v1609
    %v1687 = vpack.c.bf16 %v1617, %v1610
    %v1688 = vpack.c.bf16 %v1618, %v1611
    %v1689 = vpack.c.bf16 %v1619, %v1612
    %v1690 = vpack.c.bf16 %v1620, %v1613
    %v1691 = vpack.c.bf16 %v1621, %v1614
    %v1692 = vpack.c.bf16 %v1622, %v1615
    %v1693 = vpack.c.bf16 %v1623, %v1623
    %v1694 = vpack.c.bf16 %v1624, %v1624
    %v1695 = vpack.c.bf16 %v1625, %v1625
    %v1696 = vpack.c.bf16 %v1626, %v1626
    %v1697 = vpack.c.bf16 %v1627, %v1627
    %v1698 = vpack.c.bf16 %v1628, %v1628
    %v1699 = vpack.c.bf16 %v1629, %v1629
    %v1702 = vunpack.c.l.b16 %v1495
    %v1703 = vunpack.c.h.b16 %v1495
    %v1704 = vunpack.c.l.b16 %v1496
    %v1705 = vunpack.c.h.b16 %v1496
    %v1706 = vpack.c.b16 %v1704, %v1702
    %v1707 = vpack.c.b16 %v1705, %v1703
    %vm1709 = vcmask 187392
    %v1711 = vsel %vm1709, %v1707, 0
    %vm1713 = vcmask 1042432
    %vm1714 = vcmask 1043456
    %v1715 = vsel %vm1713, 4294967295, 65535
    %v1716 = vsel %vm1714, %v1715, 0
    %v1718 = vand.u32 %v1693, %v1716
    %v1721 = vand.u32 %v1694, %v1716
    %v1724 = vand.u32 %v1695, %v1716
    %v1727 = vand.u32 %v1696, %v1716
    %v1730 = vand.u32 %v1697, %v1716
    %v1733 = vand.u32 %v1698, %v1716
    %v1736 = vand.u32 %v1699, %v1716
    %1738 = vmatprep.subr.bf16.mxu0 %v1680
    %1739 = vmatpush1.bf16.msra.mxu0 %v1679
    %1740 = vmatprep.subr.bf16.mxu0 %v1673
    %1741 = vmatpush1.bf16.msra.mxu0 %v1672
    %1742 = vmatprep.subr.bf16.mxu0 %v1666
    %1743 = vmatpush1.bf16.msra.mxu0 %v1665
    %1744 = vmatprep.subr.bf16.mxu0 %v1659
    %1745 = vmatpush1.bf16.msra.mxu0 %v1658
    %1746 = vmatprep.subr.bf16.mxu0 %v1652
    %1747 = vmatpush1.bf16.msra.mxu0 %v1651
    %1748 = vmatprep.subr.bf16.mxu0 %v1645
    %1749 = vmatpush1.bf16.msra.mxu0 %v1644
    %1750 = vmatprep.subr.bf16.mxu0 %v1638
    %1751 = vmatpush1.bf16.msra.mxu0 %v1637
    %1752 = vmatprep.subr.bf16.mxu0 %v1631
    %1753 = vmatpush1.bf16.msra.mxu0 %v1630
    %1754 = vmatprep.subr.bf16.mxu0 0
    %1755 = vmatpush2.bf16.msra.mxu0 0
    %1756 = vmatprep.subr.bf16.mxu0 0
    %1757 = vmatpush2.bf16.msra.mxu0 0
    %1758 = vmatprep.subr.bf16.mxu0 0
    %1759 = vmatpush2.bf16.msra.mxu0 0
    %1760 = vmatprep.subr.bf16.mxu0 0
    %1761 = vmatpush2.bf16.msra.mxu0 0
    %1762 = vmatprep.subr.bf16.mxu0 0
    %1763 = vmatpush2.bf16.msra.mxu0 0
    %1764 = vmatprep.subr.bf16.mxu0 0
    %1765 = vmatpush2.bf16.msra.mxu0 0
    %1766 = vmatprep.subr.bf16.mxu0 %v1721
    %1767 = vmatpush2.bf16.msra.mxu0 %v1718
    %1768 = vmatprep.subr.bf16.mxu0 %v1687
    %1769 = vmatpush2.bf16.msra.mxu0 %v1686
    %1770 = vmatprep.mubr.bf16.mxu0 %v1711
    %1771 = vmatmul.mubr.bf16.gmra.mxu0 %v1706
    %v1772 = vpop.f32.mrf.mxu0
    %v1773 = vadd.f32 0.0, %v1772
    %v1774 = vpop.f32.mrf.mxu0
    %v1775 = vadd.f32 0.0, %v1774
    %v1776 = vpop.f32.mrf.mxu0
    %v1777 = vadd.f32 0.0, %v1776
    %v1778 = vpop.f32.mrf.mxu0
    %v1779 = vadd.f32 0.0, %v1778
    %1780 = vdwg.mxu0
    %1781 = vmatprep.subr.bf16.mxu0 %v1682
    %1782 = vmatpush1.bf16.msra.mxu0 %v1681
    %1783 = vmatprep.subr.bf16.mxu0 %v1675
    %1784 = vmatpush1.bf16.msra.mxu0 %v1674
    %1785 = vmatprep.subr.bf16.mxu0 %v1668
    %1786 = vmatpush1.bf16.msra.mxu0 %v1667
    %1787 = vmatprep.subr.bf16.mxu0 %v1661
    %1788 = vmatpush1.bf16.msra.mxu0 %v1660
    %1789 = vmatprep.subr.bf16.mxu0 %v1654
    %1790 = vmatpush1.bf16.msra.mxu0 %v1653
    %1791 = vmatprep.subr.bf16.mxu0 %v1647
    %1792 = vmatpush1.bf16.msra.mxu0 %v1646
    %1793 = vmatprep.subr.bf16.mxu0 %v1640
    %1794 = vmatpush1.bf16.msra.mxu0 %v1639
    %1795 = vmatprep.subr.bf16.mxu0 %v1633
    %1796 = vmatpush1.bf16.msra.mxu0 %v1632
    %1797 = vmatprep.subr.bf16.mxu0 0
    %1798 = vmatpush2.bf16.msra.mxu0 0
    %1799 = vmatprep.subr.bf16.mxu0 0
    %1800 = vmatpush2.bf16.msra.mxu0 0
    %1801 = vmatprep.subr.bf16.mxu0 0
    %1802 = vmatpush2.bf16.msra.mxu0 0
    %1803 = vmatprep.subr.bf16.mxu0 0
    %1804 = vmatpush2.bf16.msra.mxu0 0
    %1805 = vmatprep.subr.bf16.mxu0 0
    %1806 = vmatpush2.bf16.msra.mxu0 0
    %1807 = vmatprep.subr.bf16.mxu0 0
    %1808 = vmatpush2.bf16.msra.mxu0 0
    %1809 = vmatprep.subr.bf16.mxu0 %v1727
    %1810 = vmatpush2.bf16.msra.mxu0 %v1724
    %1811 = vmatprep.subr.bf16.mxu0 %v1689
    %1812 = vmatpush2.bf16.msra.mxu0 %v1688
    %1813 = vmatprep.mubr.bf16.mxu0 %v1711
    %1814 = vmatmul.mubr.bf16.gmra.mxu0 %v1706
    %v1815 = vpop.f32.mrf.mxu0
    %v1816 = vadd.f32 0.0, %v1815
    %v1817 = vpop.f32.mrf.mxu0
    %v1818 = vadd.f32 0.0, %v1817
    %v1819 = vpop.f32.mrf.mxu0
    %v1820 = vadd.f32 0.0, %v1819
    %v1821 = vpop.f32.mrf.mxu0
    %v1822 = vadd.f32 0.0, %v1821
    %1823 = vdwg.mxu0
    %1824 = vmatprep.subr.bf16.mxu0 %v1684
    %1825 = vmatpush1.bf16.msra.mxu0 %v1683
    %1826 = vmatprep.subr.bf16.mxu0 %v1677
    %1827 = vmatpush1.bf16.msra.mxu0 %v1676
    %1828 = vmatprep.subr.bf16.mxu0 %v1670
    %1829 = vmatpush1.bf16.msra.mxu0 %v1669
    %1830 = vmatprep.subr.bf16.mxu0 %v1663
    %1831 = vmatpush1.bf16.msra.mxu0 %v1662
    %1832 = vmatprep.subr.bf16.mxu0 %v1656
    %1833 = vmatpush1.bf16.msra.mxu0 %v1655
    %1834 = vmatprep.subr.bf16.mxu0 %v1649
    %1835 = vmatpush1.bf16.msra.mxu0 %v1648
    %1836 = vmatprep.subr.bf16.mxu0 %v1642
    %1837 = vmatpush1.bf16.msra.mxu0 %v1641
    %1838 = vmatprep.subr.bf16.mxu0 %v1635
    %1839 = vmatpush1.bf16.msra.mxu0 %v1634
    %1840 = vmatprep.subr.bf16.mxu0 0
    %1841 = vmatpush2.bf16.msra.mxu0 0
    %1842 = vmatprep.subr.bf16.mxu0 0
    %1843 = vmatpush2.bf16.msra.mxu0 0
    %1844 = vmatprep.subr.bf16.mxu0 0
    %1845 = vmatpush2.bf16.msra.mxu0 0
    %1846 = vmatprep.subr.bf16.mxu0 0
    %1847 = vmatpush2.bf16.msra.mxu0 0
    %1848 = vmatprep.subr.bf16.mxu0 0
    %1849 = vmatpush2.bf16.msra.mxu0 0
    %1850 = vmatprep.subr.bf16.mxu0 0
    %1851 = vmatpush2.bf16.msra.mxu0 0
    %1852 = vmatprep.subr.bf16.mxu0 %v1733
    %1853 = vmatpush2.bf16.msra.mxu0 %v1730
    %1854 = vmatprep.subr.bf16.mxu0 %v1691
    %1855 = vmatpush2.bf16.msra.mxu0 %v1690
    %1856 = vmatprep.mubr.bf16.mxu0 %v1711
    %1857 = vmatmul.mubr.bf16.gmra.mxu0 %v1706
    %v1858 = vpop.f32.mrf.mxu0
    %v1859 = vadd.f32 0.0, %v1858
    %v1860 = vpop.f32.mrf.mxu0
    %v1861 = vadd.f32 0.0, %v1860
    %v1862 = vpop.f32.mrf.mxu0
    %v1863 = vadd.f32 0.0, %v1862
    %v1864 = vpop.f32.mrf.mxu0
    %v1865 = vadd.f32 0.0, %v1864
    %1866 = vdwg.mxu0
    %1867 = vmatprep.subr.bf16.mxu0 0
    %1868 = vmatpush1.bf16.msra.mxu0 %v1685
    %1869 = vmatprep.subr.bf16.mxu0 0
    %1870 = vmatpush1.bf16.msra.mxu0 %v1678
    %1871 = vmatprep.subr.bf16.mxu0 0
    %1872 = vmatpush1.bf16.msra.mxu0 %v1671
    %1873 = vmatprep.subr.bf16.mxu0 0
    %1874 = vmatpush1.bf16.msra.mxu0 %v1664
    %1875 = vmatprep.subr.bf16.mxu0 0
    %1876 = vmatpush1.bf16.msra.mxu0 %v1657
    %1877 = vmatprep.subr.bf16.mxu0 0
    %1878 = vmatpush1.bf16.msra.mxu0 %v1650
    %1879 = vmatprep.subr.bf16.mxu0 0
    %1880 = vmatpush1.bf16.msra.mxu0 %v1643
    %1881 = vmatprep.subr.bf16.mxu0 0
    %1882 = vmatpush1.bf16.msra.mxu0 %v1636
    %1883 = vmatprep.subr.bf16.mxu0 0
    %1884 = vmatpush2.bf16.msra.mxu0 0
    %1885 = vmatprep.subr.bf16.mxu0 0
    %1886 = vmatpush2.bf16.msra.mxu0 0
    %1887 = vmatprep.subr.bf16.mxu0 0
    %1888 = vmatpush2.bf16.msra.mxu0 0
    %1889 = vmatprep.subr.bf16.mxu0 0
    %1890 = vmatpush2.bf16.msra.mxu0 0
    %1891 = vmatprep.subr.bf16.mxu0 0
    %1892 = vmatpush2.bf16.msra.mxu0 0
    %1893 = vmatprep.subr.bf16.mxu0 0
    %1894 = vmatpush2.bf16.msra.mxu0 0
    %1895 = vmatprep.subr.bf16.mxu0 0
    %1896 = vmatpush2.bf16.msra.mxu0 %v1736
    %1897 = vmatprep.subr.bf16.mxu0 0
    %1898 = vmatpush2.bf16.msra.mxu0 %v1692
    %1899 = vmatprep.mubr.bf16.mxu0 %v1711
    %1900 = vmatmul.mubr.bf16.gmra.mxu0 %v1706
    %v1901 = vpop.f32.mrf.mxu0
    %v1902 = vadd.f32 0.0, %v1901
    %v1903 = vpop.f32.mrf.mxu0
    %v1904 = vpop.f32.mrf.mxu0
    %v1905 = vadd.f32 0.0, %v1904
    %v1906 = vpop.f32.mrf.mxu0
    %1907 = vdwg.mxu0
    %v1908 = vmax.f32 %v1773, 0.0
    %v1909 = vmax.f32 %v1775, 0.0
    %v1910 = vmax.f32 %v1816, 0.0
    %v1911 = vmax.f32 %v1818, 0.0
    %v1912 = vmax.f32 %v1859, 0.0
    %v1913 = vmax.f32 %v1861, 0.0
    %v1914 = vmax.f32 %v1902, 0.0
    %v1915 = vmax.f32 %v1777, 0.0
    %v1916 = vmax.f32 %v1779, 0.0
    %v1917 = vmax.f32 %v1820, 0.0
    %v1918 = vmax.f32 %v1822, 0.0
    %v1919 = vmax.f32 %v1863, 0.0
    %v1920 = vmax.f32 %v1865, 0.0
    %v1921 = vmax.f32 %v1905, 0.0
    %1936 = vrot.lane.b32.xlu0 %v1908, 127
    %v1937 = vpop.permute.xlu0 %1936
    %1938 = vrot.lane.b32.xlu0 %v1909, 127
    %v1939 = vpop.permute.xlu0 %1938
    %1940 = vrot.lane.b32.xlu0 %v1910, 127
    %v1941 = vpop.permute.xlu0 %1940
    %1942 = vrot.lane.b32.xlu0 %v1911, 127
    %v1943 = vpop.permute.xlu0 %1942
    %1944 = vrot.lane.b32.xlu0 %v1912, 127
    %v1945 = vpop.permute.xlu0 %1944
    %1946 = vrot.lane.b32.xlu0 %v1913, 127
    %v1947 = vpop.permute.xlu0 %1946
    %1948 = vrot.lane.b32.xlu0 %v1914, 127
    %v1949 = vpop.permute.xlu0 %1948
    %1950 = vrot.lane.b32.xlu0 %v1915, 127
    %v1951 = vpop.permute.xlu0 %1950
    %1952 = vrot.lane.b32.xlu0 %v1916, 127
    %v1953 = vpop.permute.xlu0 %1952
    %1954 = vrot.lane.b32.xlu0 %v1917, 127
    %v1955 = vpop.permute.xlu0 %1954
    %1956 = vrot.lane.b32.xlu0 %v1918, 127
    %v1957 = vpop.permute.xlu0 %1956
    %1958 = vrot.lane.b32.xlu0 %v1919, 127
    %v1959 = vpop.permute.xlu0 %1958
    %1960 = vrot.lane.b32.xlu0 %v1920, 127
    %v1961 = vpop.permute.xlu0 %1960
    %1962 = vrot.lane.b32.xlu0 %v1921, 127
    %v1963 = vpop.permute.xlu0 %1962
    %v1964 = vsel %vm84, %v1937, %v1939
    %v1965 = vsel %vm84, %v1939, %v1941
    %v1966 = vsel %vm84, %v1941, %v1943
    %v1967 = vsel %vm84, %v1943, %v1945
    %v1968 = vsel %vm84, %v1945, %v1947
    %v1969 = vsel %vm84, %v1947, %v1949
    %v1970 = vsel %vm84, %v1951, %v1953
    %v1971 = vsel %vm84, %v1953, %v1955
    %v1972 = vsel %vm84, %v1955, %v1957
    %v1973 = vsel %vm84, %v1957, %v1959
    %v1974 = vsel %vm84, %v1959, %v1961
    %v1975 = vsel %vm84, %v1961, %v1963
    %v1990 = vmax.f32 %v1908, %v1964
    %v1991 = vmax.f32 %v1909, %v1965
    %v1992 = vmax.f32 %v1910, %v1966
    %v1993 = vmax.f32 %v1911, %v1967
    %v1994 = vmax.f32 %v1912, %v1968
    %v1995 = vmax.f32 %v1913, %v1969
    %v1996 = vmax.f32 %v1914, %v1949
    %v1997 = vmax.f32 %v1915, %v1970
    %v1998 = vmax.f32 %v1916, %v1971
    %v1999 = vmax.f32 %v1917, %v1972
    %v2000 = vmax.f32 %v1918, %v1973
    %v2001 = vmax.f32 %v1919, %v1974
    %v2002 = vmax.f32 %v1920, %v1975
    %v2003 = vmax.f32 %v1921, %v1963
    %2018 = vrot.lane.b32.xlu0 %v1990, 96
    %v2019 = vpop.permute.xlu0 %2018
    %2020 = vrot.lane.b32.xlu0 %v1991, 96
    %v2021 = vpop.permute.xlu0 %2020
    %2022 = vrot.lane.b32.xlu0 %v1992, 96
    %v2023 = vpop.permute.xlu0 %2022
    %2024 = vrot.lane.b32.xlu0 %v1993, 96
    %v2025 = vpop.permute.xlu0 %2024
    %2026 = vrot.lane.b32.xlu0 %v1994, 96
    %v2027 = vpop.permute.xlu0 %2026
    %2028 = vrot.lane.b32.xlu0 %v1995, 96
    %v2029 = vpop.permute.xlu0 %2028
    %2030 = vrot.lane.b32.xlu0 %v1996, 96
    %v2031 = vpop.permute.xlu0 %2030
    %2032 = vrot.lane.b32.xlu0 %v1997, 96
    %v2033 = vpop.permute.xlu0 %2032
    %2034 = vrot.lane.b32.xlu0 %v1998, 96
    %v2035 = vpop.permute.xlu0 %2034
    %2036 = vrot.lane.b32.xlu0 %v1999, 96
    %v2037 = vpop.permute.xlu0 %2036
    %2038 = vrot.lane.b32.xlu0 %v2000, 96
    %v2039 = vpop.permute.xlu0 %2038
    %2040 = vrot.lane.b32.xlu0 %v2001, 96
    %v2041 = vpop.permute.xlu0 %2040
    %2042 = vrot.lane.b32.xlu0 %v2002, 96
    %v2043 = vpop.permute.xlu0 %2042
    %2044 = vrot.lane.b32.xlu0 %v2003, 96
    %v2045 = vpop.permute.xlu0 %2044
    %v2046 = vsel %vm325, %v2019, %v2021
    %v2047 = vsel %vm325, %v2021, %v2023
    %v2048 = vsel %vm325, %v2023, %v2025
    %v2049 = vsel %vm325, %v2025, %v2027
    %v2050 = vsel %vm325, %v2027, %v2029
    %v2051 = vsel %vm325, %v2029, %v2031
    %v2052 = vsel %vm325, %v2033, %v2035
    %v2053 = vsel %vm325, %v2035, %v2037
    %v2054 = vsel %vm325, %v2037, %v2039
    %v2055 = vsel %vm325, %v2039, %v2041
    %v2056 = vsel %vm325, %v2041, %v2043
    %v2057 = vsel %vm325, %v2043, %v2045
    %v2072 = vmax.f32 %v1990, %v2046
    %v2073 = vmax.f32 %v1991, %v2047
    %v2074 = vmax.f32 %v1992, %v2048
    %v2075 = vmax.f32 %v1993, %v2049
    %v2076 = vmax.f32 %v1994, %v2050
    %v2077 = vmax.f32 %v1995, %v2051
    %v2078 = vmax.f32 %v1996, %v2031
    %v2079 = vmax.f32 %v1997, %v2052
    %v2080 = vmax.f32 %v1998, %v2053
    %v2081 = vmax.f32 %v1999, %v2054
    %v2082 = vmax.f32 %v2000, %v2055
    %v2083 = vmax.f32 %v2001, %v2056
    %v2084 = vmax.f32 %v2002, %v2057
    %v2085 = vmax.f32 %v2003, %v2045
    %v2086 = vpack.c.bf16 %v2079, %v2072
    %v2087 = vpack.c.bf16 %v2080, %v2073
    %v2088 = vpack.c.bf16 %v2081, %v2074
    %v2089 = vpack.c.bf16 %v2082, %v2075
    %v2090 = vpack.c.bf16 %v2083, %v2076
    %v2091 = vpack.c.bf16 %v2084, %v2077
    %v2092 = vpack.c.bf16 %v2085, %v2078
    %v2093 = vld [vmem:[%s2] sm:$0xff]
    %v2094 = vld [vmem:[%s2 + $0x8] sm:$0xff]
    %v2095 = vld [vmem:[%s2 + $0x10] sm:$0xff]
    %v2096 = vld [vmem:[%s2 + $0x18] sm:$0xff]
    %v2097 = vld [vmem:[%s2 + $0x20] sm:$0xff]
    %v2098 = vld [vmem:[%s2 + $0x28] sm:$0xff]
    %v2099 = vld [vmem:[%s2 + $0x30] sm:$0xff]
    %v2100 = vld [vmem:[%s2 + $0x38] sm:$0xff]
    %v2101 = vld [vmem:[%s2 + $0x40] sm:$0xff]
    %v2102 = vld [vmem:[%s2 + $0x48] sm:$0xff]
    %v2103 = vld [vmem:[%s2 + $0x50] sm:$0xff]
    %v2104 = vld [vmem:[%s2 + $0x58] sm:$0xff]
    %v2105 = vld [vmem:[%s2 + $0x60] sm:$0xff]
    %v2106 = vld [vmem:[%s2 + $0x68] sm:$0xff]
    %v2107 = vld [vmem:[%s2 + $0x70] sm:$0xff]
    %v2108 = vld [vmem:[%s2 + $0x78] sm:$0xff]
    %v2109 = vld [vmem:[%s2 + $0x80] sm:$0xff]
    %v2110 = vld [vmem:[%s2 + $0x88] sm:$0xff]
    %v2111 = vld [vmem:[%s2 + $0x90] sm:$0xff]
    %v2112 = vld [vmem:[%s2 + $0x98] sm:$0xff]
    %v2113 = vld [vmem:[%s2 + $0xa0] sm:$0xff]
    %v2114 = vld [vmem:[%s2 + $0xa8] sm:$0xff]
    %v2115 = vld [vmem:[%s2 + $0xb0] sm:$0xff]
    %v2116 = vld [vmem:[%s2 + $0xb8] sm:$0xff]
    %v2117 = vld [vmem:[%s2 + $0xc0] sm:$0xff]
    %v2118 = vld [vmem:[%s2 + $0xc8] sm:$0xff]
    %v2119 = vld [vmem:[%s2 + $0xd0] sm:$0xff]
    %v2120 = vld [vmem:[%s2 + $0xd8] sm:$0xff]
    %v2121 = vld [vmem:[%s2 + $0xe0] sm:$0xff]
    %v2122 = vld [vmem:[%s2 + $0xe8] sm:$0xff]
    %v2123 = vld [vmem:[%s2 + $0xf0] sm:$0xff]
    %v2124 = vld [vmem:[%s2 + $0xf8] sm:$0xff]
    %v2125 = vld [vmem:[%s2 + $0x100] sm:$0xff]
    %v2126 = vld [vmem:[%s2 + $0x108] sm:$0xff]
    %v2127 = vld [vmem:[%s2 + $0x110] sm:$0xff]
    %v2128 = vld [vmem:[%s2 + $0x118] sm:$0xff]
    %v2129 = vld [vmem:[%s2 + $0x120] sm:$0xff]
    %v2130 = vld [vmem:[%s2 + $0x128] sm:$0xff]
    %v2131 = vld [vmem:[%s2 + $0x130] sm:$0xff]
    %v2132 = vld [vmem:[%s2 + $0x138] sm:$0xff]
    %v2133 = vld [vmem:[%s2 + $0x140] sm:$0xff]
    %v2134 = vld [vmem:[%s2 + $0x148] sm:$0xff]
    %v2135 = vld [vmem:[%s2 + $0x150] sm:$0xff]
    %v2136 = vld [vmem:[%s2 + $0x158] sm:$0xff]
    %v2137 = vld [vmem:[%s2 + $0x160] sm:$0xff]
    %v2138 = vld [vmem:[%s2 + $0x168] sm:$0xff]
    %v2139 = vld [vmem:[%s2 + $0x170] sm:$0xff]
    %v2140 = vld [vmem:[%s2 + $0x178] sm:$0xff]
    %v2141 = vld [vmem:[%s2 + $0x180] sm:$0xff]
    %v2142 = vld [vmem:[%s2 + $0x188] sm:$0xff]
    %v2143 = vld [vmem:[%s2 + $0x190] sm:$0xff]
    %v2144 = vld [vmem:[%s2 + $0x198] sm:$0xff]
    %v2145 = vld [vmem:[%s2 + $0x1a0] sm:$0xff]
    %v2146 = vld [vmem:[%s2 + $0x1a8] sm:$0xff]
    %v2147 = vld [vmem:[%s2 + $0x1b0] sm:$0xff]
    %v2148 = vld [vmem:[%s2 + $0x1b8] sm:$0xff]
    %v2149 = vld [vmem:[%s2 + $0x1c0] sm:$0xff]
    %v2150 = vld [vmem:[%s2 + $0x1c8] sm:$0xff]
    %v2151 = vld [vmem:[%s2 + $0x1d0] sm:$0xff]
    %v2152 = vld [vmem:[%s2 + $0x1d8] sm:$0xff]
    %v2153 = vld [vmem:[%s2 + $0x1e0] sm:$0xff]
    %v2154 = vld [vmem:[%s2 + $0x1e8] sm:$0xff]
    %v2155 = vld [vmem:[%s2 + $0x1f0] sm:$0xff]
    %v2156 = vld [vmem:[%s2 + $0x1f8] sm:$0xff]
    %v2157 = vld [vmem:[%s2 + $0x200] sm:$0xff]
    %v2158 = vld [vmem:[%s2 + $0x208] sm:$0xff]
    %v2159 = vld [vmem:[%s2 + $0x210] sm:$0xff]
    %v2160 = vld [vmem:[%s2 + $0x218] sm:$0xff]
    %v2161 = vld [vmem:[%s2 + $0x220] sm:$0xff]
    %v2162 = vld [vmem:[%s2 + $0x228] sm:$0xff]
    %v2163 = vld [vmem:[%s2 + $0x230] sm:$0xff]
    %v2164 = vld [vmem:[%s2 + $0x238] sm:$0xff]
    %v2165 = vld [vmem:[%s2 + $0x240] sm:$0xff]
    %v2166 = vld [vmem:[%s2 + $0x248] sm:$0xff]
    %v2167 = vld [vmem:[%s2 + $0x250] sm:$0xff]
    %v2168 = vld [vmem:[%s2 + $0x258] sm:$0xff]
    %v2169 = vld [vmem:[%s2 + $0x260] sm:$0xff]
    %v2170 = vld [vmem:[%s2 + $0x268] sm:$0xff]
    %v2171 = vld [vmem:[%s2 + $0x270] sm:$0xff]
    %v2172 = vld [vmem:[%s2 + $0x278] sm:$0xff]
    %v2173 = vld [vmem:[%s2 + $0x280] sm:$0xff]
    %v2174 = vld [vmem:[%s2 + $0x288] sm:$0xff]
    %v2175 = vld [vmem:[%s2 + $0x290] sm:$0xff]
    %v2176 = vld [vmem:[%s2 + $0x298] sm:$0xff]
    %v2177 = vld [vmem:[%s2 + $0x2a0] sm:$0xff]
    %v2178 = vld [vmem:[%s2 + $0x2a8] sm:$0xff]
    %v2179 = vld [vmem:[%s2 + $0x2b0] sm:$0xff]
    %v2180 = vld [vmem:[%s2 + $0x2b8] sm:$0xff]
    %v2181 = vld [vmem:[%s2 + $0x2c0] sm:$0xff]
    %v2182 = vld [vmem:[%s2 + $0x2c8] sm:$0xff]
    %v2183 = vld [vmem:[%s2 + $0x2d0] sm:$0xff]
    %v2184 = vld [vmem:[%s2 + $0x2d8] sm:$0xff]
    %v2185 = vld [vmem:[%s2 + $0x2e0] sm:$0xff]
    %v2186 = vld [vmem:[%s2 + $0x2e8] sm:$0xff]
    %v2187 = vld [vmem:[%s2 + $0x2f0] sm:$0xff]
    %v2188 = vld [vmem:[%s2 + $0x2f8] sm:$0xff]
    %v2189 = vld [vmem:[%s2 + $0x300] sm:$0xff]
    %v2190 = vld [vmem:[%s2 + $0x308] sm:$0xff]
    %v2191 = vld [vmem:[%s2 + $0x310] sm:$0xff]
    %v2192 = vld [vmem:[%s2 + $0x318] sm:$0xff]
    %v2193 = vld [vmem:[%s2 + $0x320] sm:$0xff]
    %v2194 = vld [vmem:[%s2 + $0x328] sm:$0xff]
    %v2195 = vld [vmem:[%s2 + $0x330] sm:$0xff]
    %v2196 = vld [vmem:[%s2 + $0x338] sm:$0xff]
    %v2197 = vld [vmem:[%s2 + $0x340] sm:$0xff]
    %v2198 = vld [vmem:[%s2 + $0x348] sm:$0xff]
    %v2199 = vld [vmem:[%s2 + $0x350] sm:$0xff]
    %v2200 = vld [vmem:[%s2 + $0x358] sm:$0x33]
    %v2309 = vunpack.c.l.b16 %v2093
    %v2310 = vunpack.c.h.b16 %v2093
    %v2311 = vunpack.c.l.b16 %v2094
    %v2312 = vunpack.c.h.b16 %v2094
    %v2313 = vunpack.c.l.b16 %v2095
    %v2314 = vunpack.c.h.b16 %v2095
    %v2315 = vunpack.c.l.b16 %v2096
    %v2316 = vunpack.c.h.b16 %v2096
    %v2317 = vunpack.c.l.b16 %v2097
    %v2318 = vunpack.c.h.b16 %v2097
    %v2319 = vunpack.c.l.b16 %v2098
    %v2320 = vunpack.c.h.b16 %v2098
    %v2321 = vunpack.c.l.b16 %v2099
    %v2322 = vunpack.c.h.b16 %v2099
    %v2323 = vunpack.c.l.b16 %v2100
    %v2324 = vunpack.c.h.b16 %v2100
    %v2325 = vunpack.c.l.b16 %v2101
    %v2326 = vunpack.c.h.b16 %v2101
    %v2327 = vunpack.c.l.b16 %v2102
    %v2328 = vunpack.c.h.b16 %v2102
    %v2329 = vunpack.c.l.b16 %v2103
    %v2330 = vunpack.c.h.b16 %v2103
    %v2331 = vunpack.c.l.b16 %v2104
    %v2332 = vunpack.c.h.b16 %v2104
    %v2333 = vunpack.c.l.b16 %v2105
    %v2334 = vunpack.c.h.b16 %v2105
    %v2335 = vunpack.c.l.b16 %v2106
    %v2336 = vunpack.c.h.b16 %v2106
    %v2337 = vunpack.c.l.b16 %v2107
    %v2338 = vunpack.c.h.b16 %v2107
    %v2339 = vunpack.c.l.b16 %v2108
    %v2340 = vunpack.c.h.b16 %v2108
    %v2341 = vunpack.c.l.b16 %v2109
    %v2342 = vunpack.c.h.b16 %v2109
    %v2343 = vunpack.c.l.b16 %v2110
    %v2344 = vunpack.c.h.b16 %v2110
    %v2345 = vunpack.c.l.b16 %v2111
    %v2346 = vunpack.c.h.b16 %v2111
    %v2347 = vunpack.c.l.b16 %v2112
    %v2348 = vunpack.c.h.b16 %v2112
    %v2349 = vunpack.c.l.b16 %v2113
    %v2350 = vunpack.c.h.b16 %v2113
    %v2351 = vunpack.c.l.b16 %v2114
    %v2352 = vunpack.c.h.b16 %v2114
    %v2353 = vunpack.c.l.b16 %v2115
    %v2354 = vunpack.c.h.b16 %v2115
    %v2355 = vunpack.c.l.b16 %v2116
    %v2356 = vunpack.c.h.b16 %v2116
    %v2357 = vunpack.c.l.b16 %v2117
    %v2358 = vunpack.c.h.b16 %v2117
    %v2359 = vunpack.c.l.b16 %v2118
    %v2360 = vunpack.c.h.b16 %v2118
    %v2361 = vunpack.c.l.b16 %v2119
    %v2362 = vunpack.c.h.b16 %v2119
    %v2363 = vunpack.c.l.b16 %v2120
    %v2364 = vunpack.c.h.b16 %v2120
    %v2365 = vunpack.c.l.b16 %v2121
    %v2366 = vunpack.c.h.b16 %v2121
    %v2367 = vunpack.c.l.b16 %v2122
    %v2368 = vunpack.c.h.b16 %v2122
    %v2369 = vunpack.c.l.b16 %v2123
    %v2370 = vunpack.c.h.b16 %v2123
    %v2371 = vunpack.c.l.b16 %v2124
    %v2372 = vunpack.c.h.b16 %v2124
    %v2373 = vunpack.c.l.b16 %v2125
    %v2374 = vunpack.c.h.b16 %v2125
    %v2375 = vunpack.c.l.b16 %v2126
    %v2376 = vunpack.c.h.b16 %v2126
    %v2377 = vunpack.c.l.b16 %v2127
    %v2378 = vunpack.c.h.b16 %v2127
    %v2379 = vunpack.c.l.b16 %v2128
    %v2380 = vunpack.c.h.b16 %v2128
    %v2381 = vunpack.c.l.b16 %v2129
    %v2382 = vunpack.c.h.b16 %v2129
    %v2383 = vunpack.c.l.b16 %v2130
    %v2384 = vunpack.c.h.b16 %v2130
    %v2385 = vunpack.c.l.b16 %v2131
    %v2386 = vunpack.c.h.b16 %v2131
    %v2387 = vunpack.c.l.b16 %v2132
    %v2388 = vunpack.c.h.b16 %v2132
    %v2389 = vunpack.c.l.b16 %v2133
    %v2390 = vunpack.c.h.b16 %v2133
    %v2391 = vunpack.c.l.b16 %v2134
    %v2392 = vunpack.c.h.b16 %v2134
    %v2393 = vunpack.c.l.b16 %v2135
    %v2394 = vunpack.c.h.b16 %v2135
    %v2395 = vunpack.c.l.b16 %v2136
    %v2396 = vunpack.c.h.b16 %v2136
    %v2397 = vunpack.c.l.b16 %v2137
    %v2398 = vunpack.c.h.b16 %v2137
    %v2399 = vunpack.c.l.b16 %v2138
    %v2400 = vunpack.c.h.b16 %v2138
    %v2401 = vunpack.c.l.b16 %v2139
    %v2402 = vunpack.c.h.b16 %v2139
    %v2403 = vunpack.c.l.b16 %v2140
    %v2404 = vunpack.c.h.b16 %v2140
    %v2405 = vunpack.c.l.b16 %v2141
    %v2406 = vunpack.c.h.b16 %v2141
    %v2407 = vunpack.c.l.b16 %v2142
    %v2408 = vunpack.c.h.b16 %v2142
    %v2409 = vunpack.c.l.b16 %v2143
    %v2410 = vunpack.c.h.b16 %v2143
    %v2411 = vunpack.c.l.b16 %v2144
    %v2412 = vunpack.c.h.b16 %v2144
    %v2413 = vunpack.c.l.b16 %v2145
    %v2414 = vunpack.c.h.b16 %v2145
    %v2415 = vunpack.c.l.b16 %v2146
    %v2416 = vunpack.c.h.b16 %v2146
    %v2417 = vunpack.c.l.b16 %v2147
    %v2418 = vunpack.c.h.b16 %v2147
    %v2419 = vunpack.c.l.b16 %v2148
    %v2420 = vunpack.c.h.b16 %v2148
    %v2421 = vunpack.c.l.b16 %v2149
    %v2422 = vunpack.c.h.b16 %v2149
    %v2423 = vunpack.c.l.b16 %v2150
    %v2424 = vunpack.c.h.b16 %v2150
    %v2425 = vunpack.c.l.b16 %v2151
    %v2426 = vunpack.c.h.b16 %v2151
    %v2427 = vunpack.c.l.b16 %v2152
    %v2428 = vunpack.c.h.b16 %v2152
    %v2429 = vunpack.c.l.b16 %v2153
    %v2430 = vunpack.c.h.b16 %v2153
    %v2431 = vunpack.c.l.b16 %v2154
    %v2432 = vunpack.c.h.b16 %v2154
    %v2433 = vunpack.c.l.b16 %v2155
    %v2434 = vunpack.c.h.b16 %v2155
    %v2435 = vunpack.c.l.b16 %v2156
    %v2436 = vunpack.c.h.b16 %v2156
    %v2437 = vunpack.c.l.b16 %v2157
    %v2438 = vunpack.c.h.b16 %v2157
    %v2439 = vunpack.c.l.b16 %v2158
    %v2440 = vunpack.c.h.b16 %v2158
    %v2441 = vunpack.c.l.b16 %v2159
    %v2442 = vunpack.c.h.b16 %v2159
    %v2443 = vunpack.c.l.b16 %v2160
    %v2444 = vunpack.c.h.b16 %v2160
    %v2445 = vunpack.c.l.b16 %v2161
    %v2446 = vunpack.c.h.b16 %v2161
    %v2447 = vunpack.c.l.b16 %v2162
    %v2448 = vunpack.c.h.b16 %v2162
    %v2449 = vunpack.c.l.b16 %v2163
    %v2450 = vunpack.c.h.b16 %v2163
    %v2451 = vunpack.c.l.b16 %v2164
    %v2452 = vunpack.c.h.b16 %v2164
    %v2453 = vunpack.c.l.b16 %v2165
    %v2454 = vunpack.c.h.b16 %v2165
    %v2455 = vunpack.c.l.b16 %v2166
    %v2456 = vunpack.c.h.b16 %v2166
    %v2457 = vunpack.c.l.b16 %v2167
    %v2458 = vunpack.c.h.b16 %v2167
    %v2459 = vunpack.c.l.b16 %v2168
    %v2460 = vunpack.c.h.b16 %v2168
    %v2461 = vunpack.c.l.b16 %v2169
    %v2462 = vunpack.c.h.b16 %v2169
    %v2463 = vunpack.c.l.b16 %v2170
    %v2464 = vunpack.c.h.b16 %v2170
    %v2465 = vunpack.c.l.b16 %v2171
    %v2466 = vunpack.c.h.b16 %v2171
    %v2467 = vunpack.c.l.b16 %v2172
    %v2468 = vunpack.c.h.b16 %v2172
    %v2469 = vunpack.c.l.b16 %v2173
    %v2470 = vunpack.c.h.b16 %v2173
    %v2471 = vunpack.c.l.b16 %v2174
    %v2472 = vunpack.c.h.b16 %v2174
    %v2473 = vunpack.c.l.b16 %v2175
    %v2474 = vunpack.c.h.b16 %v2175
    %v2475 = vunpack.c.l.b16 %v2176
    %v2476 = vunpack.c.h.b16 %v2176
    %v2477 = vunpack.c.l.b16 %v2177
    %v2478 = vunpack.c.h.b16 %v2177
    %v2479 = vunpack.c.l.b16 %v2178
    %v2480 = vunpack.c.h.b16 %v2178
    %v2481 = vunpack.c.l.b16 %v2179
    %v2482 = vunpack.c.h.b16 %v2179
    %v2483 = vunpack.c.l.b16 %v2180
    %v2484 = vunpack.c.h.b16 %v2180
    %v2485 = vunpack.c.l.b16 %v2181
    %v2486 = vunpack.c.h.b16 %v2181
    %v2487 = vunpack.c.l.b16 %v2182
    %v2488 = vunpack.c.h.b16 %v2182
    %v2489 = vunpack.c.l.b16 %v2183
    %v2490 = vunpack.c.h.b16 %v2183
    %v2491 = vunpack.c.l.b16 %v2184
    %v2492 = vunpack.c.h.b16 %v2184
    %v2493 = vunpack.c.l.b16 %v2185
    %v2494 = vunpack.c.h.b16 %v2185
    %v2495 = vunpack.c.l.b16 %v2186
    %v2496 = vunpack.c.h.b16 %v2186
    %v2497 = vunpack.c.l.b16 %v2187
    %v2498 = vunpack.c.h.b16 %v2187
    %v2499 = vunpack.c.l.b16 %v2188
    %v2500 = vunpack.c.h.b16 %v2188
    %v2501 = vunpack.c.l.b16 %v2189
    %v2502 = vunpack.c.h.b16 %v2189
    %v2503 = vunpack.c.l.b16 %v2190
    %v2504 = vunpack.c.h.b16 %v2190
    %v2505 = vunpack.c.l.b16 %v2191
    %v2506 = vunpack.c.h.b16 %v2191
    %v2507 = vunpack.c.l.b16 %v2192
    %v2508 = vunpack.c.h.b16 %v2192
    %v2509 = vunpack.c.l.b16 %v2193
    %v2510 = vunpack.c.h.b16 %v2193
    %v2511 = vunpack.c.l.b16 %v2194
    %v2512 = vunpack.c.h.b16 %v2194
    %v2513 = vunpack.c.l.b16 %v2195
    %v2514 = vunpack.c.h.b16 %v2195
    %v2515 = vunpack.c.l.b16 %v2196
    %v2516 = vunpack.c.h.b16 %v2196
    %v2517 = vunpack.c.l.b16 %v2197
    %v2518 = vunpack.c.h.b16 %v2197
    %v2519 = vunpack.c.l.b16 %v2198
    %v2520 = vunpack.c.h.b16 %v2198
    %v2521 = vunpack.c.l.b16 %v2199
    %v2522 = vunpack.c.h.b16 %v2199
    %v2523 = vunpack.c.l.b16 %v2200
    %v2524 = vunpack.c.h.b16 %v2200
    %v2525 = vpack.c.b16 %v2311, %v2309
    %v2526 = vpack.c.b16 %v2312, %v2310
    %v2527 = vpack.c.b16 %v2315, %v2313
    %v2528 = vpack.c.b16 %v2316, %v2314
    %v2529 = vpack.c.b16 %v2319, %v2317
    %v2530 = vpack.c.b16 %v2320, %v2318
    %v2531 = vpack.c.b16 %v2323, %v2321
    %v2532 = vpack.c.b16 %v2324, %v2322
    %v2533 = vpack.c.b16 %v2327, %v2325
    %v2534 = vpack.c.b16 %v2328, %v2326
    %v2535 = vpack.c.b16 %v2331, %v2329
    %v2536 = vpack.c.b16 %v2332, %v2330
    %v2537 = vpack.c.b16 %v2335, %v2333
    %v2538 = vpack.c.b16 %v2336, %v2334
    %v2539 = vpack.c.b16 %v2339, %v2337
    %v2540 = vpack.c.b16 %v2340, %v2338
    %v2541 = vpack.c.b16 %v2343, %v2341
    %v2542 = vpack.c.b16 %v2344, %v2342
    %v2543 = vpack.c.b16 %v2347, %v2345
    %v2544 = vpack.c.b16 %v2348, %v2346
    %v2545 = vpack.c.b16 %v2351, %v2349
    %v2546 = vpack.c.b16 %v2352, %v2350
    %v2547 = vpack.c.b16 %v2355, %v2353
    %v2548 = vpack.c.b16 %v2356, %v2354
    %v2549 = vpack.c.b16 %v2359, %v2357
    %v2550 = vpack.c.b16 %v2360, %v2358
    %v2551 = vpack.c.b16 %v2363, %v2361
    %v2552 = vpack.c.b16 %v2364, %v2362
    %v2553 = vpack.c.b16 %v2367, %v2365
    %v2554 = vpack.c.b16 %v2368, %v2366
    %v2555 = vpack.c.b16 %v2371, %v2369
    %v2556 = vpack.c.b16 %v2372, %v2370
    %v2557 = vpack.c.b16 %v2375, %v2373
    %v2558 = vpack.c.b16 %v2376, %v2374
    %v2559 = vpack.c.b16 %v2379, %v2377
    %v2560 = vpack.c.b16 %v2380, %v2378
    %v2561 = vpack.c.b16 %v2383, %v2381
    %v2562 = vpack.c.b16 %v2384, %v2382
    %v2563 = vpack.c.b16 %v2387, %v2385
    %v2564 = vpack.c.b16 %v2388, %v2386
    %v2565 = vpack.c.b16 %v2391, %v2389
    %v2566 = vpack.c.b16 %v2392, %v2390
    %v2567 = vpack.c.b16 %v2395, %v2393
    %v2568 = vpack.c.b16 %v2396, %v2394
    %v2569 = vpack.c.b16 %v2399, %v2397
    %v2570 = vpack.c.b16 %v2400, %v2398
    %v2571 = vpack.c.b16 %v2403, %v2401
    %v2572 = vpack.c.b16 %v2404, %v2402
    %v2573 = vpack.c.b16 %v2407, %v2405
    %v2574 = vpack.c.b16 %v2408, %v2406
    %v2575 = vpack.c.b16 %v2411, %v2409
    %v2576 = vpack.c.b16 %v2412, %v2410
    %v2577 = vpack.c.b16 %v2415, %v2413
    %v2578 = vpack.c.b16 %v2416, %v2414
    %v2579 = vpack.c.b16 %v2419, %v2417
    %v2580 = vpack.c.b16 %v2420, %v2418
    %v2581 = vpack.c.b16 %v2423, %v2421
    %v2582 = vpack.c.b16 %v2424, %v2422
    %v2583 = vpack.c.b16 %v2427, %v2425
    %v2584 = vpack.c.b16 %v2428, %v2426
    %v2585 = vpack.c.b16 %v2431, %v2429
    %v2586 = vpack.c.b16 %v2432, %v2430
    %v2587 = vpack.c.b16 %v2435, %v2433
    %v2588 = vpack.c.b16 %v2436, %v2434
    %v2589 = vpack.c.b16 %v2439, %v2437
    %v2590 = vpack.c.b16 %v2440, %v2438
    %v2591 = vpack.c.b16 %v2443, %v2441
    %v2592 = vpack.c.b16 %v2444, %v2442
    %v2593 = vpack.c.b16 %v2447, %v2445
    %v2594 = vpack.c.b16 %v2448, %v2446
    %v2595 = vpack.c.b16 %v2451, %v2449
    %v2596 = vpack.c.b16 %v2452, %v2450
    %v2597 = vpack.c.b16 %v2455, %v2453
    %v2598 = vpack.c.b16 %v2456, %v2454
    %v2599 = vpack.c.b16 %v2459, %v2457
    %v2600 = vpack.c.b16 %v2460, %v2458
    %v2601 = vpack.c.b16 %v2463, %v2461
    %v2602 = vpack.c.b16 %v2464, %v2462
    %v2603 = vpack.c.b16 %v2467, %v2465
    %v2604 = vpack.c.b16 %v2468, %v2466
    %v2605 = vpack.c.b16 %v2471, %v2469
    %v2606 = vpack.c.b16 %v2472, %v2470
    %v2607 = vpack.c.b16 %v2475, %v2473
    %v2608 = vpack.c.b16 %v2476, %v2474
    %v2609 = vpack.c.b16 %v2479, %v2477
    %v2610 = vpack.c.b16 %v2480, %v2478
    %v2611 = vpack.c.b16 %v2483, %v2481
    %v2612 = vpack.c.b16 %v2484, %v2482
    %v2613 = vpack.c.b16 %v2487, %v2485
    %v2614 = vpack.c.b16 %v2488, %v2486
    %v2615 = vpack.c.b16 %v2491, %v2489
    %v2616 = vpack.c.b16 %v2492, %v2490
    %v2617 = vpack.c.b16 %v2495, %v2493
    %v2618 = vpack.c.b16 %v2496, %v2494
    %v2619 = vpack.c.b16 %v2499, %v2497
    %v2620 = vpack.c.b16 %v2500, %v2498
    %v2621 = vpack.c.b16 %v2503, %v2501
    %v2622 = vpack.c.b16 %v2504, %v2502
    %v2623 = vpack.c.b16 %v2507, %v2505
    %v2624 = vpack.c.b16 %v2508, %v2506
    %v2625 = vpack.c.b16 %v2511, %v2509
    %v2626 = vpack.c.b16 %v2512, %v2510
    %v2627 = vpack.c.b16 %v2515, %v2513
    %v2628 = vpack.c.b16 %v2516, %v2514
    %v2629 = vpack.c.b16 %v2519, %v2517
    %v2630 = vpack.c.b16 %v2520, %v2518
    %v2631 = vpack.c.b16 %v2523, %v2521
    %v2632 = vpack.c.b16 %v2524, %v2522
    %vm2739 = vcmask 744448
    %v2741 = vsel %vm2739, %v2092, 0
    %vm2743 = vcmask 1044480
    %vm2744 = vcmask 1045504
    %v2745 = vsel %vm2743, 4294967295, 65535
    %v2746 = vsel %vm2744, %v2745, 0
    %v2748 = vand.u32 %v2631, %v2746
    %v2751 = vand.u32 %v2632, %v2746
    %2753 = vmatprep.subr.bf16.mxu0 %v2540
    %2754 = vmatpush1.bf16.msra.mxu0 %v2539
    %2755 = vmatprep.subr.bf16.mxu0 %v2538
    %2756 = vmatpush1.bf16.msra.mxu0 %v2537
    %2757 = vmatprep.subr.bf16.mxu0 %v2536
    %2758 = vmatpush1.bf16.msra.mxu0 %v2535
    %2759 = vmatprep.subr.bf16.mxu0 %v2534
    %2760 = vmatpush1.bf16.msra.mxu0 %v2533
    %2761 = vmatprep.subr.bf16.mxu0 %v2532
    %2762 = vmatpush1.bf16.msra.mxu0 %v2531
    %2763 = vmatprep.subr.bf16.mxu0 %v2530
    %2764 = vmatpush1.bf16.msra.mxu0 %v2529
    %2765 = vmatprep.subr.bf16.mxu0 %v2528
    %2766 = vmatpush1.bf16.msra.mxu0 %v2527
    %2767 = vmatprep.subr.bf16.mxu0 %v2526
    %2768 = vmatpush1.bf16.msra.mxu0 %v2525
    %2769 = vmatprep.subr.bf16.mxu0 %v2556
    %2770 = vmatpush2.bf16.msra.mxu0 %v2555
    %2771 = vmatprep.subr.bf16.mxu0 %v2554
    %2772 = vmatpush2.bf16.msra.mxu0 %v2553
    %2773 = vmatprep.subr.bf16.mxu0 %v2552
    %2774 = vmatpush2.bf16.msra.mxu0 %v2551
    %2775 = vmatprep.subr.bf16.mxu0 %v2550
    %2776 = vmatpush2.bf16.msra.mxu0 %v2549
    %2777 = vmatprep.subr.bf16.mxu0 %v2548
    %2778 = vmatpush2.bf16.msra.mxu0 %v2547
    %2779 = vmatprep.subr.bf16.mxu0 %v2546
    %2780 = vmatpush2.bf16.msra.mxu0 %v2545
    %2781 = vmatprep.subr.bf16.mxu0 %v2544
    %2782 = vmatpush2.bf16.msra.mxu0 %v2543
    %2783 = vmatprep.subr.bf16.mxu0 %v2542
    %2784 = vmatpush2.bf16.msra.mxu0 %v2541
    %2785 = vmatprep.mubr.bf16.mxu0 %v2087
    %2786 = vmatmul.mubr.bf16.gmra.mxu0 %v2086
    %v2787 = vpop.f32.mrf.mxu0
    %v2788 = vadd.f32 0.0, %v2787
    %v2789 = vpop.f32.mrf.mxu0
    %v2790 = vadd.f32 0.0, %v2789
    %v2791 = vpop.f32.mrf.mxu0
    %v2792 = vadd.f32 0.0, %v2791
    %v2793 = vpop.f32.mrf.mxu0
    %v2794 = vadd.f32 0.0, %v2793
    %2795 = vdwg.mxu0
    %2796 = vmatprep.subr.bf16.mxu0 %v2572
    %2797 = vmatpush1.bf16.msra.mxu0 %v2571
    %2798 = vmatprep.subr.bf16.mxu0 %v2570
    %2799 = vmatpush1.bf16.msra.mxu0 %v2569
    %2800 = vmatprep.subr.bf16.mxu0 %v2568
    %2801 = vmatpush1.bf16.msra.mxu0 %v2567
    %2802 = vmatprep.subr.bf16.mxu0 %v2566
    %2803 = vmatpush1.bf16.msra.mxu0 %v2565
    %2804 = vmatprep.subr.bf16.mxu0 %v2564
    %2805 = vmatpush1.bf16.msra.mxu0 %v2563
    %2806 = vmatprep.subr.bf16.mxu0 %v2562
    %2807 = vmatpush1.bf16.msra.mxu0 %v2561
    %2808 = vmatprep.subr.bf16.mxu0 %v2560
    %2809 = vmatpush1.bf16.msra.mxu0 %v2559
    %2810 = vmatprep.subr.bf16.mxu0 %v2558
    %2811 = vmatpush1.bf16.msra.mxu0 %v2557
    %2812 = vmatprep.subr.bf16.mxu0 %v2588
    %2813 = vmatpush2.bf16.msra.mxu0 %v2587
    %2814 = vmatprep.subr.bf16.mxu0 %v2586
    %2815 = vmatpush2.bf16.msra.mxu0 %v2585
    %2816 = vmatprep.subr.bf16.mxu0 %v2584
    %2817 = vmatpush2.bf16.msra.mxu0 %v2583
    %2818 = vmatprep.subr.bf16.mxu0 %v2582
    %2819 = vmatpush2.bf16.msra.mxu0 %v2581
    %2820 = vmatprep.subr.bf16.mxu0 %v2580
    %2821 = vmatpush2.bf16.msra.mxu0 %v2579
    %2822 = vmatprep.subr.bf16.mxu0 %v2578
    %2823 = vmatpush2.bf16.msra.mxu0 %v2577
    %2824 = vmatprep.subr.bf16.mxu0 %v2576
    %2825 = vmatpush2.bf16.msra.mxu0 %v2575
    %2826 = vmatprep.subr.bf16.mxu0 %v2574
    %2827 = vmatpush2.bf16.msra.mxu0 %v2573
    %2828 = vmatprep.mubr.bf16.mxu0 %v2089
    %2829 = vmatmul.mubr.bf16.gmra.mxu0 %v2088
    %v2830 = vpop.f32.mrf.mxu0
    %v2831 = vadd.f32 %v2788, %v2830
    %v2832 = vpop.f32.mrf.mxu0
    %v2833 = vadd.f32 %v2790, %v2832
    %v2834 = vpop.f32.mrf.mxu0
    %v2835 = vadd.f32 %v2792, %v2834
    %v2836 = vpop.f32.mrf.mxu0
    %v2837 = vadd.f32 %v2794, %v2836
    %2838 = vdwg.mxu0
    %2839 = vmatprep.subr.bf16.mxu0 %v2604
    %2840 = vmatpush1.bf16.msra.mxu0 %v2603
    %2841 = vmatprep.subr.bf16.mxu0 %v2602
    %2842 = vmatpush1.bf16.msra.mxu0 %v2601
    %2843 = vmatprep.subr.bf16.mxu0 %v2600
    %2844 = vmatpush1.bf16.msra.mxu0 %v2599
    %2845 = vmatprep.subr.bf16.mxu0 %v2598
    %2846 = vmatpush1.bf16.msra.mxu0 %v2597
    %2847 = vmatprep.subr.bf16.mxu0 %v2596
    %2848 = vmatpush1.bf16.msra.mxu0 %v2595
    %2849 = vmatprep.subr.bf16.mxu0 %v2594
    %2850 = vmatpush1.bf16.msra.mxu0 %v2593
    %2851 = vmatprep.subr.bf16.mxu0 %v2592
    %2852 = vmatpush1.bf16.msra.mxu0 %v2591
    %2853 = vmatprep.subr.bf16.mxu0 %v2590
    %2854 = vmatpush1.bf16.msra.mxu0 %v2589
    %2855 = vmatprep.subr.bf16.mxu0 %v2620
    %2856 = vmatpush2.bf16.msra.mxu0 %v2619
    %2857 = vmatprep.subr.bf16.mxu0 %v2618
    %2858 = vmatpush2.bf16.msra.mxu0 %v2617
    %2859 = vmatprep.subr.bf16.mxu0 %v2616
    %2860 = vmatpush2.bf16.msra.mxu0 %v2615
    %2861 = vmatprep.subr.bf16.mxu0 %v2614
    %2862 = vmatpush2.bf16.msra.mxu0 %v2613
    %2863 = vmatprep.subr.bf16.mxu0 %v2612
    %2864 = vmatpush2.bf16.msra.mxu0 %v2611
    %2865 = vmatprep.subr.bf16.mxu0 %v2610
    %2866 = vmatpush2.bf16.msra.mxu0 %v2609
    %2867 = vmatprep.subr.bf16.mxu0 %v2608
    %2868 = vmatpush2.bf16.msra.mxu0 %v2607
    %2869 = vmatprep.subr.bf16.mxu0 %v2606
    %2870 = vmatpush2.bf16.msra.mxu0 %v2605
    %2871 = vmatprep.mubr.bf16.mxu0 %v2091
    %2872 = vmatmul.mubr.bf16.gmra.mxu0 %v2090
    %v2873 = vpop.f32.mrf.mxu0
    %v2874 = vadd.f32 %v2831, %v2873
    %v2875 = vpop.f32.mrf.mxu0
    %v2876 = vadd.f32 %v2833, %v2875
    %v2877 = vpop.f32.mrf.mxu0
    %v2878 = vadd.f32 %v2835, %v2877
    %v2879 = vpop.f32.mrf.mxu0
    %v2880 = vadd.f32 %v2837, %v2879
    %2881 = vdwg.mxu0
    %2882 = vmatprep.subr.bf16.mxu0 0
    %2883 = vmatpush1.bf16.msra.mxu0 0
    %2884 = vmatprep.subr.bf16.mxu0 0
    %2885 = vmatpush1.bf16.msra.mxu0 0
    %2886 = vmatprep.subr.bf16.mxu0 %v2751
    %2887 = vmatpush1.bf16.msra.mxu0 %v2748
    %2888 = vmatprep.subr.bf16.mxu0 %v2630
    %2889 = vmatpush1.bf16.msra.mxu0 %v2629
    %2890 = vmatprep.subr.bf16.mxu0 %v2628
    %2891 = vmatpush1.bf16.msra.mxu0 %v2627
    %2892 = vmatprep.subr.bf16.mxu0 %v2626
    %2893 = vmatpush1.bf16.msra.mxu0 %v2625
    %2894 = vmatprep.subr.bf16.mxu0 %v2624
    %2895 = vmatpush1.bf16.msra.mxu0 %v2623
    %2896 = vmatprep.subr.bf16.mxu0 %v2622
    %2897 = vmatpush1.bf16.msra.mxu0 %v2621
    %2898 = vmatprep.subr.bf16.mxu0 0
    %2899 = vmatpush2.bf16.msra.mxu0 0
    %2900 = vmatprep.subr.bf16.mxu0 0
    %2901 = vmatpush2.bf16.msra.mxu0 0
    %2902 = vmatprep.subr.bf16.mxu0 0
    %2903 = vmatpush2.bf16.msra.mxu0 0
    %2904 = vmatprep.subr.bf16.mxu0 0
    %2905 = vmatpush2.bf16.msra.mxu0 0
    %2906 = vmatprep.subr.bf16.mxu0 0
    %2907 = vmatpush2.bf16.msra.mxu0 0
    %2908 = vmatprep.subr.bf16.mxu0 0
    %2909 = vmatpush2.bf16.msra.mxu0 0
    %2910 = vmatprep.subr.bf16.mxu0 0
    %2911 = vmatpush2.bf16.msra.mxu0 0
    %2912 = vmatprep.subr.bf16.mxu0 0
    %2913 = vmatpush2.bf16.msra.mxu0 0
    %2914 = vmatprep.mubr.bf16.mxu0 0
    %2915 = vmatmul.mubr.bf16.gmra.mxu0 %v2741
    %v2916 = vpop.f32.mrf.mxu0
    %v2917 = vadd.f32 %v2874, %v2916
    %v2918 = vpop.f32.mrf.mxu0
    %v2919 = vadd.f32 %v2876, %v2918
    %v2920 = vpop.f32.mrf.mxu0
    %v2921 = vadd.f32 %v2878, %v2920
    %v2922 = vpop.f32.mrf.mxu0
    %v2923 = vadd.f32 %v2880, %v2922
    %2924 = vdwg.mxu0
    %2925 = vst [vmem:[#allocation3] sm:$0xff] %v2917
    %vm2926 = vcmask 64512
    %2927 = vst.msk [vmem:[#allocation3 + $0x8] sm:$0xff] %vm2926, %v2919
    %2928 = vst [vmem:[#allocation3 + $0x10] sm:$0xf] %v2921
    %vm2929 = vcmask 60416
    %2930 = vst.msk [vmem:[#allocation3 + $0x18] sm:$0xf] %vm2929, %v2923
    %v2935 = vrot.slane %v2917, 4
    %v2936 = vrot.slane %v2919, 4
    %v2937 = vrot.slane %v2921, 4
    %v2938 = vsel %vm1714, %v2935, %v2937
    %v2939 = vrot.slane %v2923, 4
    %v2940 = vsel %vm1714, %v2936, %v2939
    %2941 = vrot.lane.b32.xlu0 %v2935, 127
    %v2942 = vpop.permute.xlu0 %2941
    %2943 = vrot.lane.b32.xlu0 %v2936, 127
    %v2944 = vpop.permute.xlu0 %2943
    %2945 = vrot.lane.b32.xlu0 %v2938, 127
    %v2946 = vpop.permute.xlu0 %2945
    %2947 = vrot.lane.b32.xlu0 %v2940, 127
    %v2948 = vpop.permute.xlu0 %2947
    %v2949 = vsel %vm84, %v2942, %v2944
    %v2950 = vsel %vm84, %v2946, %v2948
    %2955 = vst [vmem:[#allocation3 + $0x10] sm:$0xf0] %v2949
    %vm2956 = vcmask 64516
    %2957 = vst.msk [vmem:[#allocation3 + $0x18] sm:$0xf0] %vm2956, %v2944
    %2958 = vst [vmem:[#allocation3 + $0x20] sm:$0xff] %v2950
    %2959 = vst.msk [vmem:[#allocation3 + $0x28] sm:$0xff] %vm2926, %v2948
    %2960 = vrot.lane.b32.xlu0 %v2917, 126
    %v2961 = vpop.permute.xlu0 %2960
    %2962 = vrot.lane.b32.xlu0 %v2919, 126
    %v2963 = vpop.permute.xlu0 %2962
    %2964 = vrot.lane.b32.xlu0 %v2921, 126
    %v2965 = vpop.permute.xlu0 %2964
    %2966 = vrot.lane.b32.xlu0 %v2923, 126
    %v2967 = vpop.permute.xlu0 %2966
    %v2968 = vsel %vm149, %v2961, %v2963
    %v2969 = vsel %vm149, %v2965, %v2967
    %2974 = vst [vmem:[#allocation3 + $0x30] sm:$0xff] %v2968
    %2975 = vst.msk [vmem:[#allocation3 + $0x38] sm:$0xff] %vm2926, %v2963
    %2976 = vst [vmem:[#allocation3 + $0x40] sm:$0xf] %v2969
    %2977 = vst.msk [vmem:[#allocation3 + $0x48] sm:$0xf] %vm2929, %v2967
    %2978 = vrot.lane.b32.xlu0 %v2935, 125
    %v2979 = vpop.permute.xlu0 %2978
    %2980 = vrot.lane.b32.xlu0 %v2936, 125
    %v2981 = vpop.permute.xlu0 %2980
    %2982 = vrot.lane.b32.xlu0 %v2938, 125
    %v2983 = vpop.permute.xlu0 %2982
    %2984 = vrot.lane.b32.xlu0 %v2940, 125
    %v2985 = vpop.permute.xlu0 %2984
    %v2986 = vsel %vm214, %v2979, %v2981
    %v2987 = vsel %vm214, %v2983, %v2985
    %2992 = vst [vmem:[#allocation3 + $0x40] sm:$0xf0] %v2986
    %2993 = vst.msk [vmem:[#allocation3 + $0x48] sm:$0xf0] %vm2956, %v2981
    %2994 = vst [vmem:[#allocation3 + $0x50] sm:$0xff] %v2987
    %2995 = vst.msk [vmem:[#allocation3 + $0x58] sm:$0xff] %vm2926, %v2985
    %2996 = vrot.lane.b32.xlu0 %v2917, 124
    %v2997 = vpop.permute.xlu0 %2996
    %2998 = vrot.lane.b32.xlu0 %v2919, 124
    %v2999 = vpop.permute.xlu0 %2998
    %3000 = vrot.lane.b32.xlu0 %v2921, 124
    %v3001 = vpop.permute.xlu0 %3000
    %3002 = vrot.lane.b32.xlu0 %v2923, 124
    %v3003 = vpop.permute.xlu0 %3002
    %v3004 = vsel %vm264, %v2997, %v2999
    %v3005 = vsel %vm264, %v3001, %v3003
    %3010 = vst [vmem:[#allocation3 + $0x60] sm:$0xff] %v3004
    %3011 = vst.msk [vmem:[#allocation3 + $0x68] sm:$0xff] %vm2926, %v2999
    %3012 = vst [vmem:[#allocation3 + $0x70] sm:$0xf] %v3005
    %3013 = vst.msk [vmem:[#allocation3 + $0x78] sm:$0xf] %vm2929, %v3003
    %3014 = vrot.lane.b32.xlu0 %v2935, 114
    %v3015 = vpop.permute.xlu0 %3014
    %3016 = vrot.lane.b32.xlu0 %v2936, 114
    %v3017 = vpop.permute.xlu0 %3016
    %3018 = vrot.lane.b32.xlu0 %v2938, 114
    %v3019 = vpop.permute.xlu0 %3018
    %3020 = vrot.lane.b32.xlu0 %v2940, 114
    %v3021 = vpop.permute.xlu0 %3020
    %vm3022 = vcmask 932864
    %v3023 = vsel %vm3022, %v3015, %v3017
    %v3024 = vsel %vm3022, %v3019, %v3021
    %3029 = vst [vmem:[#allocation3 + $0x70] sm:$0xf0] %v3023
    %3030 = vst.msk [vmem:[#allocation3 + $0x78] sm:$0xf0] %vm2956, %v3017
    %3031 = vst [vmem:[#allocation3 + $0x80] sm:$0xff] %v3024
    %3032 = vst.msk [vmem:[#allocation3 + $0x88] sm:$0xff] %vm2926, %v3021
    %3033 = vrot.lane.b32.xlu0 %v2917, 113
    %v3034 = vpop.permute.xlu0 %3033
    %3035 = vrot.lane.b32.xlu0 %v2919, 113
    %v3036 = vpop.permute.xlu0 %3035
    %3037 = vrot.lane.b32.xlu0 %v2921, 113
    %v3038 = vpop.permute.xlu0 %3037
    %3039 = vrot.lane.b32.xlu0 %v2923, 113
    %v3040 = vpop.permute.xlu0 %3039
    %vm3041 = vcmask 924672
    %v3042 = vsel %vm3041, %v3034, %v3036
    %v3043 = vsel %vm3041, %v3038, %v3040
    %3048 = vst [vmem:[#allocation3 + $0x90] sm:$0xff] %v3042
    %3049 = vst.msk [vmem:[#allocation3 + $0x98] sm:$0xff] %vm2926, %v3036
    %3050 = vst [vmem:[#allocation3 + $0xa0] sm:$0xf] %v3043
    %3051 = vst.msk [vmem:[#allocation3 + $0xa8] sm:$0xf] %vm2929, %v3040
    %3052 = vrot.lane.b32.xlu0 %v2935, 112
    %v3053 = vpop.permute.xlu0 %3052
    %3054 = vrot.lane.b32.xlu0 %v2936, 112
    %v3055 = vpop.permute.xlu0 %3054
    %3056 = vrot.lane.b32.xlu0 %v2938, 112
    %v3057 = vpop.permute.xlu0 %3056
    %3058 = vrot.lane.b32.xlu0 %v2940, 112
    %v3059 = vpop.permute.xlu0 %3058
    %vm3060 = vcmask 916480
    %v3061 = vsel %vm3060, %v3053, %v3055
    %v3062 = vsel %vm3060, %v3057, %v3059
    %3067 = vst [vmem:[#allocation3 + $0xa0] sm:$0xf0] %v3061
    %3068 = vst.msk [vmem:[#allocation3 + $0xa8] sm:$0xf0] %vm2956, %v3055
    %3069 = vst [vmem:[#allocation3 + $0xb0] sm:$0xff] %v3062
    %3070 = vst.msk [vmem:[#allocation3 + $0xb8] sm:$0xff] %vm2926, %v3059
    %3071 = vrot.lane.b32.xlu0 %v2917, 111
    %v3072 = vpop.permute.xlu0 %3071
    %3073 = vrot.lane.b32.xlu0 %v2919, 111
    %v3074 = vpop.permute.xlu0 %3073
    %3075 = vrot.lane.b32.xlu0 %v2921, 111
    %v3076 = vpop.permute.xlu0 %3075
    %3077 = vrot.lane.b32.xlu0 %v2923, 111
    %v3078 = vpop.permute.xlu0 %3077
    %vm3079 = vcmask 908288
    %v3080 = vsel %vm3079, %v3072, %v3074
    %v3081 = vsel %vm3079, %v3076, %v3078
    %3086 = vst [vmem:[#allocation3 + $0xc0] sm:$0xff] %v3080
    %3087 = vst.msk [vmem:[#allocation3 + $0xc8] sm:$0xff] %vm2926, %v3074
    %3088 = vst [vmem:[#allocation3 + $0xd0] sm:$0xf] %v3081
    %3089 = vst.msk [vmem:[#allocation3 + $0xd8] sm:$0xf] %vm2929, %v3078
    %3090 = vrot.lane.b32.xlu0 %v2935, 110
    %v3091 = vpop.permute.xlu0 %3090
    %3092 = vrot.lane.b32.xlu0 %v2936, 110
    %v3093 = vpop.permute.xlu0 %3092
    %3094 = vrot.lane.b32.xlu0 %v2938, 110
    %v3095 = vpop.permute.xlu0 %3094
    %3096 = vrot.lane.b32.xlu0 %v2940, 110
    %v3097 = vpop.permute.xlu0 %3096
    %vm3098 = vcmask 900096
    %v3099 = vsel %vm3098, %v3091, %v3093
    %v3100 = vsel %vm3098, %v3095, %v3097
    %3105 = vst [vmem:[#allocation3 + $0xd0] sm:$0xf0] %v3099
    %3106 = vst.msk [vmem:[#allocation3 + $0xd8] sm:$0xf0] %vm2956, %v3093
    %3107 = vst [vmem:[#allocation3 + $0xe0] sm:$0xff] %v3100
    %3108 = vst.msk [vmem:[#allocation3 + $0xe8] sm:$0xff] %vm2926, %v3097
    %3109 = vrot.lane.b32.xlu0 %v2917, 100
    %v3110 = vpop.permute.xlu0 %3109
    %3111 = vrot.lane.b32.xlu0 %v2919, 100
    %v3112 = vpop.permute.xlu0 %3111
    %3113 = vrot.lane.b32.xlu0 %v2921, 100
    %v3114 = vpop.permute.xlu0 %3113
    %3115 = vrot.lane.b32.xlu0 %v2923, 100
    %v3116 = vpop.permute.xlu0 %3115
    %vm3117 = vcmask 818176
    %v3118 = vsel %vm3117, %v3110, %v3112
    %v3119 = vsel %vm3117, %v3114, %v3116
    %3124 = vst [vmem:[#allocation3 + $0xf0] sm:$0xff] %v3118
    %3125 = vst.msk [vmem:[#allocation3 + $0xf8] sm:$0xff] %vm2926, %v3112
    %3126 = vst [vmem:[#allocation3 + $0x100] sm:$0xf] %v3119
    %3127 = vst.msk [vmem:[#allocation3 + $0x108] sm:$0xf] %vm2929, %v3116
    %3128 = vrot.lane.b32.xlu0 %v2935, 99
    %v3129 = vpop.permute.xlu0 %3128
    %3130 = vrot.lane.b32.xlu0 %v2936, 99
    %v3131 = vpop.permute.xlu0 %3130
    %3132 = vrot.lane.b32.xlu0 %v2938, 99
    %v3133 = vpop.permute.xlu0 %3132
    %3134 = vrot.lane.b32.xlu0 %v2940, 99
    %v3135 = vpop.permute.xlu0 %3134
    %vm3136 = vcmask 809984
    %v3137 = vsel %vm3136, %v3129, %v3131
    %v3138 = vsel %vm3136, %v3133, %v3135
    %3143 = vst [vmem:[#allocation3 + $0x100] sm:$0xf0] %v3137
    %3144 = vst.msk [vmem:[#allocation3 + $0x108] sm:$0xf0] %vm2956, %v3131
    %3145 = vst [vmem:[#allocation3 + $0x110] sm:$0xff] %v3138
    %3146 = vst.msk [vmem:[#allocation3 + $0x118] sm:$0xff] %vm2926, %v3135
    %3147 = vrot.lane.b32.xlu0 %v2917, 98
    %v3148 = vpop.permute.xlu0 %3147
    %3149 = vrot.lane.b32.xlu0 %v2919, 98
    %v3150 = vpop.permute.xlu0 %3149
    %3151 = vrot.lane.b32.xlu0 %v2921, 98
    %v3152 = vpop.permute.xlu0 %3151
    %3153 = vrot.lane.b32.xlu0 %v2923, 98
    %v3154 = vpop.permute.xlu0 %3153
    %vm3155 = vcmask 801792
    %v3156 = vsel %vm3155, %v3148, %v3150
    %v3157 = vsel %vm3155, %v3152, %v3154
    %3162 = vst [vmem:[#allocation3 + $0x120] sm:$0xff] %v3156
    %3163 = vst.msk [vmem:[#allocation3 + $0x128] sm:$0xff] %vm2926, %v3150
    %3164 = vst [vmem:[#allocation3 + $0x130] sm:$0xf] %v3157
    %3165 = vst.msk [vmem:[#allocation3 + $0x138] sm:$0xf] %vm2929, %v3154
    %3166 = vrot.lane.b32.xlu0 %v2935, 97
    %v3167 = vpop.permute.xlu0 %3166
    %3168 = vrot.lane.b32.xlu0 %v2936, 97
    %v3169 = vpop.permute.xlu0 %3168
    %3170 = vrot.lane.b32.xlu0 %v2938, 97
    %v3171 = vpop.permute.xlu0 %3170
    %3172 = vrot.lane.b32.xlu0 %v2940, 97
    %v3173 = vpop.permute.xlu0 %3172
    %vm3174 = vcmask 793600
    %v3175 = vsel %vm3174, %v3167, %v3169
    %v3176 = vsel %vm3174, %v3171, %v3173
    %3181 = vst [vmem:[#allocation3 + $0x130] sm:$0xf0] %v3175
    %3182 = vst.msk [vmem:[#allocation3 + $0x138] sm:$0xf0] %vm2956, %v3169
    %3183 = vst [vmem:[#allocation3 + $0x140] sm:$0xff] %v3176
    %3184 = vst.msk [vmem:[#allocation3 + $0x148] sm:$0xff] %vm2926, %v3173
    %3185 = vrot.lane.b32.xlu0 %v2917, 96
    %v3186 = vpop.permute.xlu0 %3185
    %3187 = vrot.lane.b32.xlu0 %v2919, 96
    %v3188 = vpop.permute.xlu0 %3187
    %3189 = vrot.lane.b32.xlu0 %v2921, 96
    %v3190 = vpop.permute.xlu0 %3189
    %3191 = vrot.lane.b32.xlu0 %v2923, 96
    %v3192 = vpop.permute.xlu0 %3191
    %v3193 = vsel %vm325, %v3186, %v3188
    %v3194 = vsel %vm325, %v3190, %v3192
    %3199 = vst [vmem:[#allocation3 + $0x150] sm:$0xff] %v3193
    %3200 = vst.msk [vmem:[#allocation3 + $0x158] sm:$0xff] %vm2926, %v3188
    %3201 = vst [vmem:[#allocation3 + $0x160] sm:$0xf] %v3194
    %3202 = vst.msk [vmem:[#allocation3 + $0x168] sm:$0xf] %vm2929, %v3192
    %3203 = vrot.lane.b32.xlu0 %v2935, 86
    %v3204 = vpop.permute.xlu0 %3203
    %3205 = vrot.lane.b32.xlu0 %v2936, 86
    %v3206 = vpop.permute.xlu0 %3205
    %3207 = vrot.lane.b32.xlu0 %v2938, 86
    %v3208 = vpop.permute.xlu0 %3207
    %3209 = vrot.lane.b32.xlu0 %v2940, 86
    %v3210 = vpop.permute.xlu0 %3209
    %vm3211 = vcmask 703488
    %v3212 = vsel %vm3211, %v3204, %v3206
    %v3213 = vsel %vm3211, %v3208, %v3210
    %3218 = vst [vmem:[#allocation3 + $0x160] sm:$0xf0] %v3212
    %3219 = vst.msk [vmem:[#allocation3 + $0x168] sm:$0xf0] %vm2956, %v3206
    %3220 = vst [vmem:[#allocation3 + $0x170] sm:$0xff] %v3213
    %3221 = vst.msk [vmem:[#allocation3 + $0x178] sm:$0xff] %vm2926, %v3210
    %3222 = vrot.lane.b32.xlu0 %v2917, 85
    %v3223 = vpop.permute.xlu0 %3222
    %3224 = vrot.lane.b32.xlu0 %v2919, 85
    %v3225 = vpop.permute.xlu0 %3224
    %3226 = vrot.lane.b32.xlu0 %v2921, 85
    %v3227 = vpop.permute.xlu0 %3226
    %3228 = vrot.lane.b32.xlu0 %v2923, 85
    %v3229 = vpop.permute.xlu0 %3228
    %vm3230 = vcmask 695296
    %v3231 = vsel %vm3230, %v3223, %v3225
    %v3232 = vsel %vm3230, %v3227, %v3229
    %3237 = vst [vmem:[#allocation3 + $0x180] sm:$0xff] %v3231
    %3238 = vst.msk [vmem:[#allocation3 + $0x188] sm:$0xff] %vm2926, %v3225
    %3239 = vst [vmem:[#allocation3 + $0x190] sm:$0xf] %v3232
    %3240 = vst.msk [vmem:[#allocation3 + $0x198] sm:$0xf] %vm2929, %v3229
    %3241 = vrot.lane.b32.xlu0 %v2935, 84
    %v3242 = vpop.permute.xlu0 %3241
    %3243 = vrot.lane.b32.xlu0 %v2936, 84
    %v3244 = vpop.permute.xlu0 %3243
    %3245 = vrot.lane.b32.xlu0 %v2938, 84
    %v3246 = vpop.permute.xlu0 %3245
    %3247 = vrot.lane.b32.xlu0 %v2940, 84
    %v3248 = vpop.permute.xlu0 %3247
    %vm3249 = vcmask 687104
    %v3250 = vsel %vm3249, %v3242, %v3244
    %v3251 = vsel %vm3249, %v3246, %v3248
    %3256 = vst [vmem:[#allocation3 + $0x190] sm:$0xf0] %v3250
    %3257 = vst.msk [vmem:[#allocation3 + $0x198] sm:$0xf0] %vm2956, %v3244
    %3258 = vst [vmem:[#allocation3 + $0x1a0] sm:$0xff] %v3251
    %3259 = vst.msk [vmem:[#allocation3 + $0x1a8] sm:$0xff] %vm2926, %v3248
    %3260 = vrot.lane.b32.xlu0 %v2917, 83
    %v3261 = vpop.permute.xlu0 %3260
    %3262 = vrot.lane.b32.xlu0 %v2919, 83
    %v3263 = vpop.permute.xlu0 %3262
    %3264 = vrot.lane.b32.xlu0 %v2921, 83
    %v3265 = vpop.permute.xlu0 %3264
    %3266 = vrot.lane.b32.xlu0 %v2923, 83
    %v3267 = vpop.permute.xlu0 %3266
    %vm3268 = vcmask 678912
    %v3269 = vsel %vm3268, %v3261, %v3263
    %v3270 = vsel %vm3268, %v3265, %v3267
    %3275 = vst [vmem:[#allocation3 + $0x1b0] sm:$0xff] %v3269
    %3276 = vst.msk [vmem:[#allocation3 + $0x1b8] sm:$0xff] %vm2926, %v3263
    %3277 = vst [vmem:[#allocation3 + $0x1c0] sm:$0xf] %v3270
    %3278 = vst.msk [vmem:[#allocation3 + $0x1c8] sm:$0xf] %vm2929, %v3267
    %3279 = vrot.lane.b32.xlu0 %v2935, 82
    %v3280 = vpop.permute.xlu0 %3279
    %3281 = vrot.lane.b32.xlu0 %v2936, 82
    %v3282 = vpop.permute.xlu0 %3281
    %3283 = vrot.lane.b32.xlu0 %v2938, 82
    %v3284 = vpop.permute.xlu0 %3283
    %3285 = vrot.lane.b32.xlu0 %v2940, 82
    %v3286 = vpop.permute.xlu0 %3285
    %vm3287 = vcmask 670720
    %v3288 = vsel %vm3287, %v3280, %v3282
    %v3289 = vsel %vm3287, %v3284, %v3286
    %3294 = vst [vmem:[#allocation3 + $0x1c0] sm:$0xf0] %v3288
    %3295 = vst.msk [vmem:[#allocation3 + $0x1c8] sm:$0xf0] %vm2956, %v3282
    %3296 = vst [vmem:[#allocation3 + $0x1d0] sm:$0xff] %v3289
    %3297 = vst.msk [vmem:[#allocation3 + $0x1d8] sm:$0xff] %vm2926, %v3286
    %3298 = vrot.lane.b32.xlu0 %v2917, 72
    %v3299 = vpop.permute.xlu0 %3298
    %3300 = vrot.lane.b32.xlu0 %v2919, 72
    %v3301 = vpop.permute.xlu0 %3300
    %3302 = vrot.lane.b32.xlu0 %v2921, 72
    %v3303 = vpop.permute.xlu0 %3302
    %3304 = vrot.lane.b32.xlu0 %v2923, 72
    %v3305 = vpop.permute.xlu0 %3304
    %vm3306 = vcmask 588800
    %v3307 = vsel %vm3306, %v3299, %v3301
    %v3308 = vsel %vm3306, %v3303, %v3305
    %3313 = vst [vmem:[#allocation3 + $0x1e0] sm:$0xff] %v3307
    %3314 = vst.msk [vmem:[#allocation3 + $0x1e8] sm:$0xff] %vm2926, %v3301
    %3315 = vst [vmem:[#allocation3 + $0x1f0] sm:$0xf] %v3308
    %3316 = vst.msk [vmem:[#allocation3 + $0x1f8] sm:$0xf] %vm2929, %v3305
    %3317 = vrot.lane.b32.xlu0 %v2935, 71
    %v3318 = vpop.permute.xlu0 %3317
    %3319 = vrot.lane.b32.xlu0 %v2936, 71
    %v3320 = vpop.permute.xlu0 %3319
    %3321 = vrot.lane.b32.xlu0 %v2938, 71
    %v3322 = vpop.permute.xlu0 %3321
    %3323 = vrot.lane.b32.xlu0 %v2940, 71
    %v3324 = vpop.permute.xlu0 %3323
    %vm3325 = vcmask 580608
    %v3326 = vsel %vm3325, %v3318, %v3320
    %v3327 = vsel %vm3325, %v3322, %v3324
    %3332 = vst [vmem:[#allocation3 + $0x1f0] sm:$0xf0] %v3326
    %3333 = vst.msk [vmem:[#allocation3 + $0x1f8] sm:$0xf0] %vm2956, %v3320
    %3334 = vst [vmem:[#allocation3 + $0x200] sm:$0xff] %v3327
    %3335 = vst.msk [vmem:[#allocation3 + $0x208] sm:$0xff] %vm2926, %v3324
    %3336 = vrot.lane.b32.xlu0 %v2917, 70
    %v3337 = vpop.permute.xlu0 %3336
    %3338 = vrot.lane.b32.xlu0 %v2919, 70
    %v3339 = vpop.permute.xlu0 %3338
    %3340 = vrot.lane.b32.xlu0 %v2921, 70
    %v3341 = vpop.permute.xlu0 %3340
    %3342 = vrot.lane.b32.xlu0 %v2923, 70
    %v3343 = vpop.permute.xlu0 %3342
    %vm3344 = vcmask 572416
    %v3345 = vsel %vm3344, %v3337, %v3339
    %v3346 = vsel %vm3344, %v3341, %v3343
    %3351 = vst [vmem:[#allocation3 + $0x210] sm:$0xff] %v3345
    %3352 = vst.msk [vmem:[#allocation3 + $0x218] sm:$0xff] %vm2926, %v3339
    %3353 = vst [vmem:[#allocation3 + $0x220] sm:$0xf] %v3346
    %3354 = vst.msk [vmem:[#allocation3 + $0x228] sm:$0xf] %vm2929, %v3343
    %3355 = vrot.lane.b32.xlu0 %v2935, 69
    %v3356 = vpop.permute.xlu0 %3355
    %3357 = vrot.lane.b32.xlu0 %v2936, 69
    %v3358 = vpop.permute.xlu0 %3357
    %3359 = vrot.lane.b32.xlu0 %v2938, 69
    %v3360 = vpop.permute.xlu0 %3359
    %3361 = vrot.lane.b32.xlu0 %v2940, 69
    %v3362 = vpop.permute.xlu0 %3361
    %vm3363 = vcmask 564224
    %v3364 = vsel %vm3363, %v3356, %v3358
    %v3365 = vsel %vm3363, %v3360, %v3362
    %3370 = vst [vmem:[#allocation3 + $0x220] sm:$0xf0] %v3364
    %3371 = vst.msk [vmem:[#allocation3 + $0x228] sm:$0xf0] %vm2956, %v3358
    %3372 = vst [vmem:[#allocation3 + $0x230] sm:$0xff] %v3365
    %3373 = vst.msk [vmem:[#allocation3 + $0x238] sm:$0xff] %vm2926, %v3362
    %3374 = vrot.lane.b32.xlu0 %v2917, 68
    %v3375 = vpop.permute.xlu0 %3374
    %3376 = vrot.lane.b32.xlu0 %v2919, 68
    %v3377 = vpop.permute.xlu0 %3376
    %3378 = vrot.lane.b32.xlu0 %v2921, 68
    %v3379 = vpop.permute.xlu0 %3378
    %3380 = vrot.lane.b32.xlu0 %v2923, 68
    %v3381 = vpop.permute.xlu0 %3380
    %vm3382 = vcmask 556032
    %v3383 = vsel %vm3382, %v3375, %v3377
    %v3384 = vsel %vm3382, %v3379, %v3381
    %3389 = vst [vmem:[#allocation3 + $0x240] sm:$0xff] %v3383
    %3390 = vst.msk [vmem:[#allocation3 + $0x248] sm:$0xff] %vm2926, %v3377
    %3391 = vst [vmem:[#allocation3 + $0x250] sm:$0xf] %v3384
    %3392 = vst.msk [vmem:[#allocation3 + $0x258] sm:$0xf] %vm2929, %v3381
    %vm3393 = vcmp.lt.s32.totalorder %v1488, 136
    %vm3394 = vmand %vm1489, %vm3393
    %s3395 = scalar_lea.vmem [#allocation3], 596
    %3396 = vst.msk [vmem:[%s3395] ss:$8 sm:$0x3] %vm3394, 1.0
    %3397 = vst.msk [vmem:[%s3395] ss:$8 sm:$0x0] %vm3394, 1.0
    %v3398 = vld [vmem:[%s3] sm:$0xff]
    %v3399 = vld [vmem:[%s3 + $0x8] sm:$0xf]
    %v3400 = vld [vmem:[%s3 + $0xc] sm:$0xff]
    %v3401 = vld [vmem:[%s3 + $0x14] sm:$0xf]
    %v3402 = vld [vmem:[%s3 + $0x18] sm:$0xff]
    %v3403 = vld [vmem:[%s3 + $0x20] sm:$0xf]
    %v3404 = vld [vmem:[%s3 + $0x24] sm:$0xff]
    %v3405 = vld [vmem:[%s3 + $0x2c] sm:$0xf]
    %v3406 = vld [vmem:[#allocation3] sm:$0xff]
    %v3407 = vld [vmem:[#allocation3 + $0x8] sm:$0xff]
    %v3408 = vld [vmem:[#allocation3 + $0x10] sm:$0xff]
    %v3409 = vld [vmem:[#allocation3 + $0x18] sm:$0xff]
    %v3410 = vld [vmem:[#allocation3 + $0x20] sm:$0xff]
    %v3411 = vld [vmem:[#allocation3 + $0x28] sm:$0xff]
    %v3412 = vld [vmem:[#allocation3 + $0x30] sm:$0xff]
    %v3413 = vld [vmem:[#allocation3 + $0x38] sm:$0xff]
    %v3414 = vld [vmem:[#allocation3 + $0x40] sm:$0xff]
    %v3415 = vld [vmem:[#allocation3 + $0x48] sm:$0xff]
    %v3416 = vld [vmem:[#allocation3 + $0x50] sm:$0xff]
    %v3417 = vld [vmem:[#allocation3 + $0x58] sm:$0xff]
    %v3418 = vld [vmem:[#allocation3 + $0x60] sm:$0xff]
    %v3419 = vld [vmem:[#allocation3 + $0x68] sm:$0xff]
    %v3420 = vld [vmem:[#allocation3 + $0x70] sm:$0xff]
    %v3421 = vld [vmem:[#allocation3 + $0x78] sm:$0xff]
    %v3422 = vld [vmem:[#allocation3 + $0x80] sm:$0xff]
    %v3423 = vld [vmem:[#allocation3 + $0x88] sm:$0xff]
    %v3424 = vld [vmem:[#allocation3 + $0x90] sm:$0xff]
    %v3425 = vld [vmem:[#allocation3 + $0x98] sm:$0xff]
    %v3426 = vld [vmem:[#allocation3 + $0xa0] sm:$0xff]
    %v3427 = vld [vmem:[#allocation3 + $0xa8] sm:$0xff]
    %v3428 = vld [vmem:[#allocation3 + $0xb0] sm:$0xff]
    %v3429 = vld [vmem:[#allocation3 + $0xb8] sm:$0xff]
    %v3430 = vld [vmem:[#allocation3 + $0xc0] sm:$0xff]
    %v3431 = vld [vmem:[#allocation3 + $0xc8] sm:$0xff]
    %v3432 = vld [vmem:[#allocation3 + $0xd0] sm:$0xff]
    %v3433 = vld [vmem:[#allocation3 + $0xd8] sm:$0xff]
    %v3434 = vld [vmem:[#allocation3 + $0xe0] sm:$0xff]
    %v3435 = vld [vmem:[#allocation3 + $0xe8] sm:$0xff]
    %v3436 = vld [vmem:[#allocation3 + $0xf0] sm:$0xff]
    %v3437 = vld [vmem:[#allocation3 + $0xf8] sm:$0xff]
    %v3438 = vld [vmem:[#allocation3 + $0x100] sm:$0xff]
    %v3439 = vld [vmem:[#allocation3 + $0x108] sm:$0xff]
    %v3440 = vld [vmem:[#allocation3 + $0x110] sm:$0xff]
    %v3441 = vld [vmem:[#allocation3 + $0x118] sm:$0xff]
    %v3442 = vld [vmem:[#allocation3 + $0x120] sm:$0xff]
    %v3443 = vld [vmem:[#allocation3 + $0x128] sm:$0xff]
    %v3444 = vld [vmem:[#allocation3 + $0x130] sm:$0xff]
    %v3445 = vld [vmem:[#allocation3 + $0x138] sm:$0xff]
    %v3446 = vld [vmem:[#allocation3 + $0x140] sm:$0xff]
    %v3447 = vld [vmem:[#allocation3 + $0x148] sm:$0xff]
    %v3448 = vld [vmem:[#allocation3 + $0x150] sm:$0xff]
    %v3449 = vld [vmem:[#allocation3 + $0x158] sm:$0xff]
    %v3450 = vld [vmem:[#allocation3 + $0x160] sm:$0xff]
    %v3451 = vld [vmem:[#allocation3 + $0x168] sm:$0xff]
    %v3452 = vld [vmem:[#allocation3 + $0x170] sm:$0xff]
    %v3453 = vld [vmem:[#allocation3 + $0x178] sm:$0xff]
    %v3454 = vld [vmem:[#allocation3 + $0x180] sm:$0xff]
    %v3455 = vld [vmem:[#allocation3 + $0x188] sm:$0xff]
    %v3456 = vld [vmem:[#allocation3 + $0x190] sm:$0xff]
    %v3457 = vld [vmem:[#allocation3 + $0x198] sm:$0xff]
    %v3458 = vld [vmem:[#allocation3 + $0x1a0] sm:$0xff]
    %v3459 = vld [vmem:[#allocation3 + $0x1a8] sm:$0xff]
    %v3460 = vld [vmem:[#allocation3 + $0x1b0] sm:$0xff]
    %v3461 = vld [vmem:[#allocation3 + $0x1b8] sm:$0xff]
    %v3462 = vld [vmem:[#allocation3 + $0x1c0] sm:$0xff]
    %v3463 = vld [vmem:[#allocation3 + $0x1c8] sm:$0xff]
    %v3464 = vld [vmem:[#allocation3 + $0x1d0] sm:$0xff]
    %v3465 = vld [vmem:[#allocation3 + $0x1d8] sm:$0xff]
    %v3466 = vld [vmem:[#allocation3 + $0x1e0] sm:$0xff]
    %v3467 = vld [vmem:[#allocation3 + $0x1e8] sm:$0xff]
    %v3468 = vld [vmem:[#allocation3 + $0x1f0] sm:$0xff]
    %v3469 = vld [vmem:[#allocation3 + $0x1f8] sm:$0xff]
    %v3470 = vld [vmem:[#allocation3 + $0x200] sm:$0xff]
    %v3471 = vld [vmem:[#allocation3 + $0x208] sm:$0xff]
    %v3472 = vld [vmem:[#allocation3 + $0x210] sm:$0xff]
    %v3473 = vld [vmem:[#allocation3 + $0x218] sm:$0xff]
    %v3474 = vld [vmem:[#allocation3 + $0x220] sm:$0xff]
    %v3475 = vld [vmem:[#allocation3 + $0x228] sm:$0xff]
    %v3476 = vld [vmem:[#allocation3 + $0x230] sm:$0xff]
    %v3477 = vld [vmem:[#allocation3 + $0x238] sm:$0xff]
    %v3478 = vld [vmem:[#allocation3 + $0x240] sm:$0xff]
    %v3479 = vld [vmem:[#allocation3 + $0x248] sm:$0xff]
    %v3480 = vld [vmem:[#allocation3 + $0x250] sm:$0x1f]
    %v3481 = vld [vmem:[#allocation3 + $0x258] sm:$0x1f]
    %v3482 = vpack.c.bf16 %v3408, %v3406
    %v3483 = vpack.c.bf16 %v3409, %v3407
    %v3484 = vpack.c.bf16 %v3412, %v3410
    %v3485 = vpack.c.bf16 %v3413, %v3411
    %v3486 = vpack.c.bf16 %v3416, %v3414
    %v3487 = vpack.c.bf16 %v3417, %v3415
    %v3488 = vpack.c.bf16 %v3420, %v3418
    %v3489 = vpack.c.bf16 %v3421, %v3419
    %v3490 = vpack.c.bf16 %v3424, %v3422
    %v3491 = vpack.c.bf16 %v3425, %v3423
    %v3492 = vpack.c.bf16 %v3428, %v3426
    %v3493 = vpack.c.bf16 %v3429, %v3427
    %v3494 = vpack.c.bf16 %v3432, %v3430
    %v3495 = vpack.c.bf16 %v3433, %v3431
    %v3496 = vpack.c.bf16 %v3436, %v3434
    %v3497 = vpack.c.bf16 %v3437, %v3435
    %v3498 = vpack.c.bf16 %v3440, %v3438
    %v3499 = vpack.c.bf16 %v3441, %v3439
    %v3500 = vpack.c.bf16 %v3444, %v3442
    %v3501 = vpack.c.bf16 %v3445, %v3443
    %v3502 = vpack.c.bf16 %v3448, %v3446
    %v3503 = vpack.c.bf16 %v3449, %v3447
    %v3504 = vpack.c.bf16 %v3452, %v3450
    %v3505 = vpack.c.bf16 %v3453, %v3451
    %v3506 = vpack.c.bf16 %v3456, %v3454
    %v3507 = vpack.c.bf16 %v3457, %v3455
    %v3508 = vpack.c.bf16 %v3460, %v3458
    %v3509 = vpack.c.bf16 %v3461, %v3459
    %v3510 = vpack.c.bf16 %v3464, %v3462
    %v3511 = vpack.c.bf16 %v3465, %v3463
    %v3512 = vpack.c.bf16 %v3468, %v3466
    %v3513 = vpack.c.bf16 %v3469, %v3467
    %v3514 = vpack.c.bf16 %v3472, %v3470
    %v3515 = vpack.c.bf16 %v3473, %v3471
    %v3516 = vpack.c.bf16 %v3476, %v3474
    %v3517 = vpack.c.bf16 %v3477, %v3475
    %v3518 = vpack.c.bf16 %v3480, %v3478
    %v3519 = vpack.c.bf16 %v3481, %v3479
    %v3528 = vunpack.c.l.b16 %v3398
    %v3529 = vunpack.c.h.b16 %v3398
    %v3530 = vunpack.c.l.b16 %v3399
    %v3531 = vunpack.c.l.b16 %v3400
    %v3532 = vunpack.c.h.b16 %v3400
    %v3533 = vunpack.c.l.b16 %v3401
    %v3534 = vunpack.c.l.b16 %v3402
    %v3535 = vunpack.c.h.b16 %v3402
    %v3536 = vunpack.c.l.b16 %v3403
    %v3537 = vunpack.c.l.b16 %v3404
    %v3538 = vunpack.c.h.b16 %v3404
    %v3539 = vunpack.c.l.b16 %v3405
    %v3540 = vpack.c.b16 %v3531, %v3528
    %v3541 = vpack.c.b16 %v3532, %v3529
    %v3542 = vpack.c.b16 %v3533, %v3530
    %v3543 = vpack.c.b16 %v3537, %v3534
    %v3544 = vpack.c.b16 %v3538, %v3535
    %v3545 = vpack.c.b16 %v3539, %v3536
    %vm3550 = vcmask 367616
    %v3552 = vsel %vm3550, %v3542, 0
    %v3555 = vsel %vm3550, %v3545, 0
    %vm3557 = vcmask 1046528
    %v3558 = vsel %vm2744, 4294967295, 65535
    %v3559 = vsel %vm3557, %v3558, 0
    %v3561 = vand.u32 %v3518, %v3559
    %v3564 = vand.u32 %v3519, %v3559
    %3566 = vmatprep.subr.bf16.mxu0 %v3497
    %3567 = vmatpush1.bf16.msra.mxu0 %v3496
    %3568 = vmatprep.subr.bf16.mxu0 %v3495
    %3569 = vmatpush1.bf16.msra.mxu0 %v3494
    %3570 = vmatprep.subr.bf16.mxu0 %v3493
    %3571 = vmatpush1.bf16.msra.mxu0 %v3492
    %3572 = vmatprep.subr.bf16.mxu0 %v3491
    %3573 = vmatpush1.bf16.msra.mxu0 %v3490
    %3574 = vmatprep.subr.bf16.mxu0 %v3489
    %3575 = vmatpush1.bf16.msra.mxu0 %v3488
    %3576 = vmatprep.subr.bf16.mxu0 %v3487
    %3577 = vmatpush1.bf16.msra.mxu0 %v3486
    %3578 = vmatprep.subr.bf16.mxu0 %v3485
    %3579 = vmatpush1.bf16.msra.mxu0 %v3484
    %3580 = vmatprep.subr.bf16.mxu0 %v3483
    %3581 = vmatpush1.bf16.msra.mxu0 %v3482
    %3582 = vmatprep.subr.bf16.mxu0 %v3513
    %3583 = vmatpush2.bf16.msra.mxu0 %v3512
    %3584 = vmatprep.subr.bf16.mxu0 %v3511
    %3585 = vmatpush2.bf16.msra.mxu0 %v3510
    %3586 = vmatprep.subr.bf16.mxu0 %v3509
    %3587 = vmatpush2.bf16.msra.mxu0 %v3508
    %3588 = vmatprep.subr.bf16.mxu0 %v3507
    %3589 = vmatpush2.bf16.msra.mxu0 %v3506
    %3590 = vmatprep.subr.bf16.mxu0 %v3505
    %3591 = vmatpush2.bf16.msra.mxu0 %v3504
    %3592 = vmatprep.subr.bf16.mxu0 %v3503
    %3593 = vmatpush2.bf16.msra.mxu0 %v3502
    %3594 = vmatprep.subr.bf16.mxu0 %v3501
    %3595 = vmatpush2.bf16.msra.mxu0 %v3500
    %3596 = vmatprep.subr.bf16.mxu0 %v3499
    %3597 = vmatpush2.bf16.msra.mxu0 %v3498
    %3598 = vmatprep.mubr.bf16.mxu0 %v3541
    %3599 = vmatmul.mubr.bf16.gmra.mxu0 %v3540
    %v3600 = vpop.f32.mrf.mxu0
    %v3601 = vadd.f32 0.0, %v3600
    %v3602 = vpop.f32.mrf.mxu0
    %v3603 = vadd.f32 0.0, %v3602
    %v3604 = vpop.f32.mrf.mxu0
    %v3605 = vadd.f32 0.0, %v3604
    %v3606 = vpop.f32.mrf.mxu0
    %v3607 = vadd.f32 0.0, %v3606
    %3608 = vmatprep.mubr.bf16.mxu0 %v3544
    %3609 = vmatmul.mubr.bf16.gmra.mxu0 %v3543
    %v3610 = vpop.f32.mrf.mxu0
    %v3611 = vadd.f32 0.0, %v3610
    %v3612 = vpop.f32.mrf.mxu0
    %v3613 = vadd.f32 0.0, %v3612
    %v3614 = vpop.f32.mrf.mxu0
    %v3615 = vadd.f32 0.0, %v3614
    %v3616 = vpop.f32.mrf.mxu0
    %v3617 = vadd.f32 0.0, %v3616
    %3618 = vdwg.mxu0
    %3619 = vmatprep.subr.bf16.mxu0 0
    %3620 = vmatpush1.bf16.msra.mxu0 0
    %3621 = vmatprep.subr.bf16.mxu0 0
    %3622 = vmatpush1.bf16.msra.mxu0 0
    %3623 = vmatprep.subr.bf16.mxu0 0
    %3624 = vmatpush1.bf16.msra.mxu0 0
    %3625 = vmatprep.subr.bf16.mxu0 0
    %3626 = vmatpush1.bf16.msra.mxu0 0
    %3627 = vmatprep.subr.bf16.mxu0 0
    %3628 = vmatpush1.bf16.msra.mxu0 0
    %3629 = vmatprep.subr.bf16.mxu0 %v3564
    %3630 = vmatpush1.bf16.msra.mxu0 %v3561
    %3631 = vmatprep.subr.bf16.mxu0 %v3517
    %3632 = vmatpush1.bf16.msra.mxu0 %v3516
    %3633 = vmatprep.subr.bf16.mxu0 %v3515
    %3634 = vmatpush1.bf16.msra.mxu0 %v3514
    %3635 = vmatprep.subr.bf16.mxu0 0
    %3636 = vmatpush2.bf16.msra.mxu0 0
    %3637 = vmatprep.subr.bf16.mxu0 0
    %3638 = vmatpush2.bf16.msra.mxu0 0
    %3639 = vmatprep.subr.bf16.mxu0 0
    %3640 = vmatpush2.bf16.msra.mxu0 0
    %3641 = vmatprep.subr.bf16.mxu0 0
    %3642 = vmatpush2.bf16.msra.mxu0 0
    %3643 = vmatprep.subr.bf16.mxu0 0
    %3644 = vmatpush2.bf16.msra.mxu0 0
    %3645 = vmatprep.subr.bf16.mxu0 0
    %3646 = vmatpush2.bf16.msra.mxu0 0
    %3647 = vmatprep.subr.bf16.mxu0 0
    %3648 = vmatpush2.bf16.msra.mxu0 0
    %3649 = vmatprep.subr.bf16.mxu0 0
    %3650 = vmatpush2.bf16.msra.mxu0 0
    %3651 = vmatprep.mubr.bf16.mxu0 0
    %3652 = vmatmul.mubr.bf16.gmra.mxu0 %v3552
    %v3653 = vpop.f32.mrf.mxu0
    %v3654 = vadd.f32 %v3601, %v3653
    %v3655 = vpop.f32.mrf.mxu0
    %v3656 = vadd.f32 %v3603, %v3655
    %v3657 = vpop.f32.mrf.mxu0
    %v3658 = vadd.f32 %v3605, %v3657
    %v3659 = vpop.f32.mrf.mxu0
    %v3660 = vadd.f32 %v3607, %v3659
    %3661 = vmatprep.mubr.bf16.mxu0 0
    %3662 = vmatmul.mubr.bf16.gmra.mxu0 %v3555
    %v3663 = vpop.f32.mrf.mxu0
    %v3664 = vadd.f32 %v3611, %v3663
    %v3665 = vpop.f32.mrf.mxu0
    %v3666 = vadd.f32 %v3613, %v3665
    %v3667 = vpop.f32.mrf.mxu0
    %v3668 = vadd.f32 %v3615, %v3667
    %v3669 = vpop.f32.mrf.mxu0
    %v3670 = vadd.f32 %v3617, %v3669
    %3671 = vdwg.mxu0
    %v3672 = vmax.f32 %v3654, 0.0
    %v3673 = vmax.f32 %v3656, 0.0
    %v3674 = vmax.f32 %v3658, 0.0
    %v3675 = vmax.f32 %v3660, 0.0
    %v3676 = vmax.f32 %v3664, 0.0
    %v3677 = vmax.f32 %v3666, 0.0
    %v3678 = vmax.f32 %v3668, 0.0
    %v3679 = vmax.f32 %v3670, 0.0
    %3688 = vrot.lane.b32.xlu0 %v3672, 127
    %v3689 = vpop.permute.xlu0 %3688
    %3690 = vrot.lane.b32.xlu0 %v3673, 127
    %v3691 = vpop.permute.xlu0 %3690
    %3692 = vrot.lane.b32.xlu0 %v3674, 127
    %v3693 = vpop.permute.xlu0 %3692
    %3694 = vrot.lane.b32.xlu0 %v3675, 127
    %v3695 = vpop.permute.xlu0 %3694
    %3696 = vrot.lane.b32.xlu0 %v3676, 127
    %v3697 = vpop.permute.xlu0 %3696
    %3698 = vrot.lane.b32.xlu0 %v3677, 127
    %v3699 = vpop.permute.xlu0 %3698
    %3700 = vrot.lane.b32.xlu0 %v3678, 127
    %v3701 = vpop.permute.xlu0 %3700
    %3702 = vrot.lane.b32.xlu0 %v3679, 127
    %v3703 = vpop.permute.xlu0 %3702
    %v3704 = vsel %vm84, %v3689, %v3691
    %v3705 = vsel %vm84, %v3693, %v3695
    %v3706 = vsel %vm84, %v3697, %v3699
    %v3707 = vsel %vm84, %v3701, %v3703
    %v3716 = vmax.f32 %v3672, %v3704
    %v3717 = vmax.f32 %v3673, %v3691
    %v3718 = vmax.f32 %v3674, %v3705
    %v3719 = vmax.f32 %v3675, %v3695
    %v3720 = vmax.f32 %v3676, %v3706
    %v3721 = vmax.f32 %v3677, %v3699
    %v3722 = vmax.f32 %v3678, %v3707
    %v3723 = vmax.f32 %v3679, %v3703
    %3732 = vrot.lane.b32.xlu0 %v3716, 114
    %v3733 = vpop.permute.xlu0 %3732
    %3734 = vrot.lane.b32.xlu0 %v3717, 114
    %v3735 = vpop.permute.xlu0 %3734
    %3736 = vrot.lane.b32.xlu0 %v3718, 114
    %v3737 = vpop.permute.xlu0 %3736
    %3738 = vrot.lane.b32.xlu0 %v3719, 114
    %v3739 = vpop.permute.xlu0 %3738
    %3740 = vrot.lane.b32.xlu0 %v3720, 114
    %v3741 = vpop.permute.xlu0 %3740
    %3742 = vrot.lane.b32.xlu0 %v3721, 114
    %v3743 = vpop.permute.xlu0 %3742
    %3744 = vrot.lane.b32.xlu0 %v3722, 114
    %v3745 = vpop.permute.xlu0 %3744
    %3746 = vrot.lane.b32.xlu0 %v3723, 114
    %v3747 = vpop.permute.xlu0 %3746
    %v3748 = vsel %vm3022, %v3733, %v3735
    %v3749 = vsel %vm3022, %v3737, %v3739
    %v3750 = vsel %vm3022, %v3741, %v3743
    %v3751 = vsel %vm3022, %v3745, %v3747
    %v3756 = vmax.f32 %v3716, %v3748
    %v3757 = vmax.f32 %v3718, %v3749
    %v3758 = vmax.f32 %v3720, %v3750
    %v3759 = vmax.f32 %v3722, %v3751
    %v3760 = vpack.c.bf16 %v3757, %v3756
    %v3761 = vpack.c.bf16 %v3759, %v3758
    %v3762 = vld [vmem:[%s4] sm:$0xf]
    %v3763 = vld [vmem:[%s4 + $0x4] sm:$0xf]
    %v3764 = vld [vmem:[%s4 + $0x8] sm:$0xf]
    %v3765 = vld [vmem:[%s4 + $0xc] sm:$0xf]
    %v3766 = vld [vmem:[%s4 + $0x10] sm:$0xf]
    %v3767 = vld [vmem:[%s4 + $0x14] sm:$0xf]
    %v3768 = vld [vmem:[%s4 + $0x18] sm:$0xf]
    %v3769 = vld [vmem:[%s4 + $0x1c] sm:$0xf]
    %v3770 = vld [vmem:[%s4 + $0x20] sm:$0xf]
    %v3771 = vld [vmem:[%s4 + $0x24] sm:$0xf]
    %v3772 = vld [vmem:[%s4 + $0x28] sm:$0xf]
    %v3773 = vld [vmem:[%s4 + $0x2c] sm:$0xf]
    %v3774 = vld [vmem:[%s4 + $0x30] sm:$0xf]
    %v3775 = vld [vmem:[%s4 + $0x34] sm:$0xf]
    %v3776 = vld [vmem:[%s4 + $0x38] sm:$0xf]
    %v3777 = vld [vmem:[%s4 + $0x3c] sm:$0x1]
    %v3794 = vunpack.c.l.b16 %v3762
    %v3795 = vunpack.c.l.b16 %v3763
    %v3796 = vunpack.c.l.b16 %v3764
    %v3797 = vunpack.c.l.b16 %v3765
    %v3798 = vunpack.c.l.b16 %v3766
    %v3799 = vunpack.c.l.b16 %v3767
    %v3800 = vunpack.c.l.b16 %v3768
    %v3801 = vunpack.c.l.b16 %v3769
    %v3802 = vunpack.c.l.b16 %v3770
    %v3803 = vunpack.c.l.b16 %v3771
    %v3804 = vunpack.c.l.b16 %v3772
    %v3805 = vunpack.c.l.b16 %v3773
    %v3806 = vunpack.c.l.b16 %v3774
    %v3807 = vunpack.c.l.b16 %v3775
    %v3808 = vunpack.c.l.b16 %v3776
    %v3809 = vunpack.c.l.b16 %v3777
    %v3810 = vpack.c.b16 %v3795, %v3794
    %v3811 = vpack.c.b16 %v3797, %v3796
    %v3812 = vpack.c.b16 %v3799, %v3798
    %v3813 = vpack.c.b16 %v3801, %v3800
    %v3814 = vpack.c.b16 %v3803, %v3802
    %v3815 = vpack.c.b16 %v3805, %v3804
    %v3816 = vpack.c.b16 %v3807, %v3806
    %v3817 = vpack.c.b16 %v3809, %v3808
    %vm3825 = vcmask 990208
    %v3827 = vsel %vm3825, %v3760, 0
    %v3830 = vsel %vm3825, %v3761, 0
    %v3832 = vsel %vm1714, 4294967295, 65535
    %v3833 = vsel %vm2743, %v3832, 0
    %v3835 = vand.u32 %v3817, %v3833
    %3837 = vmatprep.subr.bf16.mxu0 0
    %3838 = vmatpush1.bf16.msra.mxu0 %v3835
    %3839 = vmatprep.subr.bf16.mxu0 0
    %3840 = vmatpush1.bf16.msra.mxu0 %v3816
    %3841 = vmatprep.subr.bf16.mxu0 0
    %3842 = vmatpush1.bf16.msra.mxu0 %v3815
    %3843 = vmatprep.subr.bf16.mxu0 0
    %3844 = vmatpush1.bf16.msra.mxu0 %v3814
    %3845 = vmatprep.subr.bf16.mxu0 0
    %3846 = vmatpush1.bf16.msra.mxu0 %v3813
    %3847 = vmatprep.subr.bf16.mxu0 0
    %3848 = vmatpush1.bf16.msra.mxu0 %v3812
    %3849 = vmatprep.subr.bf16.mxu0 0
    %3850 = vmatpush1.bf16.msra.mxu0 %v3811
    %3851 = vmatprep.subr.bf16.mxu0 0
    %3852 = vmatpush1.bf16.msra.mxu0 %v3810
    %3853 = vmatprep.subr.bf16.mxu0 0
    %3854 = vmatpush2.bf16.msra.mxu0 0
    %3855 = vmatprep.subr.bf16.mxu0 0
    %3856 = vmatpush2.bf16.msra.mxu0 0
    %3857 = vmatprep.subr.bf16.mxu0 0
    %3858 = vmatpush2.bf16.msra.mxu0 0
    %3859 = vmatprep.subr.bf16.mxu0 0
    %3860 = vmatpush2.bf16.msra.mxu0 0
    %3861 = vmatprep.subr.bf16.mxu0 0
    %3862 = vmatpush2.bf16.msra.mxu0 0
    %3863 = vmatprep.subr.bf16.mxu0 0
    %3864 = vmatpush2.bf16.msra.mxu0 0
    %3865 = vmatprep.subr.bf16.mxu0 0
    %3866 = vmatpush2.bf16.msra.mxu0 0
    %3867 = vmatprep.subr.bf16.mxu0 0
    %3868 = vmatpush2.bf16.msra.mxu0 0
    %3869 = vmatprep.mubr.bf16.mxu0 0
    %3870 = vmatmul.mubr.bf16.gmra.mxu0 %v3827
    %v3871 = vpop.f32.mrf.mxu0
    %v3872 = vadd.f32 0.0, %v3871
    %v3873 = vpop.f32.mrf.mxu0
    %v3874 = vpop.f32.mrf.mxu0
    %v3875 = vadd.f32 0.0, %v3874
    %v3876 = vpop.f32.mrf.mxu0
    %3877 = vmatprep.mubr.bf16.mxu0 0
    %3878 = vmatmul.mubr.bf16.gmra.mxu0 %v3830
    %v3879 = vpop.f32.mrf.mxu0
    %v3880 = vadd.f32 0.0, %v3879
    %v3881 = vpop.f32.mrf.mxu0
    %v3882 = vpop.f32.mrf.mxu0
    %v3883 = vadd.f32 0.0, %v3882
    %v3884 = vpop.f32.mrf.mxu0
    %3885 = vdwg.mxu0
    %vm3886 = vcmask 197632
    %3887 = vst.msk [vmem:[#allocation4] sm:$0x3] %vm3886, %v3872
    %v3890 = vunpack.c.l.s4 1983009808
    %v3891 = vunpack.c.0.s8 %v3890
    %v3892 = vlaneseq
    %v3893 = vshrl.u32 %v3892, 7
    %v3894 = vsub.s32 %v3891, %v3893
    %v3895 = vrot.slane %v3872, %v3894
    %v3896 = vcombine.high %v3895, %v3895
    %3897 = vrot.lane.b32.xlu0 %v3896, 25
    %v3898 = vpop.permute.xlu0 %3897
    %vm3900 = vcmask 402632
    %3901 = vst.msk [vmem:[#allocation4] sm:$0x3] %vm3900, %v3898
    %v3902 = vcombine.high %v3872, %v3872
    %v3904 = vunpack.c.l.s4 1983009808
    %v3905 = vunpack.c.0.s8 %v3904
    %v3906 = vlaneseq
    %v3907 = vshrl.u32 %v3906, 7
    %v3908 = vsub.s32 %v3905, %v3907
    %v3909 = vrot.slane %v3902, %v3908
    %3910 = vrot.lane.b32.xlu0 %v3909, 50
    %v3911 = vpop.permute.xlu0 %3910
    %vm3913 = vcmask 607632
    %3914 = vst.msk [vmem:[#allocation4] sm:$0x3] %vm3913, %v3911
    %v3915 = vcombine.high %v3909, %v3909
    %3916 = vrot.lane.b32.xlu0 %v3915, 75
    %v3917 = vpop.permute.xlu0 %3916
    %vm3919 = vcmask 812632
    %3920 = vst.msk [vmem:[#allocation4] sm:$0x3] %vm3919, %v3917
    %v3923 = vunpack.c.l.s4 1983009808
    %v3924 = vunpack.c.0.s8 %v3923
    %v3925 = vlaneseq
    %v3926 = vshrl.u32 %v3925, 7
    %v3927 = vsub.s32 %v3924, %v3926
    %v3928 = vrot.slane %v3875, %v3927
    %3929 = vrot.lane.b32.xlu0 %v3928, 100
    %v3930 = vpop.permute.xlu0 %3929
    %vm3932 = vcmask 1017632
    %3933 = vst.msk [vmem:[#allocation4] sm:$0x3] %vm3932, %v3930
    %v3934 = vcombine.high %v3928, %v3928
    %3935 = vrot.lane.b32.xlu0 %v3934, 125
    %v3936 = vpop.permute.xlu0 %3935
    %v3937 = vrot.slane %v3936, 6
    %v3938 = vsel %vm214, %v3937, %v3936
    %vm3940 = vcmask 1042408
    %vm3941 = vcmask 175106
    %vm3942 = vmor %vm3941, %vm3940
    %3943 = vst.msk [vmem:[#allocation4] sm:$0xf] %vm3942, %v3938
    %v3944 = vcombine.high %v3875, %v3875
    %v3946 = vunpack.c.l.s4 1983009808
    %v3947 = vunpack.c.0.s8 %v3946
    %v3948 = vlaneseq
    %v3949 = vshrl.u32 %v3948, 7
    %v3950 = vsub.s32 %v3947, %v3949
    %v3951 = vrot.slane %v3944, %v3950
    %3952 = vrot.lane.b32.xlu0 %v3951, 22
    %v3953 = vpop.permute.xlu0 %3952
    %vm3955 = vcmask 378032
    %3956 = vst.msk [vmem:[#allocation4 + $0x2] sm:$0x3] %vm3955, %v3953
    %v3957 = vcombine.high %v3951, %v3951
    %3958 = vrot.lane.b32.xlu0 %v3957, 47
    %v3959 = vpop.permute.xlu0 %3958
    %vm3961 = vcmask 583032
    %3962 = vst.msk [vmem:[#allocation4 + $0x2] sm:$0x3] %vm3961, %v3959
    %v3965 = vunpack.c.l.s4 1983009808
    %v3966 = vunpack.c.0.s8 %v3965
    %v3967 = vlaneseq
    %v3968 = vshrl.u32 %v3967, 7
    %v3969 = vsub.s32 %v3966, %v3968
    %v3970 = vrot.slane %v3880, %v3969
    %3971 = vrot.lane.b32.xlu0 %v3970, 72
    %v3972 = vpop.permute.xlu0 %3971
    %vm3974 = vcmask 788032
    %3975 = vst.msk [vmem:[#allocation4 + $0x2] sm:$0x3] %vm3974, %v3972
    %v3976 = vcombine.high %v3970, %v3970
    %3977 = vrot.lane.b32.xlu0 %v3976, 97
    %v3978 = vpop.permute.xlu0 %3977
    %vm3980 = vcmask 993032
    %3981 = vst.msk [vmem:[#allocation4 + $0x2] sm:$0x3] %vm3980, %v3978
    %v3982 = vcombine.high %v3880, %v3880
    %v3984 = vunpack.c.l.s4 1983009808
    %v3985 = vunpack.c.0.s8 %v3984
    %v3986 = vlaneseq
    %v3987 = vshrl.u32 %v3986, 7
    %v3988 = vsub.s32 %v3985, %v3987
    %v3989 = vrot.slane %v3982, %v3988
    %3990 = vrot.lane.b32.xlu0 %v3989, 122
    %v3991 = vpop.permute.xlu0 %3990
    %v3992 = vrot.slane %v3991, 6
    %vm3993 = vcmask 998400
    %v3994 = vsel %vm3993, %v3992, %v3991
    %vm3996 = vcmask 1042384
    %vm3997 = vcmask 150530
    %vm3998 = vmor %vm3997, %vm3996
    %3999 = vst.msk [vmem:[#allocation4 + $0x2] sm:$0xf] %vm3998, %v3994
    %v4000 = vcombine.high %v3989, %v3989
    %4001 = vrot.lane.b32.xlu0 %v4000, 19
    %v4002 = vpop.permute.xlu0 %4001
    %vm4004 = vcmask 353432
    %4005 = vst.msk [vmem:[#allocation4 + $0x4] sm:$0x3] %vm4004, %v4002
    %v4008 = vunpack.c.l.s4 1983009808
    %v4009 = vunpack.c.0.s8 %v4008
    %v4010 = vlaneseq
    %v4011 = vshrl.u32 %v4010, 7
    %v4012 = vsub.s32 %v4009, %v4011
    %v4013 = vrot.slane %v3883, %v4012
    %4014 = vrot.lane.b32.xlu0 %v4013, 44
    %v4015 = vpop.permute.xlu0 %4014
    %vm4017 = vcmask 558432
    %4018 = vst.msk [vmem:[#allocation4 + $0x4] sm:$0x3] %vm4017, %v4015
    %v4019 = vcombine.high %v4013, %v4013
    %4020 = vrot.lane.b32.xlu0 %v4019, 69
    %v4021 = vpop.permute.xlu0 %4020
    %vm4023 = vcmask 763432
    %4024 = vst.msk [vmem:[#allocation4 + $0x4] sm:$0x3] %vm4023, %v4021
    %v4025 = vcombine.high %v3883, %v3883
    %v4027 = vunpack.c.l.s4 1983009808
    %v4028 = vunpack.c.0.s8 %v4027
    %v4029 = vlaneseq
    %v4030 = vshrl.u32 %v4029, 7
    %v4031 = vsub.s32 %v4028, %v4030
    %v4032 = vrot.slane %v4025, %v4031
    %4033 = vrot.lane.b32.xlu0 %v4032, 94
    %v4034 = vpop.permute.xlu0 %4033
    %vm4036 = vcmask 968432
    %4037 = vst.msk [vmem:[#allocation4 + $0x4] sm:$0x3] %vm4036, %v4034
    %v4038 = vcombine.high %v4032, %v4032
    %4039 = vrot.lane.b32.xlu0 %v4038, 119
    %v4040 = vpop.permute.xlu0 %4039
    %v4041 = vrot.slane %v4040, 6
    %vm4042 = vcmask 973824
    %v4043 = vsel %vm4042, %v4041, %v4040
    %vm4045 = vcmask 1042360
    %vm4046 = vcmask 125954
    %vm4047 = vmor %vm4046, %vm4045
    %4048 = vst.msk [vmem:[#allocation4 + $0x4] sm:$0xf] %vm4047, %v4043
    %vm4049 = vcmask 132224
    %4050 = vst.msk [vmem:[#allocation4 + $0x6] sm:$0x3] %vm4049, 1.0
    %v4051 = vld [vmem:[#allocation4] sm:$0xff]
    %v4053 = vcombine.high %v4051, %v4051
    %v4055 = vunpack.c.l.s4 1983009808
    %v4056 = vunpack.c.0.s8 %v4055
    %v4057 = vlaneseq
    %v4058 = vshrl.u32 %v4057, 7
    %v4059 = vsub.s32 %v4056, %v4058
    %v4060 = vrot.slane %v4051, %v4059
    %v4062 = vunpack.c.l.s4 1983009808
    %v4063 = vunpack.c.0.s8 %v4062
    %v4064 = vlaneseq
    %v4065 = vshrl.u32 %v4064, 7
    %v4066 = vsub.s32 %v4063, %v4065
    %v4067 = vrot.slane %v4053, %v4066
    %v4068 = vcombine.high %v4060, %v4060
    %v4069 = vcombine.high %v4067, %v4067
    %v4074 = vpack.c.bf16 %v4060, %v4060
    %v4075 = vpack.c.bf16 %v4068, %v4068
    %v4076 = vpack.c.bf16 %v4067, %v4067
    %v4077 = vpack.c.bf16 %v4069, %v4069
    %v4078 = vld [vmem:[%s5] sm:$0xf]
    %v4079 = vld [vmem:[%s5 + $0x4] sm:$0xf]
    %v4080 = vld [vmem:[%s5 + $0x8] sm:$0xf]
    %v4081 = vld [vmem:[%s5 + $0xc] sm:$0xf]
    %v4082 = vld [vmem:[%s5 + $0x10] sm:$0xf]
    %v4083 = vld [vmem:[%s5 + $0x14] sm:$0xf]
    %v4084 = vld [vmem:[%s5 + $0x18] sm:$0xf]
    %v4085 = vld [vmem:[%s5 + $0x1c] sm:$0xf]
    %v4086 = vld [vmem:[%s5 + $0x20] sm:$0xf]
    %v4087 = vld [vmem:[%s5 + $0x24] sm:$0xf]
    %v4088 = vld [vmem:[%s5 + $0x28] sm:$0xf]
    %v4089 = vld [vmem:[%s5 + $0x2c] sm:$0xf]
    %v4090 = vld [vmem:[%s5 + $0x30] sm:$0xf]
    %v4091 = vld [vmem:[%s5 + $0x34] sm:$0xf]
    %v4092 = vld [vmem:[%s5 + $0x38] sm:$0xf]
    %v4093 = vld [vmem:[%s5 + $0x3c] sm:$0xf]
    %v4094 = vld [vmem:[%s5 + $0x40] sm:$0xf]
    %v4095 = vld [vmem:[%s5 + $0x44] sm:$0xf]
    %v4096 = vld [vmem:[%s5 + $0x48] sm:$0xf]
    %v4097 = vld [vmem:[%s5 + $0x4c] sm:$0xf]
    %v4098 = vld [vmem:[%s5 + $0x50] sm:$0xf]
    %v4099 = vld [vmem:[%s5 + $0x54] sm:$0xf]
    %v4100 = vld [vmem:[%s5 + $0x58] sm:$0xf]
    %v4101 = vld [vmem:[%s5 + $0x5c] sm:$0xf]
    %v4102 = vld [vmem:[%s5 + $0x60] sm:$0xf]
    %v4103 = vld [vmem:[%s5 + $0x64] sm:$0xf]
    %v4104 = vld [vmem:[%s5 + $0x68] sm:$0xf]
    %v4105 = vld [vmem:[%s5 + $0x6c] sm:$0xf]
    %v4106 = vld [vmem:[%s5 + $0x70] sm:$0xf]
    %v4107 = vld [vmem:[%s5 + $0x74] sm:$0xf]
    %v4108 = vld [vmem:[%s5 + $0x78] sm:$0xf]
    %v4109 = vld [vmem:[%s5 + $0x7c] sm:$0xf]
    %v4110 = vld [vmem:[%s5 + $0x80] sm:$0xf]
    %v4111 = vld [vmem:[%s5 + $0x84] sm:$0xf]
    %v4112 = vld [vmem:[%s5 + $0x88] sm:$0xf]
    %v4113 = vld [vmem:[%s5 + $0x8c] sm:$0xf]
    %v4114 = vld [vmem:[%s5 + $0x90] sm:$0xf]
    %v4115 = vld [vmem:[%s5 + $0x94] sm:$0xf]
    %v4116 = vld [vmem:[%s5 + $0x98] sm:$0xf]
    %v4117 = vld [vmem:[%s5 + $0x9c] sm:$0xf]
    %v4118 = vld [vmem:[%s5 + $0xa0] sm:$0xf]
    %v4119 = vld [vmem:[%s5 + $0xa4] sm:$0xf]
    %v4120 = vld [vmem:[%s5 + $0xa8] sm:$0xf]
    %v4121 = vld [vmem:[%s5 + $0xac] sm:$0xf]
    %v4122 = vld [vmem:[%s5 + $0xb0] sm:$0xf]
    %v4123 = vld [vmem:[%s5 + $0xb4] sm:$0xf]
    %v4124 = vld [vmem:[%s5 + $0xb8] sm:$0xf]
    %v4125 = vld [vmem:[%s5 + $0xbc] sm:$0xf]
    %v4126 = vld [vmem:[%s5 + $0xc0] sm:$0xf]
    %v4127 = vld [vmem:[%s5 + $0xc4] sm:$0xf]
    %v4128 = vld [vmem:[%s5 + $0xc8] sm:$0x1]
    %v4180 = vunpack.c.l.b16 %v4078
    %v4181 = vunpack.c.l.b16 %v4079
    %v4182 = vunpack.c.l.b16 %v4080
    %v4183 = vunpack.c.l.b16 %v4081
    %v4184 = vunpack.c.l.b16 %v4082
    %v4185 = vunpack.c.l.b16 %v4083
    %v4186 = vunpack.c.l.b16 %v4084
    %v4187 = vunpack.c.l.b16 %v4085
    %v4188 = vunpack.c.l.b16 %v4086
    %v4189 = vunpack.c.l.b16 %v4087
    %v4190 = vunpack.c.l.b16 %v4088
    %v4191 = vunpack.c.l.b16 %v4089
    %v4192 = vunpack.c.l.b16 %v4090
    %v4193 = vunpack.c.l.b16 %v4091
    %v4194 = vunpack.c.l.b16 %v4092
    %v4195 = vunpack.c.l.b16 %v4093
    %v4196 = vunpack.c.l.b16 %v4094
    %v4197 = vunpack.c.l.b16 %v4095
    %v4198 = vunpack.c.l.b16 %v4096
    %v4199 = vunpack.c.l.b16 %v4097
    %v4200 = vunpack.c.l.b16 %v4098
    %v4201 = vunpack.c.l.b16 %v4099
    %v4202 = vunpack.c.l.b16 %v4100
    %v4203 = vunpack.c.l.b16 %v4101
    %v4204 = vunpack.c.l.b16 %v4102
    %v4205 = vunpack.c.l.b16 %v4103
    %v4206 = vunpack.c.l.b16 %v4104
    %v4207 = vunpack.c.l.b16 %v4105
    %v4208 = vunpack.c.l.b16 %v4106
    %v4209 = vunpack.c.l.b16 %v4107
    %v4210 = vunpack.c.l.b16 %v4108
    %v4211 = vunpack.c.l.b16 %v4109
    %v4212 = vunpack.c.l.b16 %v4110
    %v4213 = vunpack.c.l.b16 %v4111
    %v4214 = vunpack.c.l.b16 %v4112
    %v4215 = vunpack.c.l.b16 %v4113
    %v4216 = vunpack.c.l.b16 %v4114
    %v4217 = vunpack.c.l.b16 %v4115
    %v4218 = vunpack.c.l.b16 %v4116
    %v4219 = vunpack.c.l.b16 %v4117
    %v4220 = vunpack.c.l.b16 %v4118
    %v4221 = vunpack.c.l.b16 %v4119
    %v4222 = vunpack.c.l.b16 %v4120
    %v4223 = vunpack.c.l.b16 %v4121
    %v4224 = vunpack.c.l.b16 %v4122
    %v4225 = vunpack.c.l.b16 %v4123
    %v4226 = vunpack.c.l.b16 %v4124
    %v4227 = vunpack.c.l.b16 %v4125
    %v4228 = vunpack.c.l.b16 %v4126
    %v4229 = vunpack.c.l.b16 %v4127
    %v4230 = vunpack.c.l.b16 %v4128
    %v4231 = vpack.c.b16 %v4181, %v4180
    %v4232 = vpack.c.b16 %v4183, %v4182
    %v4233 = vpack.c.b16 %v4185, %v4184
    %v4234 = vpack.c.b16 %v4187, %v4186
    %v4235 = vpack.c.b16 %v4189, %v4188
    %v4236 = vpack.c.b16 %v4191, %v4190
    %v4237 = vpack.c.b16 %v4193, %v4192
    %v4238 = vpack.c.b16 %v4195, %v4194
    %v4239 = vpack.c.b16 %v4197, %v4196
    %v4240 = vpack.c.b16 %v4199, %v4198
    %v4241 = vpack.c.b16 %v4201, %v4200
    %v4242 = vpack.c.b16 %v4203, %v4202
    %v4243 = vpack.c.b16 %v4205, %v4204
    %v4244 = vpack.c.b16 %v4207, %v4206
    %v4245 = vpack.c.b16 %v4209, %v4208
    %v4246 = vpack.c.b16 %v4211, %v4210
    %v4247 = vpack.c.b16 %v4213, %v4212
    %v4248 = vpack.c.b16 %v4215, %v4214
    %v4249 = vpack.c.b16 %v4217, %v4216
    %v4250 = vpack.c.b16 %v4219, %v4218
    %v4251 = vpack.c.b16 %v4221, %v4220
    %v4252 = vpack.c.b16 %v4223, %v4222
    %v4253 = vpack.c.b16 %v4225, %v4224
    %v4254 = vpack.c.b16 %v4227, %v4226
    %v4255 = vpack.c.b16 %v4229, %v4228
    %v4256 = vpack.c.b16 %v4230, %v4230
    %vm4282 = vcmask 138240
    %v4284 = vsel %vm4282, %v4077, 0
    %vm4286 = vcmask 1040384
    %v4287 = vsel 0, 4294967295, 65535
    %v4288 = vsel %vm4286, %v4287, 0
    %v4290 = vand.u32 %v4256, %v4288
    %4292 = vmatprep.subr.bf16.mxu0 0
    %4293 = vmatpush1.bf16.msra.mxu0 %v4238
    %4294 = vmatprep.subr.bf16.mxu0 0
    %4295 = vmatpush1.bf16.msra.mxu0 %v4237
    %4296 = vmatprep.subr.bf16.mxu0 0
    %4297 = vmatpush1.bf16.msra.mxu0 %v4236
    %4298 = vmatprep.subr.bf16.mxu0 0
    %4299 = vmatpush1.bf16.msra.mxu0 %v4235
    %4300 = vmatprep.subr.bf16.mxu0 0
    %4301 = vmatpush1.bf16.msra.mxu0 %v4234
    %4302 = vmatprep.subr.bf16.mxu0 0
    %4303 = vmatpush1.bf16.msra.mxu0 %v4233
    %4304 = vmatprep.subr.bf16.mxu0 0
    %4305 = vmatpush1.bf16.msra.mxu0 %v4232
    %4306 = vmatprep.subr.bf16.mxu0 0
    %4307 = vmatpush1.bf16.msra.mxu0 %v4231
    %4308 = vmatprep.subr.bf16.mxu0 0
    %4309 = vmatpush2.bf16.msra.mxu0 %v4246
    %4310 = vmatprep.subr.bf16.mxu0 0
    %4311 = vmatpush2.bf16.msra.mxu0 %v4245
    %4312 = vmatprep.subr.bf16.mxu0 0
    %4313 = vmatpush2.bf16.msra.mxu0 %v4244
    %4314 = vmatprep.subr.bf16.mxu0 0
    %4315 = vmatpush2.bf16.msra.mxu0 %v4243
    %4316 = vmatprep.subr.bf16.mxu0 0
    %4317 = vmatpush2.bf16.msra.mxu0 %v4242
    %4318 = vmatprep.subr.bf16.mxu0 0
    %4319 = vmatpush2.bf16.msra.mxu0 %v4241
    %4320 = vmatprep.subr.bf16.mxu0 0
    %4321 = vmatpush2.bf16.msra.mxu0 %v4240
    %4322 = vmatprep.subr.bf16.mxu0 0
    %4323 = vmatpush2.bf16.msra.mxu0 %v4239
    %4324 = vmatprep.mubr.bf16.mxu0 %v4075
    %4325 = vmatmul.mubr.bf16.gmra.mxu0 %v4074
    %v4326 = vpop.f32.mrf.mxu0
    %v4327 = vadd.f32 0.0, %v4326
    %v4328 = vpop.f32.mrf.mxu0
    %v4329 = vpop.f32.mrf.mxu0
    %v4330 = vpop.f32.mrf.mxu0
    %4331 = vdwg.mxu0
    %4332 = vmatprep.subr.bf16.mxu0 0
    %4333 = vmatpush1.bf16.msra.mxu0 %v4254
    %4334 = vmatprep.subr.bf16.mxu0 0
    %4335 = vmatpush1.bf16.msra.mxu0 %v4253
    %4336 = vmatprep.subr.bf16.mxu0 0
    %4337 = vmatpush1.bf16.msra.mxu0 %v4252
    %4338 = vmatprep.subr.bf16.mxu0 0
    %4339 = vmatpush1.bf16.msra.mxu0 %v4251
    %4340 = vmatprep.subr.bf16.mxu0 0
    %4341 = vmatpush1.bf16.msra.mxu0 %v4250
    %4342 = vmatprep.subr.bf16.mxu0 0
    %4343 = vmatpush1.bf16.msra.mxu0 %v4249
    %4344 = vmatprep.subr.bf16.mxu0 0
    %4345 = vmatpush1.bf16.msra.mxu0 %v4248
    %4346 = vmatprep.subr.bf16.mxu0 0
    %4347 = vmatpush1.bf16.msra.mxu0 %v4247
    %4348 = vmatprep.subr.bf16.mxu0 0
    %4349 = vmatpush2.bf16.msra.mxu0 0
    %4350 = vmatprep.subr.bf16.mxu0 0
    %4351 = vmatpush2.bf16.msra.mxu0 0
    %4352 = vmatprep.subr.bf16.mxu0 0
    %4353 = vmatpush2.bf16.msra.mxu0 0
    %4354 = vmatprep.subr.bf16.mxu0 0
    %4355 = vmatpush2.bf16.msra.mxu0 0
    %4356 = vmatprep.subr.bf16.mxu0 0
    %4357 = vmatpush2.bf16.msra.mxu0 0
    %4358 = vmatprep.subr.bf16.mxu0 0
    %4359 = vmatpush2.bf16.msra.mxu0 0
    %4360 = vmatprep.subr.bf16.mxu0 0
    %4361 = vmatpush2.bf16.msra.mxu0 %v4290
    %4362 = vmatprep.subr.bf16.mxu0 0
    %4363 = vmatpush2.bf16.msra.mxu0 %v4255
    %4364 = vmatprep.mubr.bf16.mxu0 %v4284
    %4365 = vmatmul.mubr.bf16.gmra.mxu0 %v4076
    %v4366 = vpop.f32.mrf.mxu0
    %v4367 = vadd.f32 %v4327, %v4366
    %v4368 = vpop.f32.mrf.mxu0
    %v4369 = vpop.f32.mrf.mxu0
    %v4370 = vpop.f32.mrf.mxu0
    %4371 = vdwg.mxu0
    %v4372 = vmax.f32 %v4367, 0.0
    %v4373 = vpack.c.bf16 %v4372, %v4372
    %v4374 = vld [vmem:[%s6] sm:$0xf]
    %v4375 = vld [vmem:[%s6 + $0x4] sm:$0xf]
    %v4376 = vld [vmem:[%s6 + $0x8] sm:$0xf]
    %v4377 = vld [vmem:[%s6 + $0xc] sm:$0xf]
    %v4378 = vld [vmem:[%s6 + $0x10] sm:$0xf]
    %v4379 = vld [vmem:[%s6 + $0x14] sm:$0xf]
    %v4380 = vld [vmem:[%s6 + $0x18] sm:$0xf]
    %v4381 = vld [vmem:[%s6 + $0x1c] sm:$0xf]
    %v4382 = vld [vmem:[%s6 + $0x20] sm:$0xf]
    %v4383 = vld [vmem:[%s6 + $0x24] sm:$0xf]
    %v4384 = vld [vmem:[%s6 + $0x28] sm:$0xf]
    %v4385 = vld [vmem:[%s6 + $0x2c] sm:$0xf]
    %v4386 = vld [vmem:[%s6 + $0x30] sm:$0xf]
    %v4387 = vld [vmem:[%s6 + $0x34] sm:$0xf]
    %v4388 = vld [vmem:[%s6 + $0x38] sm:$0xf]
    %v4389 = vld [vmem:[%s8] sm:$0x1]
    %v4391 = vlaneseq
    %v4392 = vshrl.u32 %v4391, 7
    %v4393 = vsub.s32 0, %v4392
    %v4394 = vrot.slane %v4389, %v4393
    %v4411 = vunpack.c.l.b16 %v4374
    %v4412 = vunpack.c.l.b16 %v4375
    %v4413 = vunpack.c.l.b16 %v4376
    %v4414 = vunpack.c.l.b16 %v4377
    %v4415 = vunpack.c.l.b16 %v4378
    %v4416 = vunpack.c.l.b16 %v4379
    %v4417 = vunpack.c.l.b16 %v4380
    %v4418 = vunpack.c.l.b16 %v4381
    %v4419 = vunpack.c.l.b16 %v4382
    %v4420 = vunpack.c.l.b16 %v4383
    %v4421 = vunpack.c.l.b16 %v4384
    %v4422 = vunpack.c.l.b16 %v4385
    %v4423 = vunpack.c.l.b16 %v4386
    %v4424 = vunpack.c.l.b16 %v4387
    %v4425 = vunpack.c.l.b16 %v4388
    %v4426 = vpack.c.b16 %v4412, %v4411
    %v4427 = vpack.c.b16 %v4414, %v4413
    %v4428 = vpack.c.b16 %v4416, %v4415
    %v4429 = vpack.c.b16 %v4418, %v4417
    %v4430 = vpack.c.b16 %v4420, %v4419
    %v4431 = vpack.c.b16 %v4422, %v4421
    %v4432 = vpack.c.b16 %v4424, %v4423
    %v4433 = vpack.c.b16 %v4425, %v4425
    %vm4441 = vcmask 982016
    %v4443 = vsel %vm4441, %v4373, 0
    %v4446 = vsel %vm1714, %v4433, 0
    %4448 = vmatprep.subr.bf16.mxu0 0
    %4449 = vmatpush1.bf16.msra.mxu0 %v4446
    %4450 = vmatprep.subr.bf16.mxu0 0
    %4451 = vmatpush1.bf16.msra.mxu0 %v4432
    %4452 = vmatprep.subr.bf16.mxu0 0
    %4453 = vmatpush1.bf16.msra.mxu0 %v4431
    %4454 = vmatprep.subr.bf16.mxu0 0
    %4455 = vmatpush1.bf16.msra.mxu0 %v4430
    %4456 = vmatprep.subr.bf16.mxu0 0
    %4457 = vmatpush1.bf16.msra.mxu0 %v4429
    %4458 = vmatprep.subr.bf16.mxu0 0
    %4459 = vmatpush1.bf16.msra.mxu0 %v4428
    %4460 = vmatprep.subr.bf16.mxu0 0
    %4461 = vmatpush1.bf16.msra.mxu0 %v4427
    %4462 = vmatprep.subr.bf16.mxu0 0
    %4463 = vmatpush1.bf16.msra.mxu0 %v4426
    %4464 = vmatprep.subr.bf16.mxu0 0
    %4465 = vmatpush2.bf16.msra.mxu0 0
    %4466 = vmatprep.subr.bf16.mxu0 0
    %4467 = vmatpush2.bf16.msra.mxu0 0
    %4468 = vmatprep.subr.bf16.mxu0 0
    %4469 = vmatpush2.bf16.msra.mxu0 0
    %4470 = vmatprep.subr.bf16.mxu0 0
    %4471 = vmatpush2.bf16.msra.mxu0 0
    %4472 = vmatprep.subr.bf16.mxu0 0
    %4473 = vmatpush2.bf16.msra.mxu0 0
    %4474 = vmatprep.subr.bf16.mxu0 0
    %4475 = vmatpush2.bf16.msra.mxu0 0
    %4476 = vmatprep.subr.bf16.mxu0 0
    %4477 = vmatpush2.bf16.msra.mxu0 0
    %4478 = vmatprep.subr.bf16.mxu0 0
    %4479 = vmatpush2.bf16.msra.mxu0 0
    %4480 = vmatprep.mubr.bf16.mxu0 0
    %4481 = vmatmul.mubr.bf16.gmra.mxu0 %v4443
    %v4482 = vpop.f32.mrf.mxu0
    %v4483 = vadd.f32 %v4394, %v4482
    %v4484 = vpop.f32.mrf.mxu0
    %v4485 = vpop.f32.mrf.mxu0
    %v4486 = vpop.f32.mrf.mxu0
    %4487 = vdwg.mxu0
    %v4488 = vmax.f32 %v4483, 0.0
    %v4489 = vpack.c.bf16 %v4488, %v4488
    %v4490 = vld [vmem:[%s7] sm:$0xf]
    %v4491 = vld [vmem:[%s7 + $0x4] sm:$0xf]
    %v4492 = vld [vmem:[%s7 + $0x8] sm:$0xf]
    %v4493 = vld [vmem:[%s7 + $0xc] sm:$0xf]
    %v4494 = vld [vmem:[%s7 + $0x10] sm:$0xf]
    %v4495 = vld [vmem:[%s7 + $0x14] sm:$0xf]
    %v4496 = vld [vmem:[%s7 + $0x18] sm:$0xf]
    %v4497 = vld [vmem:[%s7 + $0x1c] sm:$0xf]
    %v4498 = vld [vmem:[%s7 + $0x20] sm:$0xf]
    %v4499 = vld [vmem:[%s7 + $0x24] sm:$0xf]
    %v4500 = vld [vmem:[%s7 + $0x28] sm:$0x3]
    %v4512 = vunpack.c.l.b16 %v4490
    %v4513 = vunpack.c.l.b16 %v4491
    %v4514 = vunpack.c.l.b16 %v4492
    %v4515 = vunpack.c.l.b16 %v4493
    %v4516 = vunpack.c.l.b16 %v4494
    %v4517 = vunpack.c.l.b16 %v4495
    %v4518 = vunpack.c.l.b16 %v4496
    %v4519 = vunpack.c.l.b16 %v4497
    %v4520 = vunpack.c.l.b16 %v4498
    %v4521 = vunpack.c.l.b16 %v4499
    %v4522 = vunpack.c.l.b16 %v4500
    %v4523 = vpack.c.b16 %v4513, %v4512
    %v4524 = vpack.c.b16 %v4515, %v4514
    %v4525 = vpack.c.b16 %v4517, %v4516
    %v4526 = vpack.c.b16 %v4519, %v4518
    %v4527 = vpack.c.b16 %v4521, %v4520
    %v4528 = vpack.c.b16 %v4522, %v4522
    %4534 = vrot.lane.b32.xlu0 %v4394, 44
    %v4535 = vpop.permute.xlu0 %4534
    %v4538 = vsel %vm3249, %v4489, 0
    %vm4540 = vcmask 1041408
    %v4542 = vsel %vm4540, %v4528, 0
    %4544 = vmatprep.subr.bf16.mxu0 0
    %4545 = vmatpush1.bf16.msra.mxu0 0
    %4546 = vmatprep.subr.bf16.mxu0 0
    %4547 = vmatpush1.bf16.msra.mxu0 0
    %4548 = vmatprep.subr.bf16.mxu0 0
    %4549 = vmatpush1.bf16.msra.mxu0 %v4542
    %4550 = vmatprep.subr.bf16.mxu0 0
    %4551 = vmatpush1.bf16.msra.mxu0 %v4527
    %4552 = vmatprep.subr.bf16.mxu0 0
    %4553 = vmatpush1.bf16.msra.mxu0 %v4526
    %4554 = vmatprep.subr.bf16.mxu0 0
    %4555 = vmatpush1.bf16.msra.mxu0 %v4525
    %4556 = vmatprep.subr.bf16.mxu0 0
    %4557 = vmatpush1.bf16.msra.mxu0 %v4524
    %4558 = vmatprep.subr.bf16.mxu0 0
    %4559 = vmatpush1.bf16.msra.mxu0 %v4523
    %4560 = vmatprep.subr.bf16.mxu0 0
    %4561 = vmatpush2.bf16.msra.mxu0 0
    %4562 = vmatprep.subr.bf16.mxu0 0
    %4563 = vmatpush2.bf16.msra.mxu0 0
    %4564 = vmatprep.subr.bf16.mxu0 0
    %4565 = vmatpush2.bf16.msra.mxu0 0
    %4566 = vmatprep.subr.bf16.mxu0 0
    %4567 = vmatpush2.bf16.msra.mxu0 0
    %4568 = vmatprep.subr.bf16.mxu0 0
    %4569 = vmatpush2.bf16.msra.mxu0 0
    %4570 = vmatprep.subr.bf16.mxu0 0
    %4571 = vmatpush2.bf16.msra.mxu0 0
    %4572 = vmatprep.subr.bf16.mxu0 0
    %4573 = vmatpush2.bf16.msra.mxu0 0
    %4574 = vmatprep.subr.bf16.mxu0 0
    %4575 = vmatpush2.bf16.msra.mxu0 0
    %4576 = vmatprep.mubr.bf16.mxu0 0
    %4577 = vmatmul.mubr.bf16.gmra.mxu0 %v4538
    %v4578 = vpop.f32.mrf.mxu0
    %v4579 = vadd.f32 %v4535, %v4578
    %v4580 = vpop.f32.mrf.mxu0
    %v4581 = vpop.f32.mrf.mxu0
    %v4582 = vpop.f32.mrf.mxu0
    %4583 = vdwg.mxu0
    %vm4584 = vcmask 74752
    %4585 = vst.msk [vmem:[#allocation5] sm:$0x3] %vm4584, %v4579
    // Predicated region
    $region38: #{forward.1} parent=1 // pred_check
      _
    $region39: #{forward.1} parent=1 // pred_check_branch
      %4587 = sbr.rel (0) target = $region41
    $region40: #{forward.1} parent=1 // pred_region
      %s4589 = ssub.s32 32, 32
      %4590 = vsyncadd [#allocation6], %s4589
      %s4592 = sshll.u32 [#allocation5], 4
      %s4593 = int_to_ptr.vmem [resolvable:$true] %s4592
      %4595 = dma.vmem_to_hbm [thread:$0]  %s4593, 32, %s9, [#allocation6]
    $region41: #{forward.1} parent=1 // pred_fallthru
      _
    // Predicated region
    $region42: #{forward.1} parent=1 // pred_check
      _
    $region43: #{forward.1} parent=1 // pred_check_branch
      %4597 = sbr.rel (0) target = $region45
    $region44: #{forward.1} parent=1 // pred_region
      %4598 = dma.done [#allocation6], 32
    $region45: #{forward.1} parent=1 // pred_fallthru
      _
    %4599 = vsyncpa [#allocation6], 1

</llo_original>
